<compile_context>
chip_gen: v5e
topology: v5e:2x2
jax: 0.10.0
libtpu: 0.0.40
codegen_flags: <defaults>
</compile_context>

<pallas_src>
import functools
import math

import jax
import jax.numpy as jnp
from jax.experimental import pallas as pl
from jax.experimental.pallas import tpu as pltpu

EPS = 1e-5                       # nn.LayerNorm default
COMPUTE_DTYPE = jnp.bfloat16     # MXU-native datapath; statistics stay f32
MAX_COL_TILE = 1024              # above this, linear() tiles the N axis


def _vmem_limit_bytes():
    # ~75% of physical VMEM: ~96 MiB on v5e/v6e (128 MiB phys), ~48 MiB on v7x (64 MiB).
    try:
        cap = pltpu.get_tpu_info().vmem_capacity_bytes
        return min(int(cap) * 3 // 4, 100 * 1024 * 1024)
    except Exception:
        return 48 * 1024 * 1024


VMEM_LIMIT = _vmem_limit_bytes()
MAX_ROW_TILE = 1024 if VMEM_LIMIT > 64 * 1024 * 1024 else 512


def _cparams(dim_sem):
    return pltpu.CompilerParams(dimension_semantics=dim_sem,
                                vmem_limit_bytes=VMEM_LIMIT)


def _row_tile(m):
    if m > MAX_ROW_TILE:
        return MAX_ROW_TILE
    # keep >=2 row blocks when possible so both v7x TensorCores get work
    if m >= 16 and m % 16 == 0:
        return m // 2
    return m


def _col_tile(n):
    return n if n <= MAX_COL_TILE else 512


# ----------------- row/column-tiled dense: y = x @ W + b (opt. ReLU) --------
def _linear_kernel(relu, x_ref, w_ref, b_ref, o_ref):
    y = jnp.dot(x_ref[...], w_ref[...], preferred_element_type=jnp.float32)
    y = y + b_ref[...].astype(jnp.float32)
    if relu:
        y = jnp.maximum(y, 0.0)
    o_ref[...] = y.astype(o_ref.dtype)


def linear(x2d, w, b, relu=False):
    """x2d: [M, K] @ w: [K, N] + b: [1, N] -> [M, N]."""
    M, K = x2d.shape
    N = w.shape[1]
    tm, tn = _row_tile(M), _col_tile(N)
    # TODO(synk): add a K grid axis + f32 accumulator scratch for very large K.
    return pl.pallas_call(
        functools.partial(_linear_kernel, relu),
        out_shape=jax.ShapeDtypeStruct((M, N), x2d.dtype),
        grid=(pl.cdiv(M, tm), pl.cdiv(N, tn)),
        in_specs=[pl.BlockSpec((tm, K), lambda i, j: (i, 0)),
                  pl.BlockSpec((K, tn), lambda i, j: (0, j)),
                  pl.BlockSpec((1, tn), lambda i, j: (0, j))],
        out_specs=pl.BlockSpec((tm, tn), lambda i, j: (i, j)),
        compiler_params=_cparams(("parallel", "parallel")),
    )(x2d, w, b)


# --------- fused dense + residual add + LayerNorm (row-tiled, full N) -------
def _linear_add_ln_kernel(x_ref, w_ref, b_ref, r_ref, g_ref, bt_ref, o_ref):
    y = jnp.dot(x_ref[...], w_ref[...], preferred_element_type=jnp.float32)
    y = y + b_ref[...].astype(jnp.float32) + r_ref[...].astype(jnp.float32)
    mu = jnp.mean(y, axis=-1, keepdims=True)
    var = jnp.mean((y - mu) ** 2, axis=-1, keepdims=True)
    o_ref[...] = ((y - mu) * jax.lax.rsqrt(var + EPS)
                  * g_ref[...].astype(jnp.float32)
                  + bt_ref[...].astype(jnp.float32)).astype(o_ref.dtype)


def linear_add_layernorm(x2d, w, b, resid2d, gamma, beta):
    """LayerNorm(resid + (x @ w + b)); the d_model-wide output stays resident."""
    M, K = x2d.shape
    N = w.shape[1]
    tm = _row_tile(M)
    return pl.pallas_call(
        _linear_add_ln_kernel,
        out_shape=jax.ShapeDtypeStruct((M, N), x2d.dtype),
        grid=(pl.cdiv(M, tm),),
        in_specs=[pl.BlockSpec((tm, K), lambda i: (i, 0)),
                  pl.BlockSpec((K, N), lambda i: (0, 0)),
                  pl.BlockSpec((1, N), lambda i: (0, 0)),
                  pl.BlockSpec((tm, N), lambda i: (i, 0)),
                  pl.BlockSpec((1, N), lambda i: (0, 0)),
                  pl.BlockSpec((1, N), lambda i: (0, 0))],
        out_specs=pl.BlockSpec((tm, N), lambda i: (i, 0)),
        compiler_params=_cparams(("parallel",)),
    )(x2d, w, b, resid2d, gamma, beta)


# ------------------ flash attention over the fused QKV slab -----------------
def _flash_kernel(scale, hpb, dh, tk, s_real, s_pad,
                  q_ref, k_ref, v_ref, o_ref, m_sc, l_sc, acc_sc):
    ki = pl.program_id(3)

    @pl.when(ki == 0)
    def _():
        m_sc[...] = jnp.full_like(m_sc, -jnp.inf)
        l_sc[...] = jnp.zeros_like(l_sc)
        acc_sc[...] = jnp.zeros_like(acc_sc)

    kv_bias = None
    if s_pad != s_real:  # static guard: mask padded KV columns
        kv_idx = ki * tk + jax.lax.broadcasted_iota(jnp.int32, (1, tk), 1)
        kv_bias = jnp.where(kv_idx < s_real, 0.0, -1e30).astype(jnp.float32)

    qb = q_ref[0]  # [tq, hpb*dh]
    kb = k_ref[0]  # [tk, hpb*dh]
    vb = v_ref[0]  # [tk, hpb*dh]
    for h in range(hpb):
        lo, hi = h * dh, (h + 1) * dh
        # contract over dh on both sides (no explicit K transpose)
        s = jax.lax.dot_general(qb[:, lo:hi], kb[:, lo:hi],
                                (((1,), (1,)), ((), ())),
                                preferred_element_type=jnp.float32) * scale
        if kv_bias is not None:
            s = s + kv_bias
        m_prev = m_sc[h]
        m_new = jnp.maximum(m_prev, jnp.max(s, axis=-1, keepdims=True))
        alpha = jnp.exp(m_prev - m_new)
        p = jnp.exp(s - m_new)
        l_sc[h] = alpha * l_sc[h] + jnp.sum(p, axis=-1, keepdims=True)
        acc_sc[h] = alpha * acc_sc[h] + jnp.dot(
            p.astype(vb.dtype), vb[:, lo:hi], preferred_element_type=jnp.float32)
        m_sc[h] = m_new

    @pl.when(ki == pl.num_programs(3) - 1)
    def _():
        # exact division (not approx reciprocal) for parity with torch softmax
        out = jnp.concatenate([acc_sc[h] / l_sc[h] for h in range(hpb)], axis=-1)
        o_ref[0] = out.astype(o_ref.dtype)


def attention(qkv, nhead, s_real):
    """Self-attention reading the fused QKV slab.

    qkv: [B, S_pad, 3*D] (columns ordered q|k|v, heads contiguous) -> [B, S_pad, D].
    """
    B, S, three_d = qkv.shape
    D = three_d // 3
    dh = D // nhead
    scale = 1.0 / math.sqrt(dh)
    tq = tk = S if S <= 128 else 128
    # TODO(synk): on v6e/v7x (256-deep MXU) tk=256 may help when dh<=64; check
    # the bundle dump for vreg spills before enabling it.

    if dh % 128 == 0:
        hpb = 1                                   # per-head block already lane-dense
    elif 128 % dh == 0 and nhead % (128 // dh) == 0:
        hpb = 128 // dh                           # pack heads into a 128-lane block
    else:
        hpb = 0                                   # fall back to head-folded layout

    kernel = functools.partial(_flash_kernel, scale, max(hpb, 1), dh, tk, s_real, S)
    scratch = [pltpu.VMEM((max(hpb, 1), tq, 1), jnp.float32),
               pltpu.VMEM((max(hpb, 1), tq, 1), jnp.float32),
               pltpu.VMEM((max(hpb, 1), tq, dh), jnp.float32)]
    dims = ("parallel", "parallel", "parallel", "arbitrary")

    if hpb:
        G = nhead // hpb
        hw = hpb * dh
        return pl.pallas_call(
            kernel,
            out_shape=jax.ShapeDtypeStruct((B, S, D), qkv.dtype),
            grid=(B, G, S // tq, S // tk),
            in_specs=[pl.BlockSpec((1, tq, hw), lambda b, g, qi, ki: (b, qi, g)),
                      pl.BlockSpec((1, tk, hw), lambda b, g, qi, ki: (b, ki, G + g)),
                      pl.BlockSpec((1, tk, hw), lambda b, g, qi, ki: (b, ki, 2 * G + g))],
            out_specs=pl.BlockSpec((1, tq, hw), lambda b, g, qi, ki: (b, qi, g)),
            scratch_shapes=scratch,
            compiler_params=_cparams(dims),
        )(qkv, qkv, qkv)

    # Fallback: fold heads into the batch axis when dh can't be packed to 128 lanes.
    qkv5 = qkv.reshape(B, S, 3, nhead, dh).transpose(2, 0, 3, 1, 4)
    q = qkv5[0].reshape(B * nhead, S, dh)
    k = qkv5[1].reshape(B * nhead, S, dh)
    v = qkv5[2].reshape(B * nhead, S, dh)
    out = pl.pallas_call(
        kernel,
        out_shape=jax.ShapeDtypeStruct((B * nhead, S, dh), qkv.dtype),
        grid=(B * nhead, 1, S // tq, S // tk),
        in_specs=[pl.BlockSpec((1, tq, dh), lambda b, g, qi, ki: (b, qi, 0)),
                  pl.BlockSpec((1, tk, dh), lambda b, g, qi, ki: (b, ki, 0)),
                  pl.BlockSpec((1, tk, dh), lambda b, g, qi, ki: (b, ki, 0))],
        out_specs=pl.BlockSpec((1, tq, dh), lambda b, g, qi, ki: (b, qi, 0)),
        scratch_shapes=scratch,
        compiler_params=_cparams(dims),
    )(q, k, v)
    return out.reshape(B, nhead, S, dh).transpose(0, 2, 1, 3).reshape(B, S, D)


# -------------- mean-pool (seq-tiled accumulator) + final projection --------
def _pool_proj_kernel(s_real, s_pad, ts, x_ref, w_ref, b_ref, o_ref, acc_sc):
    si = pl.program_id(1)

    @pl.when(si == 0)
    def _():
        acc_sc[...] = jnp.zeros_like(acc_sc)

    x = x_ref[...].astype(jnp.float32)                      # [tb, ts, D]
    if s_pad != s_real:  # static guard: drop padded rows from the mean
        pos = si * ts + jax.lax.broadcasted_iota(jnp.int32, (1, ts, 1), 1)
        x = jnp.where(pos < s_real, x, 0.0)
    acc_sc[...] += jnp.sum(x, axis=1)

    @pl.when(si == pl.num_programs(1) - 1)
    def _():
        pooled = (acc_sc[...] * (1.0 / s_real)).astype(w_ref.dtype)
        o_ref[...] = (jnp.dot(pooled, w_ref[...],
                              preferred_element_type=jnp.float32)
                      + b_ref[...].astype(jnp.float32)).astype(o_ref.dtype)


def pool_and_project(x, w, b, s_real):
    """mean over valid seq positions, then project: [B, S_pad, D] -> [B, N] (f32)."""
    B, S_pad, D = x.shape
    N = w.shape[1]
    tb = B if B <= 8 else 8
    ts = S_pad if S_pad <= 128 else 128
    # TODO(synk): could be fused into the last layer's fused-LN epilogue to save
    # one [B, S, D] HBM round trip.
    return pl.pallas_call(
        functools.partial(_pool_proj_kernel, s_real, S_pad, ts),
        out_shape=jax.ShapeDtypeStruct((B, N), jnp.float32),
        grid=(pl.cdiv(B, tb), pl.cdiv(S_pad, ts)),
        in_specs=[pl.BlockSpec((tb, ts, D), lambda i, s: (i, s, 0)),
                  pl.BlockSpec((D, N), lambda i, s: (0, 0)),
                  pl.BlockSpec((1, N), lambda i, s: (0, 0))],
        out_specs=pl.BlockSpec((tb, N), lambda i, s: (i, 0)),
        scratch_shapes=[pltpu.VMEM((tb, D), jnp.float32)],
        compiler_params=_cparams(("parallel", "arbitrary")),
    )(x, w, b)


# ------------------------ transformer encoder layer -------------------------
def encoder_layer(x2d, B, s_pad, s_real, nhead, p):
    """x2d: [B*S_pad, D] -> [B*S_pad, D]; post-norm nn.TransformerEncoderLayer."""
    M, D = x2d.shape
    qkv = linear(x2d, p['w_in'], p['b_in'])                       # [M, 3D]
    ctx = attention(qkv.reshape(B, s_pad, 3 * D), nhead, s_real)  # [B, S_pad, D]
    y = linear_add_layernorm(ctx.reshape(M, D), p['w_out'], p['b_out'],
                             x2d, p['ln1_g'], p['ln1_b'])         # attn-out + LN1
    h1 = linear(y, p['w_ff1'], p['b_ff1'], relu=True)             # FFN up + ReLU
    return linear_add_layernorm(h1, p['w_ff2'], p['b_ff2'],
                                y, p['ln2_g'], p['ln2_b'])        # FFN down + LN2


# ------------------------------ parameter init ------------------------------
def init_params(key, input_dim, d_model, nhead, num_layers, ff_dim):
    def dense(k, fan_in, fan_out):
        w = (0.02 * jax.random.normal(k, (fan_in, fan_out), jnp.float32))
        return w.astype(COMPUTE_DTYPE), jnp.zeros((1, fan_out), COMPUTE_DTYPE)

    keys = jax.random.split(key, 2 + 4 * num_layers)
    p = {}
    p['in_w'], p['in_b'] = dense(keys[0], input_dim, d_model)
    p['final_w'], p['final_b'] = dense(keys[1], d_model, d_model)
    layers = []
    for l in range(num_layers):
        k0, k1, k2, k3 = keys[2 + 4 * l: 2 + 4 * (l + 1)]
        w_in, b_in = dense(k0, d_model, 3 * d_model)
        w_out, b_out = dense(k1, d_model, d_model)
        w_ff1, b_ff1 = dense(k2, d_model, ff_dim)
        w_ff2, b_ff2 = dense(k3, ff_dim, d_model)
        layers.append(dict(
            w_in=w_in, b_in=b_in, w_out=w_out, b_out=b_out,
            w_ff1=w_ff1, b_ff1=b_ff1, w_ff2=w_ff2, b_ff2=b_ff2,
            ln1_g=jnp.ones((1, d_model), COMPUTE_DTYPE),
            ln1_b=jnp.zeros((1, d_model), COMPUTE_DTYPE),
            ln2_g=jnp.ones((1, d_model), COMPUTE_DTYPE),
            ln2_b=jnp.zeros((1, d_model), COMPUTE_DTYPE),
        ))
    p['layers'] = layers
    return p


# --------------------------------- forward ---------------------------------
def transformer_embedder(x, params, nhead):
    """x: [B, S, input_dim] -> [B, d_model] (f32)."""
    B, S, _ = x.shape
    d_model = params['in_w'].shape[1]
    s_pad = S if S <= 128 else 128 * pl.cdiv(S, 128)
    if s_pad != S:
        x = jnp.pad(x, ((0, 0), (0, s_pad - S), (0, 0)))
    h = linear(x.astype(COMPUTE_DTYPE).reshape(B * s_pad, -1),
               params['in_w'], params['in_b'])
    for lp in params['layers']:
        h = encoder_layer(h, B, s_pad, S, nhead, lp)
    return pool_and_project(h.reshape(B, s_pad, d_model),
                            params['final_w'], params['final_b'], S)


if __name__ == "__main__":
    embed = jax.jit(transformer_embedder, static_argnums=2)
    key = jax.random.PRNGKey(0)

    # Config 1: lane-dense column-blocked attention path (4 heads of 32 pack to 128).
    B, S = 2, 8
    input_dim, d_model, nhead, num_layers, ff_dim = 4, 128, 4, 2, 256
    kx, kp, krest = jax.random.split(key, 3)
    x = jax.random.normal(kx, (B, S, input_dim), jnp.float32)
    params = init_params(kp, input_dim, d_model, nhead, num_layers, ff_dim)
    out = embed(x, params, nhead)
    jax.block_until_ready(out)
    assert out.shape == (B, d_model), out.shape

    # Config 2: tiny head_dim (8) exercises the head-folded fallback path.
    d_model2, ff_dim2 = 32, 64
    kx2, kp2 = jax.random.split(krest)
    x2 = jax.random.normal(kx2, (B, S, input_dim), jnp.float32)
    params2 = init_params(kp2, input_dim, d_model2, nhead, num_layers, ff_dim2)
    out2 = embed(x2, params2, nhead)
    jax.block_until_ready(out2)
    assert out2.shape == (B, d_model2), out2.shape

    print("KERNEL_OK")
</pallas_src>

<mosaic_0001>
module attributes {stable_mosaic.version = 11 : i64} {
  func.func @_linear_kernel(%arg0: i32, %arg1: i32, %arg2: memref<8x128xbf16, #tpu.memory_space<vmem>>, %arg3: memref<128x384xbf16, #tpu.memory_space<vmem>>, %arg4: memref<1x384xbf16, #tpu.memory_space<vmem>>, %arg5: memref<8x384xbf16, #tpu.memory_space<vmem>>) attributes {dimension_semantics = [#tpu.dimension_semantics<parallel>, #tpu.dimension_semantics<parallel>], iteration_bounds = array<i64: 2, 1>, scalar_prefetch = 0 : i64, scratch_operands = 0 : i64, tpu.core_type = #tpu.core_type<tc>, window_params = [{transform_indices = @transform_0, window_bounds = array<i64: 8, 128>}, {transform_indices = @transform_1, window_bounds = array<i64: 128, 384>}, {transform_indices = @transform_2, window_bounds = array<i64: 1, 384>}, {transform_indices = @transform_3, window_bounds = array<i64: 8, 384>}]} {
    %c0 = arith.constant 0 : index
    %c0_0 = arith.constant 0 : index
    %0 = vector.load %arg2[%c0, %c0_0] : memref<8x128xbf16, #tpu.memory_space<vmem>>, vector<8x128xbf16>
    %c0_1 = arith.constant 0 : index
    %c0_2 = arith.constant 0 : index
    %1 = vector.load %arg3[%c0_1, %c0_2] : memref<128x384xbf16, #tpu.memory_space<vmem>>, vector<128x384xbf16>
    %cst = arith.constant dense<0.000000e+00> : vector<8x384xf32>
    %2 = tpu.matmul %0, %1, %cst {dimension_numbers = #tpu.dot_dimension_numbers<[1], [0], [0], [1], [0, 0, 1, 1], [], []>} : vector<8x128xbf16>, vector<128x384xbf16>, vector<8x384xf32> -> vector<8x384xf32>
    %c0_3 = arith.constant 0 : index
    %c0_4 = arith.constant 0 : index
    %3 = vector.load %arg4[%c0_3, %c0_4] : memref<1x384xbf16, #tpu.memory_space<vmem>>, vector<1x384xbf16>
    %4 = arith.extf %3 : vector<1x384xbf16> to vector<1x384xf32>
    %5 = vector.broadcast %4 : vector<1x384xf32> to vector<8x384xf32>
    %6 = arith.addf %2, %5 : vector<8x384xf32>
    %7 = arith.truncf %6 : vector<8x384xf32> to vector<8x384xbf16>
    %c0_5 = arith.constant 0 : index
    %c0_6 = arith.constant 0 : index
    %8 = vector.load %arg5[%c0_5, %c0_6] : memref<8x384xbf16, #tpu.memory_space<vmem>>, vector<8x384xbf16>
    tpu.vector_store %arg5[%c0_5, %c0_6], %7 {strides = array<i32>} : memref<8x384xbf16, #tpu.memory_space<vmem>>, vector<8x384xbf16>,
    return
  }
  func.func @transform_0(%arg0: i32, %arg1: i32) -> (i32, i32) {
    %c0_i32 = arith.constant 0 : i32
    %c0_i32_0 = arith.constant 0 : i32
    return %arg0, %c0_i32 : i32, i32
  }
  func.func @transform_1(%arg0: i32, %arg1: i32) -> (i32, i32) {
    %c0_i32 = arith.constant 0 : i32
    %c0_i32_0 = arith.constant 0 : i32
    return %c0_i32, %arg1 : i32, i32
  }
  func.func @transform_2(%arg0: i32, %arg1: i32) -> (i32, i32) {
    %c0_i32 = arith.constant 0 : i32
    %c0_i32_0 = arith.constant 0 : i32
    return %c0_i32, %arg1 : i32, i32
  }
  func.func @transform_3(%arg0: i32, %arg1: i32) -> (i32, i32) {
    %c0_i32 = arith.constant 0 : i32
    return %arg0, %arg1 : i32, i32
  }
}

module attributes {stable_mosaic.version = 11 : i64} {
  func.func @_linear_kernel(%arg0: i32, %arg1: i32, %arg2: memref<8x4xbf16, #tpu.memory_space<vmem>>, %arg3: memref<4x128xbf16, #tpu.memory_space<vmem>>, %arg4: memref<1x128xbf16, #tpu.memory_space<vmem>>, %arg5: memref<8x128xbf16, #tpu.memory_space<vmem>>) attributes {dimension_semantics = [#tpu.dimension_semantics<parallel>, #tpu.dimension_semantics<parallel>], iteration_bounds = array<i64: 2, 1>, scalar_prefetch = 0 : i64, scratch_operands = 0 : i64, tpu.core_type = #tpu.core_type<tc>, window_params = [{transform_indices = @transform_0, window_bounds = array<i64: 8, 4>}, {transform_indices = @transform_1, window_bounds = array<i64: 4, 128>}, {transform_indices = @transform_2, window_bounds = array<i64: 1, 128>}, {transform_indices = @transform_3, window_bounds = array<i64: 8, 128>}]} {
    %c0 = arith.constant 0 : index
    %c0_0 = arith.constant 0 : index
    %0 = vector.load %arg2[%c0, %c0_0] : memref<8x4xbf16, #tpu.memory_space<vmem>>, vector<8x4xbf16>
    %c0_1 = arith.constant 0 : index
    %c0_2 = arith.constant 0 : index
    %1 = vector.load %arg3[%c0_1, %c0_2] : memref<4x128xbf16, #tpu.memory_space<vmem>>, vector<4x128xbf16>
    %cst = arith.constant dense<0.000000e+00> : vector<8x128xf32>
    %2 = tpu.matmul %0, %1, %cst {dimension_numbers = #tpu.dot_dimension_numbers<[1], [0], [0], [1], [0, 0, 1, 1], [], []>} : vector<8x4xbf16>, vector<4x128xbf16>, vector<8x128xf32> -> vector<8x128xf32>
    %c0_3 = arith.constant 0 : index
    %c0_4 = arith.constant 0 : index
    %3 = vector.load %arg4[%c0_3, %c0_4] : memref<1x128xbf16, #tpu.memory_space<vmem>>, vector<1x128xbf16>
    %4 = arith.extf %3 : vector<1x128xbf16> to vector<1x128xf32>
    %5 = vector.broadcast %4 : vector<1x128xf32> to vector<8x128xf32>
    %6 = arith.addf %2, %5 : vector<8x128xf32>
    %7 = arith.truncf %6 : vector<8x128xf32> to vector<8x128xbf16>
    %c0_5 = arith.constant 0 : index
    %c0_6 = arith.constant 0 : index
    %8 = vector.load %arg5[%c0_5, %c0_6] : memref<8x128xbf16, #tpu.memory_space<vmem>>, vector<8x128xbf16>
    tpu.vector_store %arg5[%c0_5, %c0_6], %7 {strides = array<i32>} : memref<8x128xbf16, #tpu.memory_space<vmem>>, vector<8x128xbf16>,
    return
  }
  func.func @transform_0(%arg0: i32, %arg1: i32) -> (i32, i32) {
    %c0_i32 = arith.constant 0 : i32
    %c0_i32_0 = arith.constant 0 : i32
    return %arg0, %c0_i32 : i32, i32
  }
  func.func @transform_1(%arg0: i32, %arg1: i32) -> (i32, i32) {
    %c0_i32 = arith.constant 0 : i32
    %c0_i32_0 = arith.constant 0 : i32
    return %c0_i32, %arg1 : i32, i32
  }
  func.func @transform_2(%arg0: i32, %arg1: i32) -> (i32, i32) {
    %c0_i32 = arith.constant 0 : i32
    %c0_i32_0 = arith.constant 0 : i32
    return %c0_i32, %arg1 : i32, i32
  }
  func.func @transform_3(%arg0: i32, %arg1: i32) -> (i32, i32) {
    %c0_i32 = arith.constant 0 : i32
    return %arg0, %arg1 : i32, i32
  }
}

module attributes {stable_mosaic.version = 11 : i64} {
  func.func @_linear_add_ln_kernel(%arg0: i32, %arg1: memref<8x128xbf16, #tpu.memory_space<vmem>>, %arg2: memref<128x128xbf16, #tpu.memory_space<vmem>>, %arg3: memref<1x128xbf16, #tpu.memory_space<vmem>>, %arg4: memref<8x128xbf16, #tpu.memory_space<vmem>>, %arg5: memref<1x128xbf16, #tpu.memory_space<vmem>>, %arg6: memref<1x128xbf16, #tpu.memory_space<vmem>>, %arg7: memref<8x128xbf16, #tpu.memory_space<vmem>>) attributes {dimension_semantics = [#tpu.dimension_semantics<parallel>], iteration_bounds = array<i64: 2>, scalar_prefetch = 0 : i64, scratch_operands = 0 : i64, tpu.core_type = #tpu.core_type<tc>, window_params = [{transform_indices = @transform_0, window_bounds = array<i64: 8, 128>}, {pipeline_mode = #tpu.pipeline_mode<synchronous>, transform_indices = @transform_1, window_bounds = array<i64: 128, 128>}, {pipeline_mode = #tpu.pipeline_mode<synchronous>, transform_indices = @transform_2, window_bounds = array<i64: 1, 128>}, {transform_indices = @transform_3, window_bounds = array<i64: 8, 128>}, {pipeline_mode = #tpu.pipeline_mode<synchronous>, transform_indices = @transform_4, window_bounds = array<i64: 1, 128>}, {pipeline_mode = #tpu.pipeline_mode<synchronous>, transform_indices = @transform_5, window_bounds = array<i64: 1, 128>}, {transform_indices = @transform_6, window_bounds = array<i64: 8, 128>}]} {
    %c0 = arith.constant 0 : index
    %c0_0 = arith.constant 0 : index
    %0 = vector.load %arg1[%c0, %c0_0] : memref<8x128xbf16, #tpu.memory_space<vmem>>, vector<8x128xbf16>
    %c0_1 = arith.constant 0 : index
    %c0_2 = arith.constant 0 : index
    %1 = vector.load %arg2[%c0_1, %c0_2] : memref<128x128xbf16, #tpu.memory_space<vmem>>, vector<128x128xbf16>
    %cst = arith.constant dense<0.000000e+00> : vector<8x128xf32>
    %2 = tpu.matmul %0, %1, %cst {dimension_numbers = #tpu.dot_dimension_numbers<[1], [0], [0], [1], [0, 0, 1, 1], [], []>} : vector<8x128xbf16>, vector<128x128xbf16>, vector<8x128xf32> -> vector<8x128xf32>
    %c0_3 = arith.constant 0 : index
    %c0_4 = arith.constant 0 : index
    %3 = vector.load %arg3[%c0_3, %c0_4] : memref<1x128xbf16, #tpu.memory_space<vmem>>, vector<1x128xbf16>
    %4 = arith.extf %3 : vector<1x128xbf16> to vector<1x128xf32>
    %5 = vector.broadcast %4 : vector<1x128xf32> to vector<8x128xf32>
    %6 = arith.addf %2, %5 : vector<8x128xf32>
    %c0_5 = arith.constant 0 : index
    %c0_6 = arith.constant 0 : index
    %7 = vector.load %arg4[%c0_5, %c0_6] : memref<8x128xbf16, #tpu.memory_space<vmem>>, vector<8x128xbf16>
    %8 = arith.extf %7 : vector<8x128xbf16> to vector<8x128xf32>
    %9 = arith.addf %6, %8 : vector<8x128xf32>
    %cst_7 = arith.constant dense<0.000000e+00> : vector<8xf32>
    %10 = vector.multi_reduction <add>, %9, %cst_7 [1] : vector<8x128xf32> to vector<8xf32>
    %11 = vector.shape_cast %10 : vector<8xf32> to vector<8x1xf32>
    %cst_8 = arith.constant 1.280000e+02 : f32
    %12 = vector.broadcast %cst_8 : f32 to vector<8x1xf32>
    %13 = arith.divf %11, %12 : vector<8x1xf32>
    %14 = vector.broadcast %13 : vector<8x1xf32> to vector<8x128xf32>
    %15 = arith.subf %9, %14 : vector<8x128xf32>
    %16 = arith.mulf %15, %15 : vector<8x128xf32>
    %cst_9 = arith.constant dense<0.000000e+00> : vector<8xf32>
    %17 = vector.multi_reduction <add>, %16, %cst_9 [1] : vector<8x128xf32> to vector<8xf32>
    %18 = vector.shape_cast %17 : vector<8xf32> to vector<8x1xf32>
    %cst_10 = arith.constant 1.280000e+02 : f32
    %19 = vector.broadcast %cst_10 : f32 to vector<8x1xf32>
    %20 = arith.divf %18, %19 : vector<8x1xf32>
    %21 = vector.broadcast %13 : vector<8x1xf32> to vector<8x128xf32>
    %22 = arith.subf %9, %21 : vector<8x128xf32>
    %cst_11 = arith.constant 9.99999974E-6 : f32
    %23 = vector.broadcast %cst_11 : f32 to vector<8x1xf32>
    %24 = arith.addf %20, %23 : vector<8x1xf32>
    %25 = math.rsqrt %24 : vector<8x1xf32>
    %26 = vector.broadcast %25 : vector<8x1xf32> to vector<8x128xf32>
    %27 = arith.mulf %22, %26 : vector<8x128xf32>
    %c0_12 = arith.constant 0 : index
    %c0_13 = arith.constant 0 : index
    %28 = vector.load %arg5[%c0_12, %c0_13] : memref<1x128xbf16, #tpu.memory_space<vmem>>, vector<1x128xbf16>
    %29 = arith.extf %28 : vector<1x128xbf16> to vector<1x128xf32>
    %30 = vector.broadcast %29 : vector<1x128xf32> to vector<8x128xf32>
    %31 = arith.mulf %27, %30 : vector<8x128xf32>
    %c0_14 = arith.constant 0 : index
    %c0_15 = arith.constant 0 : index
    %32 = vector.load %arg6[%c0_14, %c0_15] : memref<1x128xbf16, #tpu.memory_space<vmem>>, vector<1x128xbf16>
    %33 = arith.extf %32 : vector<1x128xbf16> to vector<1x128xf32>
    %34 = vector.broadcast %33 : vector<1x128xf32> to vector<8x128xf32>
    %35 = arith.addf %31, %34 : vector<8x128xf32>
    %36 = arith.truncf %35 : vector<8x128xf32> to vector<8x128xbf16>
    %c0_16 = arith.constant 0 : index
    %c0_17 = arith.constant 0 : index
    %37 = vector.load %arg7[%c0_16, %c0_17] : memref<8x128xbf16, #tpu.memory_space<vmem>>, vector<8x128xbf16>
    tpu.vector_store %arg7[%c0_16, %c0_17], %36 {strides = array<i32>} : memref<8x128xbf16, #tpu.memory_space<vmem>>, vector<8x128xbf16>,
    return
  }
  func.func @transform_0(%arg0: i32) -> (i32, i32) {
    %c0_i32 = arith.constant 0 : i32
    %c0_i32_0 = arith.constant 0 : i32
    return %arg0, %c0_i32 : i32, i32
  }
  func.func @transform_1(%arg0: i32) -> (i32, i32) {
    %c0_i32 = arith.constant 0 : i32
    %c0_i32_0 = arith.constant 0 : i32
    %c0_i32_1 = arith.constant 0 : i32
    return %c0_i32, %c0_i32_0 : i32, i32
  }
  func.func @transform_2(%arg0: i32) -> (i32, i32) {
    %c0_i32 = arith.constant 0 : i32
    %c0_i32_0 = arith.constant 0 : i32
    %c0_i32_1 = arith.constant 0 : i32
    return %c0_i32, %c0_i32_0 : i32, i32
  }
  func.func @transform_3(%arg0: i32) -> (i32, i32) {
    %c0_i32 = arith.constant 0 : i32
    %c0_i32_0 = arith.constant 0 : i32
    return %arg0, %c0_i32 : i32, i32
  }
  func.func @transform_4(%arg0: i32) -> (i32, i32) {
    %c0_i32 = arith.constant 0 : i32
    %c0_i32_0 = arith.constant 0 : i32
    %c0_i32_1 = arith.constant 0 : i32
    return %c0_i32, %c0_i32_0 : i32, i32
  }
  func.func @transform_5(%arg0: i32) -> (i32, i32) {
    %c0_i32 = arith.constant 0 : i32
    %c0_i32_0 = arith.constant 0 : i32
    %c0_i32_1 = arith.constant 0 : i32
    return %c0_i32, %c0_i32_0 : i32, i32
  }
  func.func @transform_6(%arg0: i32) -> (i32, i32) {
    %c0_i32 = arith.constant 0 : i32
    %c0_i32_0 = arith.constant 0 : i32
    return %arg0, %c0_i32 : i32, i32
  }
}

module attributes {stable_mosaic.version = 11 : i64} {
  func.func @_flash_kernel(%arg0: i32, %arg1: i32, %arg2: i32, %arg3: i32, %arg4: memref<1x8x128xbf16, #tpu.memory_space<vmem>>, %arg5: memref<1x8x128xbf16, #tpu.memory_space<vmem>>, %arg6: memref<1x8x128xbf16, #tpu.memory_space<vmem>>, %arg7: memref<1x8x128xbf16, #tpu.memory_space<vmem>>, %arg8: memref<4x8x1xf32, #tpu.memory_space<vmem>>, %arg9: memref<4x8x1xf32, #tpu.memory_space<vmem>>, %arg10: memref<4x8x32xf32, #tpu.memory_space<vmem>>) attributes {dimension_semantics = [#tpu.dimension_semantics<parallel>, #tpu.dimension_semantics<parallel>, #tpu.dimension_semantics<parallel>, #tpu.dimension_semantics<arbitrary>], iteration_bounds = array<i64: 2, 1, 1, 1>, scalar_prefetch = 0 : i64, scratch_operands = 3 : i64, tpu.core_type = #tpu.core_type<tc>, window_params = [{transform_indices = @transform_0, window_bounds = array<i64: 1, 8, 128>}, {transform_indices = @transform_1, window_bounds = array<i64: 1, 8, 128>}, {transform_indices = @transform_2, window_bounds = array<i64: 1, 8, 128>}, {transform_indices = @transform_3, window_bounds = array<i64: 1, 8, 128>}]} {
    %c0_i32 = arith.constant 0 : i32
    %0 = arith.cmpi eq, %arg3, %c0_i32 : i32
    %1 = arith.extui %0 : i1 to i32
    %c0_i32_0 = arith.constant 0 : i32
    %2 = arith.cmpi ne, %1, %c0_i32_0 : i32
    scf.if %2 {
      %cst_99 = arith.constant 0xFF800000 : f32
      %164 = vector.broadcast %cst_99 : f32 to vector<4x8x1xf32>
      %c0_100 = arith.constant 0 : index
      %c0_101 = arith.constant 0 : index
      %c0_102 = arith.constant 0 : index
      %165 = vector.load %arg8[%c0_100, %c0_101, %c0_102] : memref<4x8x1xf32, #tpu.memory_space<vmem>>, vector<4x8x1xf32>
      tpu.vector_store %arg8[%c0_100, %c0_101, %c0_102], %164 {strides = array<i32>} : memref<4x8x1xf32, #tpu.memory_space<vmem>>, vector<4x8x1xf32>,
      %cst_103 = arith.constant 0.000000e+00 : f32
      %166 = vector.broadcast %cst_103 : f32 to vector<4x8x1xf32>
      %c0_104 = arith.constant 0 : index
      %c0_105 = arith.constant 0 : index
      %c0_106 = arith.constant 0 : index
      %167 = vector.load %arg9[%c0_104, %c0_105, %c0_106] : memref<4x8x1xf32, #tpu.memory_space<vmem>>, vector<4x8x1xf32>
      tpu.vector_store %arg9[%c0_104, %c0_105, %c0_106], %166 {strides = array<i32>} : memref<4x8x1xf32, #tpu.memory_space<vmem>>, vector<4x8x1xf32>,
      %cst_107 = arith.constant 0.000000e+00 : f32
      %168 = vector.broadcast %cst_107 : f32 to vector<4x8x32xf32>
      %c0_108 = arith.constant 0 : index
      %c0_109 = arith.constant 0 : index
      %c0_110 = arith.constant 0 : index
      %169 = vector.load %arg10[%c0_108, %c0_109, %c0_110] : memref<4x8x32xf32, #tpu.memory_space<vmem>>, vector<4x8x32xf32>
      tpu.vector_store %arg10[%c0_108, %c0_109, %c0_110], %168 {strides = array<i32>} : memref<4x8x32xf32, #tpu.memory_space<vmem>>, vector<4x8x32xf32>,
    } else {
    }
    %c0 = arith.constant 0 : index
    %c0_1 = arith.constant 0 : index
    %c0_2 = arith.constant 0 : index
    %3 = vector.load %arg4[%c0, %c0_1, %c0_2] : memref<1x8x128xbf16, #tpu.memory_space<vmem>>, vector<1x8x128xbf16>
    %4 = vector.shape_cast %3 : vector<1x8x128xbf16> to vector<8x128xbf16>
    %c0_3 = arith.constant 0 : index
    %c0_4 = arith.constant 0 : index
    %c0_5 = arith.constant 0 : index
    %5 = vector.load %arg5[%c0_3, %c0_4, %c0_5] : memref<1x8x128xbf16, #tpu.memory_space<vmem>>, vector<1x8x128xbf16>
    %6 = vector.shape_cast %5 : vector<1x8x128xbf16> to vector<8x128xbf16>
    %c0_6 = arith.constant 0 : index
    %c0_7 = arith.constant 0 : index
    %c0_8 = arith.constant 0 : index
    %7 = vector.load %arg6[%c0_6, %c0_7, %c0_8] : memref<1x8x128xbf16, #tpu.memory_space<vmem>>, vector<1x8x128xbf16>
    %8 = vector.shape_cast %7 : vector<1x8x128xbf16> to vector<8x128xbf16>
    %9 = vector.extract_strided_slice %4 {offsets = [0, 0], sizes = [8, 32], strides = [1, 1]} : vector<8x128xbf16> to vector<8x32xbf16>
    %10 = vector.extract_strided_slice %6 {offsets = [0, 0], sizes = [8, 32], strides = [1, 1]} : vector<8x128xbf16> to vector<8x32xbf16>
    %cst = arith.constant dense<0.000000e+00> : vector<8x8xf32>
    %11 = tpu.matmul %9, %10, %cst {dimension_numbers = #tpu.dot_dimension_numbers<[1], [1], [0], [0], [0, 0, 1, 0], [], []>} : vector<8x32xbf16>, vector<8x32xbf16>, vector<8x8xf32> -> vector<8x8xf32>
    %cst_9 = arith.constant 0.176776692 : f32
    %12 = vector.broadcast %cst_9 : f32 to vector<8x8xf32>
    %13 = arith.mulf %11, %12 : vector<8x8xf32>
    %c0_10 = arith.constant 0 : index
    %c0_11 = arith.constant 0 : index
    %c0_12 = arith.constant 0 : index
    %14 = vector.load %arg8[%c0_10, %c0_11, %c0_12] : memref<4x8x1xf32, #tpu.memory_space<vmem>>, vector<1x8x1xf32>
    %15 = vector.shape_cast %14 : vector<1x8x1xf32> to vector<8x1xf32>
    %cst_13 = arith.constant dense<0xFF800000> : vector<8xf32>
    %16 = vector.multi_reduction <maximumf>, %13, %cst_13 [1] : vector<8x8xf32> to vector<8xf32>
    %17 = vector.shape_cast %16 : vector<8xf32> to vector<8x1xf32>
    %18 = arith.maximumf %15, %17 : vector<8x1xf32>
    %19 = arith.subf %15, %18 : vector<8x1xf32>
    %20 = math.exp %19 : vector<8x1xf32>
    %21 = vector.broadcast %18 : vector<8x1xf32> to vector<8x8xf32>
    %22 = arith.subf %13, %21 : vector<8x8xf32>
    %23 = math.exp %22 : vector<8x8xf32>
    %c0_14 = arith.constant 0 : index
    %c0_15 = arith.constant 0 : index
    %c0_16 = arith.constant 0 : index
    %24 = vector.load %arg9[%c0_14, %c0_15, %c0_16] : memref<4x8x1xf32, #tpu.memory_space<vmem>>, vector<1x8x1xf32>
    %25 = vector.shape_cast %24 : vector<1x8x1xf32> to vector<8x1xf32>
    %26 = arith.mulf %20, %25 : vector<8x1xf32>
    %cst_17 = arith.constant dense<0.000000e+00> : vector<8xf32>
    %27 = vector.multi_reduction <add>, %23, %cst_17 [1] : vector<8x8xf32> to vector<8xf32>
    %28 = vector.shape_cast %27 : vector<8xf32> to vector<8x1xf32>
    %29 = arith.addf %26, %28 : vector<8x1xf32>
    %c0_18 = arith.constant 0 : index
    %c0_19 = arith.constant 0 : index
    %c0_20 = arith.constant 0 : index
    %30 = vector.load %arg9[%c0_18, %c0_19, %c0_20] : memref<4x8x1xf32, #tpu.memory_space<vmem>>, vector<1x8x1xf32>
    %31 = vector.shape_cast %30 : vector<1x8x1xf32> to vector<8x1xf32>
    %32 = vector.shape_cast %29 : vector<8x1xf32> to vector<1x8x1xf32>
    tpu.vector_store %arg9[%c0_18, %c0_19, %c0_20], %32 {strides = array<i32>} : memref<4x8x1xf32, #tpu.memory_space<vmem>>, vector<1x8x1xf32>,
    %c0_21 = arith.constant 0 : index
    %c0_22 = arith.constant 0 : index
    %c0_23 = arith.constant 0 : index
    %33 = vector.load %arg10[%c0_21, %c0_22, %c0_23] : memref<4x8x32xf32, #tpu.memory_space<vmem>>, vector<1x8x32xf32>
    %34 = vector.shape_cast %33 : vector<1x8x32xf32> to vector<8x32xf32>
    %35 = vector.broadcast %20 : vector<8x1xf32> to vector<8x32xf32>
    %36 = arith.mulf %35, %34 : vector<8x32xf32>
    %37 = arith.truncf %23 : vector<8x8xf32> to vector<8x8xbf16>
    %38 = vector.extract_strided_slice %8 {offsets = [0, 0], sizes = [8, 32], strides = [1, 1]} : vector<8x128xbf16> to vector<8x32xbf16>
    %cst_24 = arith.constant dense<0.000000e+00> : vector<8x32xf32>
    %39 = tpu.matmul %37, %38, %cst_24 {dimension_numbers = #tpu.dot_dimension_numbers<[1], [0], [0], [1], [0, 0, 1, 1], [], []>} : vector<8x8xbf16>, vector<8x32xbf16>, vector<8x32xf32> -> vector<8x32xf32>
    %40 = arith.addf %36, %39 : vector<8x32xf32>
    %c0_25 = arith.constant 0 : index
    %c0_26 = arith.constant 0 : index
    %c0_27 = arith.constant 0 : index
    %41 = vector.load %arg10[%c0_25, %c0_26, %c0_27] : memref<4x8x32xf32, #tpu.memory_space<vmem>>, vector<1x8x32xf32>
    %42 = vector.shape_cast %41 : vector<1x8x32xf32> to vector<8x32xf32>
    %43 = vector.shape_cast %40 : vector<8x32xf32> to vector<1x8x32xf32>
    tpu.vector_store %arg10[%c0_25, %c0_26, %c0_27], %43 {strides = array<i32>} : memref<4x8x32xf32, #tpu.memory_space<vmem>>, vector<1x8x32xf32>,
    %c0_28 = arith.constant 0 : index
    %c0_29 = arith.constant 0 : index
    %c0_30 = arith.constant 0 : index
    %44 = vector.load %arg8[%c0_28, %c0_29, %c0_30] : memref<4x8x1xf32, #tpu.memory_space<vmem>>, vector<1x8x1xf32>
    %45 = vector.shape_cast %44 : vector<1x8x1xf32> to vector<8x1xf32>
    %46 = vector.shape_cast %18 : vector<8x1xf32> to vector<1x8x1xf32>
    tpu.vector_store %arg8[%c0_28, %c0_29, %c0_30], %46 {strides = array<i32>} : memref<4x8x1xf32, #tpu.memory_space<vmem>>, vector<1x8x1xf32>,
    %47 = vector.extract_strided_slice %4 {offsets = [0, 32], sizes = [8, 32], strides = [1, 1]} : vector<8x128xbf16> to vector<8x32xbf16>
    %48 = vector.extract_strided_slice %6 {offsets = [0, 32], sizes = [8, 32], strides = [1, 1]} : vector<8x128xbf16> to vector<8x32xbf16>
    %cst_31 = arith.constant dense<0.000000e+00> : vector<8x8xf32>
    %49 = tpu.matmul %47, %48, %cst_31 {dimension_numbers = #tpu.dot_dimension_numbers<[1], [1], [0], [0], [0, 0, 1, 0], [], []>} : vector<8x32xbf16>, vector<8x32xbf16>, vector<8x8xf32> -> vector<8x8xf32>
    %cst_32 = arith.constant 0.176776692 : f32
    %50 = vector.broadcast %cst_32 : f32 to vector<8x8xf32>
    %51 = arith.mulf %49, %50 : vector<8x8xf32>
    %c1 = arith.constant 1 : index
    %c0_33 = arith.constant 0 : index
    %c0_34 = arith.constant 0 : index
    %52 = vector.load %arg8[%c1, %c0_33, %c0_34] : memref<4x8x1xf32, #tpu.memory_space<vmem>>, vector<1x8x1xf32>
    %53 = vector.shape_cast %52 : vector<1x8x1xf32> to vector<8x1xf32>
    %cst_35 = arith.constant dense<0xFF800000> : vector<8xf32>
    %54 = vector.multi_reduction <maximumf>, %51, %cst_35 [1] : vector<8x8xf32> to vector<8xf32>
    %55 = vector.shape_cast %54 : vector<8xf32> to vector<8x1xf32>
    %56 = arith.maximumf %53, %55 : vector<8x1xf32>
    %57 = arith.subf %53, %56 : vector<8x1xf32>
    %58 = math.exp %57 : vector<8x1xf32>
    %59 = vector.broadcast %56 : vector<8x1xf32> to vector<8x8xf32>
    %60 = arith.subf %51, %59 : vector<8x8xf32>
    %61 = math.exp %60 : vector<8x8xf32>
    %c1_36 = arith.constant 1 : index
    %c0_37 = arith.constant 0 : index
    %c0_38 = arith.constant 0 : index
    %62 = vector.load %arg9[%c1_36, %c0_37, %c0_38] : memref<4x8x1xf32, #tpu.memory_space<vmem>>, vector<1x8x1xf32>
    %63 = vector.shape_cast %62 : vector<1x8x1xf32> to vector<8x1xf32>
    %64 = arith.mulf %58, %63 : vector<8x1xf32>
    %cst_39 = arith.constant dense<0.000000e+00> : vector<8xf32>
    %65 = vector.multi_reduction <add>, %61, %cst_39 [1] : vector<8x8xf32> to vector<8xf32>
    %66 = vector.shape_cast %65 : vector<8xf32> to vector<8x1xf32>
    %67 = arith.addf %64, %66 : vector<8x1xf32>
    %c1_40 = arith.constant 1 : index
    %c0_41 = arith.constant 0 : index
    %c0_42 = arith.constant 0 : index
    %68 = vector.load %arg9[%c1_40, %c0_41, %c0_42] : memref<4x8x1xf32, #tpu.memory_space<vmem>>, vector<1x8x1xf32>
    %69 = vector.shape_cast %68 : vector<1x8x1xf32> to vector<8x1xf32>
    %70 = vector.shape_cast %67 : vector<8x1xf32> to vector<1x8x1xf32>
    tpu.vector_store %arg9[%c1_40, %c0_41, %c0_42], %70 {strides = array<i32>} : memref<4x8x1xf32, #tpu.memory_space<vmem>>, vector<1x8x1xf32>,
    %c1_43 = arith.constant 1 : index
    %c0_44 = arith.constant 0 : index
    %c0_45 = arith.constant 0 : index
    %71 = vector.load %arg10[%c1_43, %c0_44, %c0_45] : memref<4x8x32xf32, #tpu.memory_space<vmem>>, vector<1x8x32xf32>
    %72 = vector.shape_cast %71 : vector<1x8x32xf32> to vector<8x32xf32>
    %73 = vector.broadcast %58 : vector<8x1xf32> to vector<8x32xf32>
    %74 = arith.mulf %73, %72 : vector<8x32xf32>
    %75 = arith.truncf %61 : vector<8x8xf32> to vector<8x8xbf16>
    %76 = vector.extract_strided_slice %8 {offsets = [0, 32], sizes = [8, 32], strides = [1, 1]} : vector<8x128xbf16> to vector<8x32xbf16>
    %cst_46 = arith.constant dense<0.000000e+00> : vector<8x32xf32>
    %77 = tpu.matmul %75, %76, %cst_46 {dimension_numbers = #tpu.dot_dimension_numbers<[1], [0], [0], [1], [0, 0, 1, 1], [], []>} : vector<8x8xbf16>, vector<8x32xbf16>, vector<8x32xf32> -> vector<8x32xf32>
    %78 = arith.addf %74, %77 : vector<8x32xf32>
    %c1_47 = arith.constant 1 : index
    %c0_48 = arith.constant 0 : index
    %c0_49 = arith.constant 0 : index
    %79 = vector.load %arg10[%c1_47, %c0_48, %c0_49] : memref<4x8x32xf32, #tpu.memory_space<vmem>>, vector<1x8x32xf32>
    %80 = vector.shape_cast %79 : vector<1x8x32xf32> to vector<8x32xf32>
    %81 = vector.shape_cast %78 : vector<8x32xf32> to vector<1x8x32xf32>
    tpu.vector_store %arg10[%c1_47, %c0_48, %c0_49], %81 {strides = array<i32>} : memref<4x8x32xf32, #tpu.memory_space<vmem>>, vector<1x8x32xf32>,
    %c1_50 = arith.constant 1 : index
    %c0_51 = arith.constant 0 : index
    %c0_52 = arith.constant 0 : index
    %82 = vector.load %arg8[%c1_50, %c0_51, %c0_52] : memref<4x8x1xf32, #tpu.memory_space<vmem>>, vector<1x8x1xf32>
    %83 = vector.shape_cast %82 : vector<1x8x1xf32> to vector<8x1xf32>
    %84 = vector.shape_cast %56 : vector<8x1xf32> to vector<1x8x1xf32>
    tpu.vector_store %arg8[%c1_50, %c0_51, %c0_52], %84 {strides = array<i32>} : memref<4x8x1xf32, #tpu.memory_space<vmem>>, vector<1x8x1xf32>,
    %85 = vector.extract_strided_slice %4 {offsets = [0, 64], sizes = [8, 32], strides = [1, 1]} : vector<8x128xbf16> to vector<8x32xbf16>
    %86 = vector.extract_strided_slice %6 {offsets = [0, 64], sizes = [8, 32], strides = [1, 1]} : vector<8x128xbf16> to vector<8x32xbf16>
    %cst_53 = arith.constant dense<0.000000e+00> : vector<8x8xf32>
    %87 = tpu.matmul %85, %86, %cst_53 {dimension_numbers = #tpu.dot_dimension_numbers<[1], [1], [0], [0], [0, 0, 1, 0], [], []>} : vector<8x32xbf16>, vector<8x32xbf16>, vector<8x8xf32> -> vector<8x8xf32>
    %cst_54 = arith.constant 0.176776692 : f32
    %88 = vector.broadcast %cst_54 : f32 to vector<8x8xf32>
    %89 = arith.mulf %87, %88 : vector<8x8xf32>
    %c2 = arith.constant 2 : index
    %c0_55 = arith.constant 0 : index
    %c0_56 = arith.constant 0 : index
    %90 = vector.load %arg8[%c2, %c0_55, %c0_56] : memref<4x8x1xf32, #tpu.memory_space<vmem>>, vector<1x8x1xf32>
    %91 = vector.shape_cast %90 : vector<1x8x1xf32> to vector<8x1xf32>
    %cst_57 = arith.constant dense<0xFF800000> : vector<8xf32>
    %92 = vector.multi_reduction <maximumf>, %89, %cst_57 [1] : vector<8x8xf32> to vector<8xf32>
    %93 = vector.shape_cast %92 : vector<8xf32> to vector<8x1xf32>
    %94 = arith.maximumf %91, %93 : vector<8x1xf32>
    %95 = arith.subf %91, %94 : vector<8x1xf32>
    %96 = math.exp %95 : vector<8x1xf32>
    %97 = vector.broadcast %94 : vector<8x1xf32> to vector<8x8xf32>
    %98 = arith.subf %89, %97 : vector<8x8xf32>
    %99 = math.exp %98 : vector<8x8xf32>
    %c2_58 = arith.constant 2 : index
    %c0_59 = arith.constant 0 : index
    %c0_60 = arith.constant 0 : index
    %100 = vector.load %arg9[%c2_58, %c0_59, %c0_60] : memref<4x8x1xf32, #tpu.memory_space<vmem>>, vector<1x8x1xf32>
    %101 = vector.shape_cast %100 : vector<1x8x1xf32> to vector<8x1xf32>
    %102 = arith.mulf %96, %101 : vector<8x1xf32>
    %cst_61 = arith.constant dense<0.000000e+00> : vector<8xf32>
    %103 = vector.multi_reduction <add>, %99, %cst_61 [1] : vector<8x8xf32> to vector<8xf32>
    %104 = vector.shape_cast %103 : vector<8xf32> to vector<8x1xf32>
    %105 = arith.addf %102, %104 : vector<8x1xf32>
    %c2_62 = arith.constant 2 : index
    %c0_63 = arith.constant 0 : index
    %c0_64 = arith.constant 0 : index
    %106 = vector.load %arg9[%c2_62, %c0_63, %c0_64] : memref<4x8x1xf32, #tpu.memory_space<vmem>>, vector<1x8x1xf32>
    %107 = vector.shape_cast %106 : vector<1x8x1xf32> to vector<8x1xf32>
    %108 = vector.shape_cast %105 : vector<8x1xf32> to vector<1x8x1xf32>
    tpu.vector_store %arg9[%c2_62, %c0_63, %c0_64], %108 {strides = array<i32>} : memref<4x8x1xf32, #tpu.memory_space<vmem>>, vector<1x8x1xf32>,
    %c2_65 = arith.constant 2 : index
    %c0_66 = arith.constant 0 : index
    %c0_67 = arith.constant 0 : index
    %109 = vector.load %arg10[%c2_65, %c0_66, %c0_67] : memref<4x8x32xf32, #tpu.memory_space<vmem>>, vector<1x8x32xf32>
    %110 = vector.shape_cast %109 : vector<1x8x32xf32> to vector<8x32xf32>
    %111 = vector.broadcast %96 : vector<8x1xf32> to vector<8x32xf32>
    %112 = arith.mulf %111, %110 : vector<8x32xf32>
    %113 = arith.truncf %99 : vector<8x8xf32> to vector<8x8xbf16>
    %114 = vector.extract_strided_slice %8 {offsets = [0, 64], sizes = [8, 32], strides = [1, 1]} : vector<8x128xbf16> to vector<8x32xbf16>
    %cst_68 = arith.constant dense<0.000000e+00> : vector<8x32xf32>
    %115 = tpu.matmul %113, %114, %cst_68 {dimension_numbers = #tpu.dot_dimension_numbers<[1], [0], [0], [1], [0, 0, 1, 1], [], []>} : vector<8x8xbf16>, vector<8x32xbf16>, vector<8x32xf32> -> vector<8x32xf32>
    %116 = arith.addf %112, %115 : vector<8x32xf32>
    %c2_69 = arith.constant 2 : index
    %c0_70 = arith.constant 0 : index
    %c0_71 = arith.constant 0 : index
    %117 = vector.load %arg10[%c2_69, %c0_70, %c0_71] : memref<4x8x32xf32, #tpu.memory_space<vmem>>, vector<1x8x32xf32>
    %118 = vector.shape_cast %117 : vector<1x8x32xf32> to vector<8x32xf32>
    %119 = vector.shape_cast %116 : vector<8x32xf32> to vector<1x8x32xf32>
    tpu.vector_store %arg10[%c2_69, %c0_70, %c0_71], %119 {strides = array<i32>} : memref<4x8x32xf32, #tpu.memory_space<vmem>>, vector<1x8x32xf32>,
    %c2_72 = arith.constant 2 : index
    %c0_73 = arith.constant 0 : index
    %c0_74 = arith.constant 0 : index
    %120 = vector.load %arg8[%c2_72, %c0_73, %c0_74] : memref<4x8x1xf32, #tpu.memory_space<vmem>>, vector<1x8x1xf32>
    %121 = vector.shape_cast %120 : vector<1x8x1xf32> to vector<8x1xf32>
    %122 = vector.shape_cast %94 : vector<8x1xf32> to vector<1x8x1xf32>
    tpu.vector_store %arg8[%c2_72, %c0_73, %c0_74], %122 {strides = array<i32>} : memref<4x8x1xf32, #tpu.memory_space<vmem>>, vector<1x8x1xf32>,
    %123 = vector.extract_strided_slice %4 {offsets = [0, 96], sizes = [8, 32], strides = [1, 1]} : vector<8x128xbf16> to vector<8x32xbf16>
    %124 = vector.extract_strided_slice %6 {offsets = [0, 96], sizes = [8, 32], strides = [1, 1]} : vector<8x128xbf16> to vector<8x32xbf16>
    %cst_75 = arith.constant dense<0.000000e+00> : vector<8x8xf32>
    %125 = tpu.matmul %123, %124, %cst_75 {dimension_numbers = #tpu.dot_dimension_numbers<[1], [1], [0], [0], [0, 0, 1, 0], [], []>} : vector<8x32xbf16>, vector<8x32xbf16>, vector<8x8xf32> -> vector<8x8xf32>
    %cst_76 = arith.constant 0.176776692 : f32
    %126 = vector.broadcast %cst_76 : f32 to vector<8x8xf32>
    %127 = arith.mulf %125, %126 : vector<8x8xf32>
    %c3 = arith.constant 3 : index
    %c0_77 = arith.constant 0 : index
    %c0_78 = arith.constant 0 : index
    %128 = vector.load %arg8[%c3, %c0_77, %c0_78] : memref<4x8x1xf32, #tpu.memory_space<vmem>>, vector<1x8x1xf32>
    %129 = vector.shape_cast %128 : vector<1x8x1xf32> to vector<8x1xf32>
    %cst_79 = arith.constant dense<0xFF800000> : vector<8xf32>
    %130 = vector.multi_reduction <maximumf>, %127, %cst_79 [1] : vector<8x8xf32> to vector<8xf32>
    %131 = vector.shape_cast %130 : vector<8xf32> to vector<8x1xf32>
    %132 = arith.maximumf %129, %131 : vector<8x1xf32>
    %133 = arith.subf %129, %132 : vector<8x1xf32>
    %134 = math.exp %133 : vector<8x1xf32>
    %135 = vector.broadcast %132 : vector<8x1xf32> to vector<8x8xf32>
    %136 = arith.subf %127, %135 : vector<8x8xf32>
    %137 = math.exp %136 : vector<8x8xf32>
    %c3_80 = arith.constant 3 : index
    %c0_81 = arith.constant 0 : index
    %c0_82 = arith.constant 0 : index
    %138 = vector.load %arg9[%c3_80, %c0_81, %c0_82] : memref<4x8x1xf32, #tpu.memory_space<vmem>>, vector<1x8x1xf32>
    %139 = vector.shape_cast %138 : vector<1x8x1xf32> to vector<8x1xf32>
    %140 = arith.mulf %134, %139 : vector<8x1xf32>
    %cst_83 = arith.constant dense<0.000000e+00> : vector<8xf32>
    %141 = vector.multi_reduction <add>, %137, %cst_83 [1] : vector<8x8xf32> to vector<8xf32>
    %142 = vector.shape_cast %141 : vector<8xf32> to vector<8x1xf32>
    %143 = arith.addf %140, %142 : vector<8x1xf32>
    %c3_84 = arith.constant 3 : index
    %c0_85 = arith.constant 0 : index
    %c0_86 = arith.constant 0 : index
    %144 = vector.load %arg9[%c3_84, %c0_85, %c0_86] : memref<4x8x1xf32, #tpu.memory_space<vmem>>, vector<1x8x1xf32>
    %145 = vector.shape_cast %144 : vector<1x8x1xf32> to vector<8x1xf32>
    %146 = vector.shape_cast %143 : vector<8x1xf32> to vector<1x8x1xf32>
    tpu.vector_store %arg9[%c3_84, %c0_85, %c0_86], %146 {strides = array<i32>} : memref<4x8x1xf32, #tpu.memory_space<vmem>>, vector<1x8x1xf32>,
    %c3_87 = arith.constant 3 : index
    %c0_88 = arith.constant 0 : index
    %c0_89 = arith.constant 0 : index
    %147 = vector.load %arg10[%c3_87, %c0_88, %c0_89] : memref<4x8x32xf32, #tpu.memory_space<vmem>>, vector<1x8x32xf32>
    %148 = vector.shape_cast %147 : vector<1x8x32xf32> to vector<8x32xf32>
    %149 = vector.broadcast %134 : vector<8x1xf32> to vector<8x32xf32>
    %150 = arith.mulf %149, %148 : vector<8x32xf32>
    %151 = arith.truncf %137 : vector<8x8xf32> to vector<8x8xbf16>
    %152 = vector.extract_strided_slice %8 {offsets = [0, 96], sizes = [8, 32], strides = [1, 1]} : vector<8x128xbf16> to vector<8x32xbf16>
    %cst_90 = arith.constant dense<0.000000e+00> : vector<8x32xf32>
    %153 = tpu.matmul %151, %152, %cst_90 {dimension_numbers = #tpu.dot_dimension_numbers<[1], [0], [0], [1], [0, 0, 1, 1], [], []>} : vector<8x8xbf16>, vector<8x32xbf16>, vector<8x32xf32> -> vector<8x32xf32>
    %154 = arith.addf %150, %153 : vector<8x32xf32>
    %c3_91 = arith.constant 3 : index
    %c0_92 = arith.constant 0 : index
    %c0_93 = arith.constant 0 : index
    %155 = vector.load %arg10[%c3_91, %c0_92, %c0_93] : memref<4x8x32xf32, #tpu.memory_space<vmem>>, vector<1x8x32xf32>
    %156 = vector.shape_cast %155 : vector<1x8x32xf32> to vector<8x32xf32>
    %157 = vector.shape_cast %154 : vector<8x32xf32> to vector<1x8x32xf32>
    tpu.vector_store %arg10[%c3_91, %c0_92, %c0_93], %157 {strides = array<i32>} : memref<4x8x32xf32, #tpu.memory_space<vmem>>, vector<1x8x32xf32>,
    %c3_94 = arith.constant 3 : index
    %c0_95 = arith.constant 0 : index
    %c0_96 = arith.constant 0 : index
    %158 = vector.load %arg8[%c3_94, %c0_95, %c0_96] : memref<4x8x1xf32, #tpu.memory_space<vmem>>, vector<1x8x1xf32>
    %159 = vector.shape_cast %158 : vector<1x8x1xf32> to vector<8x1xf32>
    %160 = vector.shape_cast %132 : vector<8x1xf32> to vector<1x8x1xf32>
    tpu.vector_store %arg8[%c3_94, %c0_95, %c0_96], %160 {strides = array<i32>} : memref<4x8x1xf32, #tpu.memory_space<vmem>>, vector<1x8x1xf32>,
    %c0_i32_97 = arith.constant 0 : i32
    %161 = arith.cmpi eq, %arg3, %c0_i32_97 : i32
    %162 = arith.extui %161 : i1 to i32
    %c0_i32_98 = arith.constant 0 : i32
    %163 = arith.cmpi ne, %162, %c0_i32_98 : i32
    scf.if %163 {
      %c0_99 = arith.constant 0 : index
      %c0_100 = arith.constant 0 : index
      %c0_101 = arith.constant 0 : index
      %164 = vector.load %arg10[%c0_99, %c0_100, %c0_101] : memref<4x8x32xf32, #tpu.memory_space<vmem>>, vector<1x8x32xf32>
      %165 = vector.shape_cast %164 : vector<1x8x32xf32> to vector<8x32xf32>
      %c0_102 = arith.constant 0 : index
      %c0_103 = arith.constant 0 : index
      %c0_104 = arith.constant 0 : index
      %166 = vector.load %arg9[%c0_102, %c0_103, %c0_104] : memref<4x8x1xf32, #tpu.memory_space<vmem>>, vector<1x8x1xf32>
      %167 = vector.shape_cast %166 : vector<1x8x1xf32> to vector<8x1xf32>
      %168 = vector.broadcast %167 : vector<8x1xf32> to vector<8x32xf32>
      %169 = arith.divf %165, %168 : vector<8x32xf32>
      %c1_105 = arith.constant 1 : index
      %c0_106 = arith.constant 0 : index
      %c0_107 = arith.constant 0 : index
      %170 = vector.load %arg10[%c1_105, %c0_106, %c0_107] : memref<4x8x32xf32, #tpu.memory_space<vmem>>, vector<1x8x32xf32>
      %171 = vector.shape_cast %170 : vector<1x8x32xf32> to vector<8x32xf32>
      %c1_108 = arith.constant 1 : index
      %c0_109 = arith.constant 0 : index
      %c0_110 = arith.constant 0 : index
      %172 = vector.load %arg9[%c1_108, %c0_109, %c0_110] : memref<4x8x1xf32, #tpu.memory_space<vmem>>, vector<1x8x1xf32>
      %173 = vector.shape_cast %172 : vector<1x8x1xf32> to vector<8x1xf32>
      %174 = vector.broadcast %173 : vector<8x1xf32> to vector<8x32xf32>
      %175 = arith.divf %171, %174 : vector<8x32xf32>
      %c2_111 = arith.constant 2 : index
      %c0_112 = arith.constant 0 : index
      %c0_113 = arith.constant 0 : index
      %176 = vector.load %arg10[%c2_111, %c0_112, %c0_113] : memref<4x8x32xf32, #tpu.memory_space<vmem>>, vector<1x8x32xf32>
      %177 = vector.shape_cast %176 : vector<1x8x32xf32> to vector<8x32xf32>
      %c2_114 = arith.constant 2 : index
      %c0_115 = arith.constant 0 : index
      %c0_116 = arith.constant 0 : index
      %178 = vector.load %arg9[%c2_114, %c0_115, %c0_116] : memref<4x8x1xf32, #tpu.memory_space<vmem>>, vector<1x8x1xf32>
      %179 = vector.shape_cast %178 : vector<1x8x1xf32> to vector<8x1xf32>
      %180 = vector.broadcast %179 : vector<8x1xf32> to vector<8x32xf32>
      %181 = arith.divf %177, %180 : vector<8x32xf32>
      %c3_117 = arith.constant 3 : index
      %c0_118 = arith.constant 0 : index
      %c0_119 = arith.constant 0 : index
      %182 = vector.load %arg10[%c3_117, %c0_118, %c0_119] : memref<4x8x32xf32, #tpu.memory_space<vmem>>, vector<1x8x32xf32>
      %183 = vector.shape_cast %182 : vector<1x8x32xf32> to vector<8x32xf32>
      %c3_120 = arith.constant 3 : index
      %c0_121 = arith.constant 0 : index
      %c0_122 = arith.constant 0 : index
      %184 = vector.load %arg9[%c3_120, %c0_121, %c0_122] : memref<4x8x1xf32, #tpu.memory_space<vmem>>, vector<1x8x1xf32>
      %185 = vector.shape_cast %184 : vector<1x8x1xf32> to vector<8x1xf32>
      %186 = vector.broadcast %185 : vector<8x1xf32> to vector<8x32xf32>
      %187 = arith.divf %183, %186 : vector<8x32xf32>
      %188 = tpu.concatenate %169, %175, %181, %187 in 1 : vector<8x32xf32>, vector<8x32xf32>, vector<8x32xf32>, vector<8x32xf32> -> vector<8x128xf32>
      %189 = arith.truncf %188 : vector<8x128xf32> to vector<8x128xbf16>
      %c0_123 = arith.constant 0 : index
      %c0_124 = arith.constant 0 : index
      %c0_125 = arith.constant 0 : index
      %190 = vector.load %arg7[%c0_123, %c0_124, %c0_125] : memref<1x8x128xbf16, #tpu.memory_space<vmem>>, vector<1x8x128xbf16>
      %191 = vector.shape_cast %190 : vector<1x8x128xbf16> to vector<8x128xbf16>
      %192 = vector.shape_cast %189 : vector<8x128xbf16> to vector<1x8x128xbf16>
      tpu.vector_store %arg7[%c0_123, %c0_124, %c0_125], %192 {strides = array<i32>} : memref<1x8x128xbf16, #tpu.memory_space<vmem>>, vector<1x8x128xbf16>,
    } else {
    }
    return
  }
  func.func @transform_0(%arg0: i32, %arg1: i32, %arg2: i32, %arg3: i32) -> (i32, i32, i32) {
    %c0_i32 = arith.constant 0 : i32
    return %arg0, %arg2, %arg1 : i32, i32, i32
  }
  func.func @transform_1(%arg0: i32, %arg1: i32, %arg2: i32, %arg3: i32) -> (i32, i32, i32) {
    %c1_i32 = arith.constant 1 : i32
    %0 = arith.addi %c1_i32, %arg1 : i32
    %c0_i32 = arith.constant 0 : i32
    return %arg0, %arg3, %0 : i32, i32, i32
  }
  func.func @transform_2(%arg0: i32, %arg1: i32, %arg2: i32, %arg3: i32) -> (i32, i32, i32) {
    %c2_i32 = arith.constant 2 : i32
    %0 = arith.addi %c2_i32, %arg1 : i32
    %c0_i32 = arith.constant 0 : i32
    return %arg0, %arg3, %0 : i32, i32, i32
  }
  func.func @transform_3(%arg0: i32, %arg1: i32, %arg2: i32, %arg3: i32) -> (i32, i32, i32) {
    %c0_i32 = arith.constant 0 : i32
    return %arg0, %arg2, %arg1 : i32, i32, i32
  }
}

module attributes {stable_mosaic.version = 11 : i64} {
  func.func @_linear_kernel(%arg0: i32, %arg1: i32, %arg2: memref<8x128xbf16, #tpu.memory_space<vmem>>, %arg3: memref<128x256xbf16, #tpu.memory_space<vmem>>, %arg4: memref<1x256xbf16, #tpu.memory_space<vmem>>, %arg5: memref<8x256xbf16, #tpu.memory_space<vmem>>) attributes {dimension_semantics = [#tpu.dimension_semantics<parallel>, #tpu.dimension_semantics<parallel>], iteration_bounds = array<i64: 2, 1>, scalar_prefetch = 0 : i64, scratch_operands = 0 : i64, tpu.core_type = #tpu.core_type<tc>, window_params = [{transform_indices = @transform_0, window_bounds = array<i64: 8, 128>}, {transform_indices = @transform_1, window_bounds = array<i64: 128, 256>}, {transform_indices = @transform_2, window_bounds = array<i64: 1, 256>}, {transform_indices = @transform_3, window_bounds = array<i64: 8, 256>}]} {
    %c0 = arith.constant 0 : index
    %c0_0 = arith.constant 0 : index
    %0 = vector.load %arg2[%c0, %c0_0] : memref<8x128xbf16, #tpu.memory_space<vmem>>, vector<8x128xbf16>
    %c0_1 = arith.constant 0 : index
    %c0_2 = arith.constant 0 : index
    %1 = vector.load %arg3[%c0_1, %c0_2] : memref<128x256xbf16, #tpu.memory_space<vmem>>, vector<128x256xbf16>
    %cst = arith.constant dense<0.000000e+00> : vector<8x256xf32>
    %2 = tpu.matmul %0, %1, %cst {dimension_numbers = #tpu.dot_dimension_numbers<[1], [0], [0], [1], [0, 0, 1, 1], [], []>} : vector<8x128xbf16>, vector<128x256xbf16>, vector<8x256xf32> -> vector<8x256xf32>
    %c0_3 = arith.constant 0 : index
    %c0_4 = arith.constant 0 : index
    %3 = vector.load %arg4[%c0_3, %c0_4] : memref<1x256xbf16, #tpu.memory_space<vmem>>, vector<1x256xbf16>
    %4 = arith.extf %3 : vector<1x256xbf16> to vector<1x256xf32>
    %5 = vector.broadcast %4 : vector<1x256xf32> to vector<8x256xf32>
    %6 = arith.addf %2, %5 : vector<8x256xf32>
    %cst_5 = arith.constant 0.000000e+00 : f32
    %7 = vector.broadcast %cst_5 : f32 to vector<8x256xf32>
    %8 = arith.maximumf %6, %7 : vector<8x256xf32>
    %9 = arith.truncf %8 : vector<8x256xf32> to vector<8x256xbf16>
    %c0_6 = arith.constant 0 : index
    %c0_7 = arith.constant 0 : index
    %10 = vector.load %arg5[%c0_6, %c0_7] : memref<8x256xbf16, #tpu.memory_space<vmem>>, vector<8x256xbf16>
    tpu.vector_store %arg5[%c0_6, %c0_7], %9 {strides = array<i32>} : memref<8x256xbf16, #tpu.memory_space<vmem>>, vector<8x256xbf16>,
    return
  }
  func.func @transform_0(%arg0: i32, %arg1: i32) -> (i32, i32) {
    %c0_i32 = arith.constant 0 : i32
    %c0_i32_0 = arith.constant 0 : i32
    return %arg0, %c0_i32 : i32, i32
  }
  func.func @transform_1(%arg0: i32, %arg1: i32) -> (i32, i32) {
    %c0_i32 = arith.constant 0 : i32
    %c0_i32_0 = arith.constant 0 : i32
    return %c0_i32, %arg1 : i32, i32
  }
  func.func @transform_2(%arg0: i32, %arg1: i32) -> (i32, i32) {
    %c0_i32 = arith.constant 0 : i32
    %c0_i32_0 = arith.constant 0 : i32
    return %c0_i32, %arg1 : i32, i32
  }
  func.func @transform_3(%arg0: i32, %arg1: i32) -> (i32, i32) {
    %c0_i32 = arith.constant 0 : i32
    return %arg0, %arg1 : i32, i32
  }
}

module attributes {stable_mosaic.version = 11 : i64} {
  func.func @_linear_add_ln_kernel(%arg0: i32, %arg1: memref<8x256xbf16, #tpu.memory_space<vmem>>, %arg2: memref<256x128xbf16, #tpu.memory_space<vmem>>, %arg3: memref<1x128xbf16, #tpu.memory_space<vmem>>, %arg4: memref<8x128xbf16, #tpu.memory_space<vmem>>, %arg5: memref<1x128xbf16, #tpu.memory_space<vmem>>, %arg6: memref<1x128xbf16, #tpu.memory_space<vmem>>, %arg7: memref<8x128xbf16, #tpu.memory_space<vmem>>) attributes {dimension_semantics = [#tpu.dimension_semantics<parallel>], iteration_bounds = array<i64: 2>, scalar_prefetch = 0 : i64, scratch_operands = 0 : i64, tpu.core_type = #tpu.core_type<tc>, window_params = [{transform_indices = @transform_0, window_bounds = array<i64: 8, 256>}, {pipeline_mode = #tpu.pipeline_mode<synchronous>, transform_indices = @transform_1, window_bounds = array<i64: 256, 128>}, {pipeline_mode = #tpu.pipeline_mode<synchronous>, transform_indices = @transform_2, window_bounds = array<i64: 1, 128>}, {transform_indices = @transform_3, window_bounds = array<i64: 8, 128>}, {pipeline_mode = #tpu.pipeline_mode<synchronous>, transform_indices = @transform_4, window_bounds = array<i64: 1, 128>}, {pipeline_mode = #tpu.pipeline_mode<synchronous>, transform_indices = @transform_5, window_bounds = array<i64: 1, 128>}, {transform_indices = @transform_6, window_bounds = array<i64: 8, 128>}]} {
    %c0 = arith.constant 0 : index
    %c0_0 = arith.constant 0 : index
    %0 = vector.load %arg1[%c0, %c0_0] : memref<8x256xbf16, #tpu.memory_space<vmem>>, vector<8x256xbf16>
    %c0_1 = arith.constant 0 : index
    %c0_2 = arith.constant 0 : index
    %1 = vector.load %arg2[%c0_1, %c0_2] : memref<256x128xbf16, #tpu.memory_space<vmem>>, vector<256x128xbf16>
    %cst = arith.constant dense<0.000000e+00> : vector<8x128xf32>
    %2 = tpu.matmul %0, %1, %cst {dimension_numbers = #tpu.dot_dimension_numbers<[1], [0], [0], [1], [0, 0, 1, 1], [], []>} : vector<8x256xbf16>, vector<256x128xbf16>, vector<8x128xf32> -> vector<8x128xf32>
    %c0_3 = arith.constant 0 : index
    %c0_4 = arith.constant 0 : index
    %3 = vector.load %arg3[%c0_3, %c0_4] : memref<1x128xbf16, #tpu.memory_space<vmem>>, vector<1x128xbf16>
    %4 = arith.extf %3 : vector<1x128xbf16> to vector<1x128xf32>
    %5 = vector.broadcast %4 : vector<1x128xf32> to vector<8x128xf32>
    %6 = arith.addf %2, %5 : vector<8x128xf32>
    %c0_5 = arith.constant 0 : index
    %c0_6 = arith.constant 0 : index
    %7 = vector.load %arg4[%c0_5, %c0_6] : memref<8x128xbf16, #tpu.memory_space<vmem>>, vector<8x128xbf16>
    %8 = arith.extf %7 : vector<8x128xbf16> to vector<8x128xf32>
    %9 = arith.addf %6, %8 : vector<8x128xf32>
    %cst_7 = arith.constant dense<0.000000e+00> : vector<8xf32>
    %10 = vector.multi_reduction <add>, %9, %cst_7 [1] : vector<8x128xf32> to vector<8xf32>
    %11 = vector.shape_cast %10 : vector<8xf32> to vector<8x1xf32>
    %cst_8 = arith.constant 1.280000e+02 : f32
    %12 = vector.broadcast %cst_8 : f32 to vector<8x1xf32>
    %13 = arith.divf %11, %12 : vector<8x1xf32>
    %14 = vector.broadcast %13 : vector<8x1xf32> to vector<8x128xf32>
    %15 = arith.subf %9, %14 : vector<8x128xf32>
    %16 = arith.mulf %15, %15 : vector<8x128xf32>
    %cst_9 = arith.constant dense<0.000000e+00> : vector<8xf32>
    %17 = vector.multi_reduction <add>, %16, %cst_9 [1] : vector<8x128xf32> to vector<8xf32>
    %18 = vector.shape_cast %17 : vector<8xf32> to vector<8x1xf32>
    %cst_10 = arith.constant 1.280000e+02 : f32
    %19 = vector.broadcast %cst_10 : f32 to vector<8x1xf32>
    %20 = arith.divf %18, %19 : vector<8x1xf32>
    %21 = vector.broadcast %13 : vector<8x1xf32> to vector<8x128xf32>
    %22 = arith.subf %9, %21 : vector<8x128xf32>
    %cst_11 = arith.constant 9.99999974E-6 : f32
    %23 = vector.broadcast %cst_11 : f32 to vector<8x1xf32>
    %24 = arith.addf %20, %23 : vector<8x1xf32>
    %25 = math.rsqrt %24 : vector<8x1xf32>
    %26 = vector.broadcast %25 : vector<8x1xf32> to vector<8x128xf32>
    %27 = arith.mulf %22, %26 : vector<8x128xf32>
    %c0_12 = arith.constant 0 : index
    %c0_13 = arith.constant 0 : index
    %28 = vector.load %arg5[%c0_12, %c0_13] : memref<1x128xbf16, #tpu.memory_space<vmem>>, vector<1x128xbf16>
    %29 = arith.extf %28 : vector<1x128xbf16> to vector<1x128xf32>
    %30 = vector.broadcast %29 : vector<1x128xf32> to vector<8x128xf32>
    %31 = arith.mulf %27, %30 : vector<8x128xf32>
    %c0_14 = arith.constant 0 : index
    %c0_15 = arith.constant 0 : index
    %32 = vector.load %arg6[%c0_14, %c0_15] : memref<1x128xbf16, #tpu.memory_space<vmem>>, vector<1x128xbf16>
    %33 = arith.extf %32 : vector<1x128xbf16> to vector<1x128xf32>
    %34 = vector.broadcast %33 : vector<1x128xf32> to vector<8x128xf32>
    %35 = arith.addf %31, %34 : vector<8x128xf32>
    %36 = arith.truncf %35 : vector<8x128xf32> to vector<8x128xbf16>
    %c0_16 = arith.constant 0 : index
    %c0_17 = arith.constant 0 : index
    %37 = vector.load %arg7[%c0_16, %c0_17] : memref<8x128xbf16, #tpu.memory_space<vmem>>, vector<8x128xbf16>
    tpu.vector_store %arg7[%c0_16, %c0_17], %36 {strides = array<i32>} : memref<8x128xbf16, #tpu.memory_space<vmem>>, vector<8x128xbf16>,
    return
  }
  func.func @transform_0(%arg0: i32) -> (i32, i32) {
    %c0_i32 = arith.constant 0 : i32
    %c0_i32_0 = arith.constant 0 : i32
    return %arg0, %c0_i32 : i32, i32
  }
  func.func @transform_1(%arg0: i32) -> (i32, i32) {
    %c0_i32 = arith.constant 0 : i32
    %c0_i32_0 = arith.constant 0 : i32
    %c0_i32_1 = arith.constant 0 : i32
    return %c0_i32, %c0_i32_0 : i32, i32
  }
  func.func @transform_2(%arg0: i32) -> (i32, i32) {
    %c0_i32 = arith.constant 0 : i32
    %c0_i32_0 = arith.constant 0 : i32
    %c0_i32_1 = arith.constant 0 : i32
    return %c0_i32, %c0_i32_0 : i32, i32
  }
  func.func @transform_3(%arg0: i32) -> (i32, i32) {
    %c0_i32 = arith.constant 0 : i32
    %c0_i32_0 = arith.constant 0 : i32
    return %arg0, %c0_i32 : i32, i32
  }
  func.func @transform_4(%arg0: i32) -> (i32, i32) {
    %c0_i32 = arith.constant 0 : i32
    %c0_i32_0 = arith.constant 0 : i32
    %c0_i32_1 = arith.constant 0 : i32
    return %c0_i32, %c0_i32_0 : i32, i32
  }
  func.func @transform_5(%arg0: i32) -> (i32, i32) {
    %c0_i32 = arith.constant 0 : i32
    %c0_i32_0 = arith.constant 0 : i32
    %c0_i32_1 = arith.constant 0 : i32
    return %c0_i32, %c0_i32_0 : i32, i32
  }
  func.func @transform_6(%arg0: i32) -> (i32, i32) {
    %c0_i32 = arith.constant 0 : i32
    %c0_i32_0 = arith.constant 0 : i32
    return %arg0, %c0_i32 : i32, i32
  }
}

module attributes {stable_mosaic.version = 11 : i64} {
  func.func @_pool_proj_kernel(%arg0: i32, %arg1: i32, %arg2: memref<2x8x128xbf16, #tpu.memory_space<vmem>>, %arg3: memref<128x128xbf16, #tpu.memory_space<vmem>>, %arg4: memref<1x128xbf16, #tpu.memory_space<vmem>>, %arg5: memref<2x128xf32, #tpu.memory_space<vmem>>, %arg6: memref<2x128xf32, #tpu.memory_space<vmem>>) attributes {dimension_semantics = [#tpu.dimension_semantics<parallel>, #tpu.dimension_semantics<arbitrary>], iteration_bounds = array<i64: 1, 1>, scalar_prefetch = 0 : i64, scratch_operands = 1 : i64, tpu.core_type = #tpu.core_type<tc>, window_params = [{transform_indices = @transform_0, window_bounds = array<i64: 2, 8, 128>}, {pipeline_mode = #tpu.pipeline_mode<synchronous>, transform_indices = @transform_1, window_bounds = array<i64: 128, 128>}, {pipeline_mode = #tpu.pipeline_mode<synchronous>, transform_indices = @transform_2, window_bounds = array<i64: 1, 128>}, {transform_indices = @transform_3, window_bounds = array<i64: 2, 128>}]} {
    %c0_i32 = arith.constant 0 : i32
    %0 = arith.cmpi eq, %arg1, %c0_i32 : i32
    %1 = arith.extui %0 : i1 to i32
    %c0_i32_0 = arith.constant 0 : i32
    %2 = arith.cmpi ne, %1, %c0_i32_0 : i32
    scf.if %2 {
      %cst_9 = arith.constant 0.000000e+00 : f32
      %12 = vector.broadcast %cst_9 : f32 to vector<2x128xf32>
      %c0_10 = arith.constant 0 : index
      %c0_11 = arith.constant 0 : index
      %13 = vector.load %arg6[%c0_10, %c0_11] : memref<2x128xf32, #tpu.memory_space<vmem>>, vector<2x128xf32>
      tpu.vector_store %arg6[%c0_10, %c0_11], %12 {strides = array<i32>} : memref<2x128xf32, #tpu.memory_space<vmem>>, vector<2x128xf32>,
    } else {
    }
    %c0 = arith.constant 0 : index
    %c0_1 = arith.constant 0 : index
    %c0_2 = arith.constant 0 : index
    %3 = vector.load %arg2[%c0, %c0_1, %c0_2] : memref<2x8x128xbf16, #tpu.memory_space<vmem>>, vector<2x8x128xbf16>
    %4 = arith.extf %3 : vector<2x8x128xbf16> to vector<2x8x128xf32>
    %c0_3 = arith.constant 0 : index
    %c0_4 = arith.constant 0 : index
    %5 = vector.load %arg6[%c0_3, %c0_4] : memref<2x128xf32, #tpu.memory_space<vmem>>, vector<2x128xf32>
    %cst = arith.constant dense<0.000000e+00> : vector<2x128xf32>
    %6 = vector.multi_reduction <add>, %4, %cst [1] : vector<2x8x128xf32> to vector<2x128xf32>
    %7 = arith.addf %5, %6 : vector<2x128xf32>
    %c0_5 = arith.constant 0 : index
    %c0_6 = arith.constant 0 : index
    %8 = vector.load %arg6[%c0_5, %c0_6] : memref<2x128xf32, #tpu.memory_space<vmem>>, vector<2x128xf32>
    tpu.vector_store %arg6[%c0_5, %c0_6], %7 {strides = array<i32>} : memref<2x128xf32, #tpu.memory_space<vmem>>, vector<2x128xf32>,
    %c0_i32_7 = arith.constant 0 : i32
    %9 = arith.cmpi eq, %arg1, %c0_i32_7 : i32
    %10 = arith.extui %9 : i1 to i32
    %c0_i32_8 = arith.constant 0 : i32
    %11 = arith.cmpi ne, %10, %c0_i32_8 : i32
    scf.if %11 {
      %c0_9 = arith.constant 0 : index
      %c0_10 = arith.constant 0 : index
      %12 = vector.load %arg6[%c0_9, %c0_10] : memref<2x128xf32, #tpu.memory_space<vmem>>, vector<2x128xf32>
      %cst_11 = arith.constant 1.250000e-01 : f32
      %13 = vector.broadcast %cst_11 : f32 to vector<2x128xf32>
      %14 = arith.mulf %12, %13 : vector<2x128xf32>
      %15 = arith.truncf %14 : vector<2x128xf32> to vector<2x128xbf16>
      %c0_12 = arith.constant 0 : index
      %c0_13 = arith.constant 0 : index
      %16 = vector.load %arg3[%c0_12, %c0_13] : memref<128x128xbf16, #tpu.memory_space<vmem>>, vector<128x128xbf16>
      %cst_14 = arith.constant dense<0.000000e+00> : vector<2x128xf32>
      %17 = tpu.matmul %15, %16, %cst_14 {dimension_numbers = #tpu.dot_dimension_numbers<[1], [0], [0], [1], [0, 0, 1, 1], [], []>} : vector<2x128xbf16>, vector<128x128xbf16>, vector<2x128xf32> -> vector<2x128xf32>
      %c0_15 = arith.constant 0 : index
      %c0_16 = arith.constant 0 : index
      %18 = vector.load %arg4[%c0_15, %c0_16] : memref<1x128xbf16, #tpu.memory_space<vmem>>, vector<1x128xbf16>
      %19 = arith.extf %18 : vector<1x128xbf16> to vector<1x128xf32>
      %20 = vector.broadcast %19 : vector<1x128xf32> to vector<2x128xf32>
      %21 = arith.addf %17, %20 : vector<2x128xf32>
      %c0_17 = arith.constant 0 : index
      %c0_18 = arith.constant 0 : index
      %22 = vector.load %arg5[%c0_17, %c0_18] : memref<2x128xf32, #tpu.memory_space<vmem>>, vector<2x128xf32>
      tpu.vector_store %arg5[%c0_17, %c0_18], %21 {strides = array<i32>} : memref<2x128xf32, #tpu.memory_space<vmem>>, vector<2x128xf32>,
    } else {
    }
    return
  }
  func.func @transform_0(%arg0: i32, %arg1: i32) -> (i32, i32, i32) {
    %c0_i32 = arith.constant 0 : i32
    %c0_i32_0 = arith.constant 0 : i32
    return %arg0, %arg1, %c0_i32 : i32, i32, i32
  }
  func.func @transform_1(%arg0: i32, %arg1: i32) -> (i32, i32) {
    %c0_i32 = arith.constant 0 : i32
    %c0_i32_0 = arith.constant 0 : i32
    %c0_i32_1 = arith.constant 0 : i32
    return %c0_i32, %c0_i32_0 : i32, i32
  }
  func.func @transform_2(%arg0: i32, %arg1: i32) -> (i32, i32) {
    %c0_i32 = arith.constant 0 : i32
    %c0_i32_0 = arith.constant 0 : i32
    %c0_i32_1 = arith.constant 0 : i32
    return %c0_i32, %c0_i32_0 : i32, i32
  }
  func.func @transform_3(%arg0: i32, %arg1: i32) -> (i32, i32) {
    %c0_i32 = arith.constant 0 : i32
    %c0_i32_0 = arith.constant 0 : i32
    return %arg0, %c0_i32 : i32, i32
  }
}

</mosaic_0001>

<llo_original>
// kernel: transformer_embedder.12
$region0: #{transformer_embedder.12}
  #allocation0 [shape = 'u32[]', space=smem, size = 0x4, offset = 0x4, fixed_abs, tag = 'smem constant byte address 0x4 - core index']
  #allocation1 [shape = 'u32[72,128]{1,0:T(1,128)}', space=vmem, size = 0x9000, scoped, tag = 'internal scratch']
  %s0 = inlined_call_operand.vmem [shape: bf16[16,4], index: 0, kind: input, shape index: {}]
  %s1 = inlined_call_operand.vmem [shape: bf16[4,128], index: 1, kind: input, shape index: {}]
  %s2 = inlined_call_operand.vmem [shape: bf16[1,128], index: 2, kind: input, shape index: {}]
  %s3 = inlined_call_operand.vmem [shape: bf16[16,128], index: 3, kind: output, shape index: {}]
  %s4 = sld [smem:[#allocation0]]
  $region45: #{transformer_embedder.12} parent=0
    _
  %s6 = ssub.s32 1, %s4
  %s7 = scalar_select 0, %s6, %s4
  loop: start=0, step=1, limit=4
  $region2: #{transformer_embedder.12} parent=0 // loop_pre_header
    _
  $region3: #{transformer_embedder.12} parent=0 // loop_header
    %s9 = sphi 0, %s13
    %p10 = scmp.ge.s32.totalorder %s9, 4
    %s16 = sphi 0, %s28
    %s17 = sphi 0, %s24
    %s18 = sphi 0, %s16
    %s19 = sphi 0, %s17
    %s20 = sphi 0, %s18
    %s21 = sphi 0, %s19
    %s31 = sphi 0, %s33
    %s34 = sphi 0, %s31
    %s35 = sphi 0, %s34
    %s51 = sphi 0, %s35
    %s57 = sphi 0, %s59
    %s60 = sphi 0, %s57
    %s61 = sphi 0, %s60
    %s77 = sphi 0, %s61
    %s83 = sphi 0, %s85
    %s86 = sphi 0, %s83
    %s87 = sphi 0, %s86
    %s103 = sphi 0, %s87
    %s111 = sphi 0, %s113
    %s114 = sphi 0, %s111
    %s115 = sphi 0, %s114
    %s131 = sphi 0, %s115
  $region4: #{transformer_embedder.12} parent=0 // loop_header_branch
    %12 = sbr.rel (%p10) target = $region8
  $region5: #{transformer_embedder.12} parent=0 // loop_body
    %s14 = ssub.s32 %s9, 1
    %s15 = ssub.s32 %s9, 2
    %s22 = sadd.s32 1, %s17
    %p23 = scmp.ge.s32.totalorder %s22, 1
    %s24 = scalar_select %p23, 0, %s22
    %s25 = sadd.s32 1, %s16
    %s26 = scalar_select %p23, %s25, %s16
    %p27 = scmp.ge.s32.totalorder %s26, 2
    %s28 = scalar_select %p27, 0, %s26
    %s29 = ssub.s32 %s16, %s28
    %p30 = scmp.eq.s32.totalorder %s29, 0
    %s32 = sadd.s32 %s31, 1
    %s33 = scalar_select %p30, %s31, %s32
    %p36 = pneg %p30
    %p37 = scmp.eq.s32.totalorder %s9, 1
    %p38 = por %p36, %p37
    %p39 = scmp.ne.s32.totalorder %s31, %s34
    %p40 = scmp.eq.s32.totalorder %s9, 0
    %p41 = por %p39, %p40
    %p42 = scmp.ne.s32.totalorder %s31, %s34
    %p43 = scmp.eq.s32.totalorder %s14, 1
    %p44 = por %p42, %p43
    %p45 = scmp.ne.s32.totalorder %s34, %s35
    %p46 = scmp.eq.s32.totalorder %s14, 0
    %p47 = por %p45, %p46
    %p48 = scmp.ne.s32.totalorder %s34, %s35
    %p49 = scmp.eq.s32.totalorder %s15, 1
    %p50 = por %p48, %p49
    %p52 = scmp.ne.s32.totalorder %s35, %s51
    %p53 = scmp.eq.s32.totalorder %s15, 0
    %p54 = por %p52, %p53
    %s55 = ssub.s32 %s17, %s24
    %p56 = scmp.eq.s32.totalorder %s55, 0
    %s58 = sadd.s32 %s57, 1
    %s59 = scalar_select %p56, %s57, %s58
    %p62 = pneg %p56
    %p63 = scmp.eq.s32.totalorder %s9, 1
    %p64 = por %p62, %p63
    %p65 = scmp.ne.s32.totalorder %s57, %s60
    %p66 = scmp.eq.s32.totalorder %s9, 0
    %p67 = por %p65, %p66
    %p68 = scmp.ne.s32.totalorder %s57, %s60
    %p69 = scmp.eq.s32.totalorder %s14, 1
    %p70 = por %p68, %p69
    %p71 = scmp.ne.s32.totalorder %s60, %s61
    %p72 = scmp.eq.s32.totalorder %s14, 0
    %p73 = por %p71, %p72
    %p74 = scmp.ne.s32.totalorder %s60, %s61
    %p75 = scmp.eq.s32.totalorder %s15, 1
    %p76 = por %p74, %p75
    %p78 = scmp.ne.s32.totalorder %s61, %s77
    %p79 = scmp.eq.s32.totalorder %s15, 0
    %p80 = por %p78, %p79
    %s81 = ssub.s32 %s17, %s24
    %p82 = scmp.eq.s32.totalorder %s81, 0
    %s84 = sadd.s32 %s83, 1
    %s85 = scalar_select %p82, %s83, %s84
    %p88 = pneg %p82
    %p89 = scmp.eq.s32.totalorder %s9, 1
    %p90 = por %p88, %p89
    %p91 = scmp.ne.s32.totalorder %s83, %s86
    %p92 = scmp.eq.s32.totalorder %s9, 0
    %p93 = por %p91, %p92
    %p94 = scmp.ne.s32.totalorder %s83, %s86
    %p95 = scmp.eq.s32.totalorder %s14, 1
    %p96 = por %p94, %p95
    %p97 = scmp.ne.s32.totalorder %s86, %s87
    %p98 = scmp.eq.s32.totalorder %s14, 0
    %p99 = por %p97, %p98
    %p100 = scmp.ne.s32.totalorder %s86, %s87
    %p101 = scmp.eq.s32.totalorder %s15, 1
    %p102 = por %p100, %p101
    %p104 = scmp.ne.s32.totalorder %s87, %s103
    %p105 = scmp.eq.s32.totalorder %s15, 0
    %p106 = por %p104, %p105
    %s107 = ssub.s32 %s16, %s28
    %s108 = ssub.s32 %s17, %s24
    %s109 = sor.u32 %s107, %s108
    %p110 = scmp.eq.s32.totalorder %s109, 0
    %s112 = sadd.s32 %s111, 1
    %s113 = scalar_select %p110, %s111, %s112
    %p116 = pneg %p110
    %p117 = scmp.eq.s32.totalorder %s9, 1
    %p118 = por %p116, %p117
    %p119 = scmp.ne.s32.totalorder %s111, %s114
    %p120 = scmp.eq.s32.totalorder %s9, 0
    %p121 = por %p119, %p120
    %p122 = scmp.ne.s32.totalorder %s111, %s114
    %p123 = scmp.eq.s32.totalorder %s14, 1
    %p124 = por %p122, %p123
    %p125 = scmp.ne.s32.totalorder %s114, %s115
    %p126 = scmp.eq.s32.totalorder %s14, 0
    %p127 = por %p125, %p126
    %p128 = scmp.ne.s32.totalorder %s114, %s115
    %p129 = scmp.eq.s32.totalorder %s15, 1
    %p130 = por %p128, %p129
    %p132 = scmp.ne.s32.totalorder %s115, %s131
    %p133 = scmp.eq.s32.totalorder %s15, 0
    %p134 = por %p132, %p133
    %p135 = scmp.le.s32.totalorder 1, %s9
    %p136 = scmp.lt.s32.totalorder %s9, 3
    %p137 = pnand %p135, %p136
    %p138 = pneg %p137
    // Predicated region
    $region9: #{transformer_embedder.12} parent=5 // pred_check
      _
    $region10: #{transformer_embedder.12} parent=5 // pred_check_branch
      %140 = sbr.rel (%p137) target = $region12
    $region11: #{transformer_embedder.12} parent=5 // pred_region
      %s141 = ssub.s32 %s9, 1
      // Predicated region
      $region13: #{transformer_embedder.12} parent=11 // pred_check
        %p142 = pneg %p73
      $region14: #{transformer_embedder.12} parent=11 // pred_check_branch
        %144 = sbr.rel (%p142) target = $region16
      $region15: #{transformer_embedder.12} parent=11 // pred_region
        %p145 = scmp.lt.s32.totalorder %s19, 0
        %s146 = scalar_select %p145, %s19, 0
        %s147 = smul.addr %s146, 2
        %s148 = scalar_lea.vmem %s1, %s147
      $region16: #{transformer_embedder.12} parent=11 // pred_fallthru
        _
      // Predicated region
      $region17: #{transformer_embedder.12} parent=11 // pred_check
        %p149 = pneg %p99
      $region18: #{transformer_embedder.12} parent=11 // pred_check_branch
        %151 = sbr.rel (%p149) target = $region20
      $region19: #{transformer_embedder.12} parent=11 // pred_region
        %p152 = scmp.lt.s32.totalorder %s19, 0
        %s153 = scalar_select %p152, %s19, 0
        %s154 = scalar_lea.vmem %s2, %s153
      $region20: #{transformer_embedder.12} parent=11 // pred_fallthru
        _
    $region12: #{transformer_embedder.12} parent=5 // pred_fallthru
      _
    %p155 = scmp.lt.s32.totalorder %s9, 2
    // Predicated region
    $region21: #{transformer_embedder.12} parent=5 // pred_check
      %p156 = pneg %p155
    $region22: #{transformer_embedder.12} parent=5 // pred_check_branch
      %158 = sbr.rel (%p156) target = $region24
    $region23: #{transformer_embedder.12} parent=5 // pred_region
      // Predicated region
      $region25: #{transformer_embedder.12} parent=23 // pred_check
        %p159 = pneg %p41
      $region26: #{transformer_embedder.12} parent=23 // pred_check_branch
        %161 = sbr.rel (%p159) target = $region28
      $region27: #{transformer_embedder.12} parent=23 // pred_region
        %p162 = scmp.lt.s32.totalorder %s16, 1
        %s163 = scalar_select %p162, %s16, 1
        %s164 = smul.addr %s163, 4
        %s165 = scalar_lea.vmem %s0, %s164
      $region28: #{transformer_embedder.12} parent=23 // pred_fallthru
        _
    $region24: #{transformer_embedder.12} parent=5 // pred_fallthru
      _
    %p166 = scmp.le.s32.totalorder 1, %s9
    %p167 = scmp.lt.s32.totalorder %s9, 3
    %p168 = pnand %p166, %p167
    %p169 = pneg %p168
    // Predicated region
    $region29: #{transformer_embedder.12} parent=5 // pred_check
      _
    $region30: #{transformer_embedder.12} parent=5 // pred_check_branch
      %171 = sbr.rel (%p168) target = $region32
    $region31: #{transformer_embedder.12} parent=5 // pred_region
      %s172 = ssub.s32 %s9, 1
      %p173 = scmp.lt.s32.totalorder %s18, 1
      %s174 = scalar_select %p173, %s18, 1
      %s175 = smul.addr %s174, 4
      %s176 = scalar_lea.vmem %s0, %s175
      %p177 = pneg %p47
      %p178 = pneg %p44
      %p179 = scmp.lt.s32.totalorder %s19, 0
      %s180 = scalar_select %p179, %s19, 0
      %s181 = smul.addr %s180, 2
      %s182 = scalar_lea.vmem %s1, %s181
      %p183 = pneg %p73
      %p184 = pneg %p70
      %p185 = scmp.lt.s32.totalorder %s19, 0
      %s186 = scalar_select %p185, %s19, 0
      %s187 = scalar_lea.vmem %s2, %s186
      %p188 = pneg %p99
      %p189 = pneg %p96
      %p190 = pneg %p127
      %p191 = pneg %p124
      %p192 = scmp.lt.s32.totalorder %s18, 1
      %s193 = scalar_select %p192, %s18, 1
      %p194 = scmp.lt.s32.totalorder %s19, 0
      %s195 = scalar_select %p194, %s19, 0
      %s196 = sadd.s32 %s195, %s193
      %s197 = smul.addr %s196, 4
      %s198 = scalar_lea.vmem %s3, %s197
      %p199 = scmp.lt.s32.totalorder %s18, 1
      %s200 = scalar_select %p199, %s18, 1
      %s201 = smul.addr %s200, 4
      %s202 = scalar_lea.vmem %s0, %s201
      %p203 = scmp.lt.s32.totalorder %s19, 0
      %s204 = scalar_select %p203, %s19, 0
      %s205 = smul.addr %s204, 2
      %s206 = scalar_lea.vmem %s1, %s205
      %p207 = scmp.lt.s32.totalorder %s19, 0
      %s208 = scalar_select %p207, %s19, 0
      %s209 = scalar_lea.vmem %s2, %s208
      %p210 = scmp.lt.s32.totalorder %s18, 1
      %s211 = scalar_select %p210, %s18, 1
      %p212 = scmp.lt.s32.totalorder %s19, 0
      %s213 = scalar_select %p212, %s19, 0
      %s214 = sadd.s32 %s213, %s211
      %s215 = smul.addr %s214, 4
      %s216 = scalar_lea.vmem %s3, %s215
      %v218 = vld [vmem:[%s202] sm:$0xf]
      %v219 = vld [vmem:[%s206] sm:$0x3]
      %v220 = vld [vmem:[%s209] sm:$0x1]
      %v221 = vunpack.c.l.bf16 %v220
      %v222 = vperm.slane %v221, 0
      %vm223 = vcmask 31744
      %v225 = vsel %vm223, %v218, 0
      %vm227 = vcmask 1041408
      %v229 = vsel %vm227, %v219, 0
      %231 = vmatpush.bf16.msra.mxu0 0
      %232 = vmatpush.bf16.msra.mxu0 0
      %233 = vmatpush.bf16.msra.mxu0 0
      %234 = vmatpush.bf16.msra.mxu0 0
      %235 = vmatpush.bf16.msra.mxu0 0
      %236 = vmatpush.bf16.msra.mxu0 0
      %237 = vmatpush.bf16.msra.mxu0 0
      %238 = vmatpush.bf16.msra.mxu0 %v229
      %239 = vmatmul.bf16.gmra.mxu0 %v225
      %v240 = vpop.f32.mrf.mxu0
      %v241 = vadd.f32 %v222, %v240
      %v242 = vpop.f32.mrf.mxu0
      %243 = vdwg.mxu0
      %v244 = vpack.c.bf16 %v241, %v241
      %245 = vst [vmem:[%s216] sm:$0xf] %v244
      %p246 = scmp.lt.s32.totalorder %s18, 1
      %s247 = scalar_select %p246, %s18, 1
      %p248 = scmp.lt.s32.totalorder %s19, 0
      %s249 = scalar_select %p248, %s19, 0
      %s250 = sadd.s32 %s249, %s247
      %s251 = smul.addr %s250, 4
      %s252 = scalar_lea.vmem %s3, %s251
      // Predicated region
      $region33: #{transformer_embedder.12} parent=31 // pred_check
        %p253 = pneg %p124
      $region34: #{transformer_embedder.12} parent=31 // pred_check_branch
        %255 = sbr.rel (%p253) target = $region36
      $region35: #{transformer_embedder.12} parent=31 // pred_region
        _
      $region36: #{transformer_embedder.12} parent=31 // pred_fallthru
        _
    $region32: #{transformer_embedder.12} parent=5 // pred_fallthru
      _
    %p256 = scmp.le.s32.totalorder 2, %s9
    // Predicated region
    $region37: #{transformer_embedder.12} parent=5 // pred_check
      %p257 = pneg %p256
    $region38: #{transformer_embedder.12} parent=5 // pred_check_branch
      %259 = sbr.rel (%p257) target = $region40
    $region39: #{transformer_embedder.12} parent=5 // pred_region
      %s260 = ssub.s32 %s9, 2
      // Predicated region
      $region41: #{transformer_embedder.12} parent=39 // pred_check
        %p261 = pneg %p130
      $region42: #{transformer_embedder.12} parent=39 // pred_check_branch
        %263 = sbr.rel (%p261) target = $region44
      $region43: #{transformer_embedder.12} parent=39 // pred_region
        %p264 = scmp.lt.s32.totalorder %s20, 1
        %s265 = scalar_select %p264, %s20, 1
        %p266 = scmp.lt.s32.totalorder %s21, 0
        %s267 = scalar_select %p266, %s21, 0
        %s268 = sadd.s32 %s267, %s265
        %s269 = smul.addr %s268, 4
        %s270 = scalar_lea.vmem %s3, %s269
      $region44: #{transformer_embedder.12} parent=39 // pred_fallthru
        _
    $region40: #{transformer_embedder.12} parent=5 // pred_fallthru
      _
  $region6: #{transformer_embedder.12} parent=0 // loop_footer
    %s13 = sadd.s32 1, %s9
  $region7: #{transformer_embedder.12} parent=0 // loop_footer_branch
    %8 = sbr.rel target = $region3
  $region8: #{transformer_embedder.12} parent=0 // loop_exit
    _

// kernel: transformer_embedder.13
$region0: #{transformer_embedder.13}
  #allocation0 [shape = 'u32[]', space=smem, size = 0x4, offset = 0x4, fixed_abs, tag = 'smem constant byte address 0x4 - core index']
  #allocation1 [shape = 'u32[72,128]{1,0:T(1,128)}', space=vmem, size = 0x9000, scoped, tag = 'internal scratch']
  %s0 = inlined_call_operand.vmem [shape: bf16[16,128], index: 0, kind: input, shape index: {}]
  %s1 = inlined_call_operand.hbm [shape: bf16[128,384], index: 1, kind: input, shape index: {}]
  %s2 = inlined_call_operand.vmem [shape: bf16[1,384], index: 2, kind: input, shape index: {}]
  %s3 = inlined_call_operand.vmem [shape: bf16[16,384], index: 3, kind: output, shape index: {}]
  %s4 = sld [smem:[#allocation0]]
  $region49: #{transformer_embedder.13} parent=0
    _
  %s6 = ssub.s32 1, %s4
  %s7 = scalar_select 0, %s6, %s4
  $region1: #{transformer_embedder.13} parent=0
    #allocation2 [shape = 'u8[98304]{0}', space=vmem, size = 0x18000, scoped, tag = 'input window, operand 1, single buffered']
    #allocation3 [shape = 's32[2]{0}', space=sflag, size = 0x8, scoped, tag = 'scoped memory for transformer_embedder.13']
    %8 = vsyncpa [#allocation3], 0
    loop: start=0, step=1, limit=4
    $region2: #{transformer_embedder.13} parent=1 // loop_pre_header
      _
    $region3: #{transformer_embedder.13} parent=1 // loop_header
      %s10 = sphi 0, %s14
      %p11 = scmp.ge.s32.totalorder %s10, 4
      %s17 = sphi 0, %s29
      %s18 = sphi 0, %s25
      %s19 = sphi 0, %s17
      %s20 = sphi 0, %s18
      %s21 = sphi 0, %s19
      %s22 = sphi 0, %s20
      %s32 = sphi 0, %s34
      %s35 = sphi 0, %s32
      %s36 = sphi 0, %s35
      %s52 = sphi 0, %s36
      %s58 = sphi 0, %s60
      %s61 = sphi 0, %s58
      %s62 = sphi 0, %s61
      %s78 = sphi 0, %s62
      %s84 = sphi 0, %s86
      %s87 = sphi 0, %s84
      %s88 = sphi 0, %s87
      %s104 = sphi 0, %s88
      %s112 = sphi 0, %s114
      %s115 = sphi 0, %s112
      %s116 = sphi 0, %s115
      %s132 = sphi 0, %s116
    $region4: #{transformer_embedder.13} parent=1 // loop_header_branch
      %13 = sbr.rel (%p11) target = $region8
    $region5: #{transformer_embedder.13} parent=1 // loop_body
      %s15 = ssub.s32 %s10, 1
      %s16 = ssub.s32 %s10, 2
      %s23 = sadd.s32 1, %s18
      %p24 = scmp.ge.s32.totalorder %s23, 1
      %s25 = scalar_select %p24, 0, %s23
      %s26 = sadd.s32 1, %s17
      %s27 = scalar_select %p24, %s26, %s17
      %p28 = scmp.ge.s32.totalorder %s27, 2
      %s29 = scalar_select %p28, 0, %s27
      %s30 = ssub.s32 %s17, %s29
      %p31 = scmp.eq.s32.totalorder %s30, 0
      %s33 = sadd.s32 %s32, 1
      %s34 = scalar_select %p31, %s32, %s33
      %p37 = pneg %p31
      %p38 = scmp.eq.s32.totalorder %s10, 1
      %p39 = por %p37, %p38
      %p40 = scmp.ne.s32.totalorder %s32, %s35
      %p41 = scmp.eq.s32.totalorder %s10, 0
      %p42 = por %p40, %p41
      %p43 = scmp.ne.s32.totalorder %s32, %s35
      %p44 = scmp.eq.s32.totalorder %s15, 1
      %p45 = por %p43, %p44
      %p46 = scmp.ne.s32.totalorder %s35, %s36
      %p47 = scmp.eq.s32.totalorder %s15, 0
      %p48 = por %p46, %p47
      %p49 = scmp.ne.s32.totalorder %s35, %s36
      %p50 = scmp.eq.s32.totalorder %s16, 1
      %p51 = por %p49, %p50
      %p53 = scmp.ne.s32.totalorder %s36, %s52
      %p54 = scmp.eq.s32.totalorder %s16, 0
      %p55 = por %p53, %p54
      %s56 = ssub.s32 %s18, %s25
      %p57 = scmp.eq.s32.totalorder %s56, 0
      %s59 = sadd.s32 %s58, 1
      %s60 = scalar_select %p57, %s58, %s59
      %p63 = pneg %p57
      %p64 = scmp.eq.s32.totalorder %s10, 1
      %p65 = por %p63, %p64
      %p66 = scmp.ne.s32.totalorder %s58, %s61
      %p67 = scmp.eq.s32.totalorder %s10, 0
      %p68 = por %p66, %p67
      %p69 = scmp.ne.s32.totalorder %s58, %s61
      %p70 = scmp.eq.s32.totalorder %s15, 1
      %p71 = por %p69, %p70
      %p72 = scmp.ne.s32.totalorder %s61, %s62
      %p73 = scmp.eq.s32.totalorder %s15, 0
      %p74 = por %p72, %p73
      %p75 = scmp.ne.s32.totalorder %s61, %s62
      %p76 = scmp.eq.s32.totalorder %s16, 1
      %p77 = por %p75, %p76
      %p79 = scmp.ne.s32.totalorder %s62, %s78
      %p80 = scmp.eq.s32.totalorder %s16, 0
      %p81 = por %p79, %p80
      %s82 = ssub.s32 %s18, %s25
      %p83 = scmp.eq.s32.totalorder %s82, 0
      %s85 = sadd.s32 %s84, 1
      %s86 = scalar_select %p83, %s84, %s85
      %p89 = pneg %p83
      %p90 = scmp.eq.s32.totalorder %s10, 1
      %p91 = por %p89, %p90
      %p92 = scmp.ne.s32.totalorder %s84, %s87
      %p93 = scmp.eq.s32.totalorder %s10, 0
      %p94 = por %p92, %p93
      %p95 = scmp.ne.s32.totalorder %s84, %s87
      %p96 = scmp.eq.s32.totalorder %s15, 1
      %p97 = por %p95, %p96
      %p98 = scmp.ne.s32.totalorder %s87, %s88
      %p99 = scmp.eq.s32.totalorder %s15, 0
      %p100 = por %p98, %p99
      %p101 = scmp.ne.s32.totalorder %s87, %s88
      %p102 = scmp.eq.s32.totalorder %s16, 1
      %p103 = por %p101, %p102
      %p105 = scmp.ne.s32.totalorder %s88, %s104
      %p106 = scmp.eq.s32.totalorder %s16, 0
      %p107 = por %p105, %p106
      %s108 = ssub.s32 %s17, %s29
      %s109 = ssub.s32 %s18, %s25
      %s110 = sor.u32 %s108, %s109
      %p111 = scmp.eq.s32.totalorder %s110, 0
      %s113 = sadd.s32 %s112, 1
      %s114 = scalar_select %p111, %s112, %s113
      %p117 = pneg %p111
      %p118 = scmp.eq.s32.totalorder %s10, 1
      %p119 = por %p117, %p118
      %p120 = scmp.ne.s32.totalorder %s112, %s115
      %p121 = scmp.eq.s32.totalorder %s10, 0
      %p122 = por %p120, %p121
      %p123 = scmp.ne.s32.totalorder %s112, %s115
      %p124 = scmp.eq.s32.totalorder %s15, 1
      %p125 = por %p123, %p124
      %p126 = scmp.ne.s32.totalorder %s115, %s116
      %p127 = scmp.eq.s32.totalorder %s15, 0
      %p128 = por %p126, %p127
      %p129 = scmp.ne.s32.totalorder %s115, %s116
      %p130 = scmp.eq.s32.totalorder %s16, 1
      %p131 = por %p129, %p130
      %p133 = scmp.ne.s32.totalorder %s116, %s132
      %p134 = scmp.eq.s32.totalorder %s16, 0
      %p135 = por %p133, %p134
      %p136 = scmp.le.s32.totalorder 1, %s10
      %p137 = scmp.lt.s32.totalorder %s10, 3
      %p138 = pnand %p136, %p137
      %p139 = pneg %p138
      // Predicated region
      $region9: #{transformer_embedder.13} parent=5 // pred_check
        _
      $region10: #{transformer_embedder.13} parent=5 // pred_check_branch
        %141 = sbr.rel (%p138) target = $region12
      $region11: #{transformer_embedder.13} parent=5 // pred_region
        %s142 = ssub.s32 %s10, 1
        // Predicated region
        $region13: #{transformer_embedder.13} parent=11 // pred_check
          %p143 = pneg %p74
        $region14: #{transformer_embedder.13} parent=11 // pred_check_branch
          %145 = sbr.rel (%p143) target = $region16
        $region15: #{transformer_embedder.13} parent=11 // pred_region
          %s146 = smul.u32 3, %s20
          %148 = vsyncadd [#allocation3], 0
          %s149 = smul.addr %s146, 4
          %s150 = scalar_lea.hbm %s1, %s149
          %s151 = sshll.u32 %s150, 4
          %s152 = int_to_ptr.hbm [resolvable:$true] %s151
          %s153 = sshll.u32 [#allocation2], 4
          %s154 = int_to_ptr.vmem [resolvable:$true] %s153
          %159 = dma.hbm_to_vmem [thread:$0]  %s152, 3072, %s154, [#allocation3], 192, 192, 12
        $region16: #{transformer_embedder.13} parent=11 // pred_fallthru
          _
        // Predicated region
        $region17: #{transformer_embedder.13} parent=11 // pred_check
          %p160 = pneg %p100
        $region18: #{transformer_embedder.13} parent=11 // pred_check_branch
          %162 = sbr.rel (%p160) target = $region20
        $region19: #{transformer_embedder.13} parent=11 // pred_region
          %s163 = smul.u32 3, %s20
          %p164 = scmp.lt.s32.totalorder %s163, 2
          %s165 = scalar_select %p164, %s163, 2
          %s166 = scalar_lea.vmem %s2, %s165
          %s167 = smul.u32 3, %s20
        $region20: #{transformer_embedder.13} parent=11 // pred_fallthru
          _
      $region12: #{transformer_embedder.13} parent=5 // pred_fallthru
        _
      %p168 = scmp.lt.s32.totalorder %s10, 2
      // Predicated region
      $region21: #{transformer_embedder.13} parent=5 // pred_check
        %p169 = pneg %p168
      $region22: #{transformer_embedder.13} parent=5 // pred_check_branch
        %171 = sbr.rel (%p169) target = $region24
      $region23: #{transformer_embedder.13} parent=5 // pred_region
        // Predicated region
        $region25: #{transformer_embedder.13} parent=23 // pred_check
          %p172 = pneg %p42
        $region26: #{transformer_embedder.13} parent=23 // pred_check_branch
          %174 = sbr.rel (%p172) target = $region28
        $region27: #{transformer_embedder.13} parent=23 // pred_region
          %p175 = scmp.lt.s32.totalorder %s17, 1
          %s176 = scalar_select %p175, %s17, 1
          %s177 = smul.addr %s176, 4
          %s178 = scalar_lea.vmem %s0, %s177
        $region28: #{transformer_embedder.13} parent=23 // pred_fallthru
          _
      $region24: #{transformer_embedder.13} parent=5 // pred_fallthru
        _
      %p179 = scmp.le.s32.totalorder 1, %s10
      %p180 = scmp.lt.s32.totalorder %s10, 3
      %p181 = pnand %p179, %p180
      %p182 = pneg %p181
      // Predicated region
      $region29: #{transformer_embedder.13} parent=5 // pred_check
        _
      $region30: #{transformer_embedder.13} parent=5 // pred_check_branch
        %184 = sbr.rel (%p181) target = $region32
      $region31: #{transformer_embedder.13} parent=5 // pred_region
        %s185 = ssub.s32 %s10, 1
        // Predicated region
        $region33: #{transformer_embedder.13} parent=31 // pred_check
          %p186 = pneg %p74
        $region34: #{transformer_embedder.13} parent=31 // pred_check_branch
          %188 = sbr.rel (%p186) target = $region36
        $region35: #{transformer_embedder.13} parent=31 // pred_region
          %190 = dma.done [#allocation3], 3072
        $region36: #{transformer_embedder.13} parent=31 // pred_fallthru
          _
        %p191 = scmp.lt.s32.totalorder %s19, 1
        %s192 = scalar_select %p191, %s19, 1
        %s193 = smul.addr %s192, 4
        %s194 = scalar_lea.vmem %s0, %s193
        %p195 = pneg %p48
        %p196 = pneg %p45
        %p197 = pneg %p74
        %p198 = pneg %p71
        %s199 = smul.u32 3, %s20
        %p200 = scmp.lt.s32.totalorder %s199, 2
        %s201 = scalar_select %p200, %s199, 2
        %s202 = scalar_lea.vmem %s2, %s201
        %p203 = pneg %p100
        %p204 = pneg %p97
        %p205 = pneg %p128
        %p206 = pneg %p125
        %s207 = smul.u32 3, %s20
        %p208 = scmp.lt.s32.totalorder %s19, 1
        %s209 = scalar_select %p208, %s19, 1
        %p210 = scmp.lt.s32.totalorder %s207, 2
        %s211 = scalar_select %p210, %s207, 2
        %s212 = smul.addr %s209, 3
        %s213 = sadd.s32 %s211, %s212
        %s214 = smul.addr %s213, 4
        %s215 = scalar_lea.vmem %s3, %s214
        %p216 = scmp.lt.s32.totalorder %s19, 1
        %s217 = scalar_select %p216, %s19, 1
        %s218 = smul.addr %s217, 4
        %s219 = scalar_lea.vmem %s0, %s218
        %s220 = smul.u32 3, %s20
        %s221 = smul.u32 3, %s20
        %p222 = scmp.lt.s32.totalorder %s221, 2
        %s223 = scalar_select %p222, %s221, 2
        %s224 = scalar_lea.vmem %s2, %s223
        %s225 = smul.u32 3, %s20
        %s226 = smul.u32 3, %s20
        %p227 = scmp.lt.s32.totalorder %s19, 1
        %s228 = scalar_select %p227, %s19, 1
        %p229 = scmp.lt.s32.totalorder %s226, 2
        %s230 = scalar_select %p229, %s226, 2
        %s231 = smul.addr %s228, 3
        %s232 = sadd.s32 %s230, %s231
        %s233 = smul.addr %s232, 4
        %s234 = scalar_lea.vmem %s3, %s233
        %s235 = smul.u32 3, %s20
        %v236 = vld [vmem:[%s219] sm:$0xf]
        %v237 = vld [vmem:[#allocation2] sm:$0xff]
        %v238 = vld [vmem:[#allocation2 + $0x8] sm:$0xf]
        %v239 = vld [vmem:[#allocation2 + $0xc] sm:$0xff]
        %v240 = vld [vmem:[#allocation2 + $0x14] sm:$0xf]
        %v241 = vld [vmem:[#allocation2 + $0x18] sm:$0xff]
        %v242 = vld [vmem:[#allocation2 + $0x20] sm:$0xf]
        %v243 = vld [vmem:[#allocation2 + $0x24] sm:$0xff]
        %v244 = vld [vmem:[#allocation2 + $0x2c] sm:$0xf]
        %v245 = vld [vmem:[#allocation2 + $0x30] sm:$0xff]
        %v246 = vld [vmem:[#allocation2 + $0x38] sm:$0xf]
        %v247 = vld [vmem:[#allocation2 + $0x3c] sm:$0xff]
        %v248 = vld [vmem:[#allocation2 + $0x44] sm:$0xf]
        %v249 = vld [vmem:[#allocation2 + $0x48] sm:$0xff]
        %v250 = vld [vmem:[#allocation2 + $0x50] sm:$0xf]
        %v251 = vld [vmem:[#allocation2 + $0x54] sm:$0xff]
        %v252 = vld [vmem:[#allocation2 + $0x5c] sm:$0xf]
        %v253 = vld [vmem:[#allocation2 + $0x60] sm:$0xff]
        %v254 = vld [vmem:[#allocation2 + $0x68] sm:$0xf]
        %v255 = vld [vmem:[#allocation2 + $0x6c] sm:$0xff]
        %v256 = vld [vmem:[#allocation2 + $0x74] sm:$0xf]
        %v257 = vld [vmem:[#allocation2 + $0x78] sm:$0xff]
        %v258 = vld [vmem:[#allocation2 + $0x80] sm:$0xf]
        %v259 = vld [vmem:[#allocation2 + $0x84] sm:$0xff]
        %v260 = vld [vmem:[#allocation2 + $0x8c] sm:$0xf]
        %v261 = vld [vmem:[#allocation2 + $0x90] sm:$0xff]
        %v262 = vld [vmem:[#allocation2 + $0x98] sm:$0xf]
        %v263 = vld [vmem:[#allocation2 + $0x9c] sm:$0xff]
        %v264 = vld [vmem:[#allocation2 + $0xa4] sm:$0xf]
        %v265 = vld [vmem:[#allocation2 + $0xa8] sm:$0xff]
        %v266 = vld [vmem:[#allocation2 + $0xb0] sm:$0xf]
        %v267 = vld [vmem:[#allocation2 + $0xb4] sm:$0xff]
        %v268 = vld [vmem:[#allocation2 + $0xbc] sm:$0xf]
        %v269 = vld [vmem:[%s224] sm:$0x7]
        %v270 = vunpack.c.l.bf16 %v269
        %v272 = vperm.slane %v270, 0
        %v273 = vperm.slane %v270, 2
        %v274 = vperm.slane %v270, 4
        %v278 = vperm.slane %v272, 0
        %v279 = vperm.slane %v273, 0
        %v280 = vperm.slane %v274, 0
        %v313 = vunpack.c.l.b16 %v237
        %v314 = vunpack.c.h.b16 %v237
        %v315 = vunpack.c.l.b16 %v238
        %v316 = vunpack.c.l.b16 %v239
        %v317 = vunpack.c.h.b16 %v239
        %v318 = vunpack.c.l.b16 %v240
        %v319 = vunpack.c.l.b16 %v241
        %v320 = vunpack.c.h.b16 %v241
        %v321 = vunpack.c.l.b16 %v242
        %v322 = vunpack.c.l.b16 %v243
        %v323 = vunpack.c.h.b16 %v243
        %v324 = vunpack.c.l.b16 %v244
        %v325 = vunpack.c.l.b16 %v245
        %v326 = vunpack.c.h.b16 %v245
        %v327 = vunpack.c.l.b16 %v246
        %v328 = vunpack.c.l.b16 %v247
        %v329 = vunpack.c.h.b16 %v247
        %v330 = vunpack.c.l.b16 %v248
        %v331 = vunpack.c.l.b16 %v249
        %v332 = vunpack.c.h.b16 %v249
        %v333 = vunpack.c.l.b16 %v250
        %v334 = vunpack.c.l.b16 %v251
        %v335 = vunpack.c.h.b16 %v251
        %v336 = vunpack.c.l.b16 %v252
        %v337 = vunpack.c.l.b16 %v253
        %v338 = vunpack.c.h.b16 %v253
        %v339 = vunpack.c.l.b16 %v254
        %v340 = vunpack.c.l.b16 %v255
        %v341 = vunpack.c.h.b16 %v255
        %v342 = vunpack.c.l.b16 %v256
        %v343 = vunpack.c.l.b16 %v257
        %v344 = vunpack.c.h.b16 %v257
        %v345 = vunpack.c.l.b16 %v258
        %v346 = vunpack.c.l.b16 %v259
        %v347 = vunpack.c.h.b16 %v259
        %v348 = vunpack.c.l.b16 %v260
        %v349 = vunpack.c.l.b16 %v261
        %v350 = vunpack.c.h.b16 %v261
        %v351 = vunpack.c.l.b16 %v262
        %v352 = vunpack.c.l.b16 %v263
        %v353 = vunpack.c.h.b16 %v263
        %v354 = vunpack.c.l.b16 %v264
        %v355 = vunpack.c.l.b16 %v265
        %v356 = vunpack.c.h.b16 %v265
        %v357 = vunpack.c.l.b16 %v266
        %v358 = vunpack.c.l.b16 %v267
        %v359 = vunpack.c.h.b16 %v267
        %v360 = vunpack.c.l.b16 %v268
        %v361 = vpack.c.b16 %v316, %v313
        %v362 = vpack.c.b16 %v317, %v314
        %v363 = vpack.c.b16 %v318, %v315
        %v364 = vpack.c.b16 %v322, %v319
        %v365 = vpack.c.b16 %v323, %v320
        %v366 = vpack.c.b16 %v324, %v321
        %v367 = vpack.c.b16 %v328, %v325
        %v368 = vpack.c.b16 %v329, %v326
        %v369 = vpack.c.b16 %v330, %v327
        %v370 = vpack.c.b16 %v334, %v331
        %v371 = vpack.c.b16 %v335, %v332
        %v372 = vpack.c.b16 %v336, %v333
        %v373 = vpack.c.b16 %v340, %v337
        %v374 = vpack.c.b16 %v341, %v338
        %v375 = vpack.c.b16 %v342, %v339
        %v376 = vpack.c.b16 %v346, %v343
        %v377 = vpack.c.b16 %v347, %v344
        %v378 = vpack.c.b16 %v348, %v345
        %v379 = vpack.c.b16 %v352, %v349
        %v380 = vpack.c.b16 %v353, %v350
        %v381 = vpack.c.b16 %v354, %v351
        %v382 = vpack.c.b16 %v358, %v355
        %v383 = vpack.c.b16 %v359, %v356
        %v384 = vpack.c.b16 %v360, %v357
        %409 = vmatpush.bf16.msra.mxu0 %v382
        %410 = vmatpush.bf16.msra.mxu0 %v379
        %411 = vmatpush.bf16.msra.mxu0 %v376
        %412 = vmatpush.bf16.msra.mxu0 %v373
        %413 = vmatpush.bf16.msra.mxu0 %v370
        %414 = vmatpush.bf16.msra.mxu0 %v367
        %415 = vmatpush.bf16.msra.mxu0 %v364
        %416 = vmatpush.bf16.msra.mxu0 %v361
        %417 = vmatmul.bf16.gmra.mxu0 %v236
        %v418 = vpop.f32.mrf.mxu0
        %v419 = vadd.f32 %v278, %v418
        %v420 = vpop.f32.mrf.mxu0
        %421 = vdwg.mxu0
        %422 = vmatpush.bf16.msra.mxu0 %v383
        %423 = vmatpush.bf16.msra.mxu0 %v380
        %424 = vmatpush.bf16.msra.mxu0 %v377
        %425 = vmatpush.bf16.msra.mxu0 %v374
        %426 = vmatpush.bf16.msra.mxu0 %v371
        %427 = vmatpush.bf16.msra.mxu0 %v368
        %428 = vmatpush.bf16.msra.mxu0 %v365
        %429 = vmatpush.bf16.msra.mxu0 %v362
        %430 = vmatmul.bf16.gmra.mxu0 %v236
        %v431 = vpop.f32.mrf.mxu0
        %v432 = vadd.f32 %v279, %v431
        %v433 = vpop.f32.mrf.mxu0
        %434 = vdwg.mxu0
        %435 = vmatpush.bf16.msra.mxu0 %v384
        %436 = vmatpush.bf16.msra.mxu0 %v381
        %437 = vmatpush.bf16.msra.mxu0 %v378
        %438 = vmatpush.bf16.msra.mxu0 %v375
        %439 = vmatpush.bf16.msra.mxu0 %v372
        %440 = vmatpush.bf16.msra.mxu0 %v369
        %441 = vmatpush.bf16.msra.mxu0 %v366
        %442 = vmatpush.bf16.msra.mxu0 %v363
        %443 = vmatmul.bf16.gmra.mxu0 %v236
        %v444 = vpop.f32.mrf.mxu0
        %v445 = vadd.f32 %v280, %v444
        %v446 = vpop.f32.mrf.mxu0
        %447 = vdwg.mxu0
        %v448 = vpack.c.bf16 %v432, %v419
        %v449 = vpack.c.bf16 %v445, %v445
        %450 = vst [vmem:[%s234] sm:$0xff] %v448
        %451 = vst [vmem:[%s234 + $0x8] sm:$0xf] %v449
        %s452 = smul.u32 3, %s20
        %p453 = scmp.lt.s32.totalorder %s19, 1
        %s454 = scalar_select %p453, %s19, 1
        %p455 = scmp.lt.s32.totalorder %s452, 2
        %s456 = scalar_select %p455, %s452, 2
        %s457 = smul.addr %s454, 3
        %s458 = sadd.s32 %s456, %s457
        %s459 = smul.addr %s458, 4
        %s460 = scalar_lea.vmem %s3, %s459
        // Predicated region
        $region37: #{transformer_embedder.13} parent=31 // pred_check
          %p461 = pneg %p125
        $region38: #{transformer_embedder.13} parent=31 // pred_check_branch
          %463 = sbr.rel (%p461) target = $region40
        $region39: #{transformer_embedder.13} parent=31 // pred_region
          %s464 = smul.u32 3, %s20
        $region40: #{transformer_embedder.13} parent=31 // pred_fallthru
          _
      $region32: #{transformer_embedder.13} parent=5 // pred_fallthru
        _
      %p465 = scmp.le.s32.totalorder 2, %s10
      // Predicated region
      $region41: #{transformer_embedder.13} parent=5 // pred_check
        %p466 = pneg %p465
      $region42: #{transformer_embedder.13} parent=5 // pred_check_branch
        %468 = sbr.rel (%p466) target = $region44
      $region43: #{transformer_embedder.13} parent=5 // pred_region
        %s469 = ssub.s32 %s10, 2
        // Predicated region
        $region45: #{transformer_embedder.13} parent=43 // pred_check
          %p470 = pneg %p131
        $region46: #{transformer_embedder.13} parent=43 // pred_check_branch
          %472 = sbr.rel (%p470) target = $region48
        $region47: #{transformer_embedder.13} parent=43 // pred_region
          %s473 = smul.u32 3, %s22
          %p474 = scmp.lt.s32.totalorder %s21, 1
          %s475 = scalar_select %p474, %s21, 1
          %p476 = scmp.lt.s32.totalorder %s473, 2
          %s477 = scalar_select %p476, %s473, 2
          %s478 = smul.addr %s475, 3
          %s479 = sadd.s32 %s477, %s478
          %s480 = smul.addr %s479, 4
          %s481 = scalar_lea.vmem %s3, %s480
        $region48: #{transformer_embedder.13} parent=43 // pred_fallthru
          _
      $region44: #{transformer_embedder.13} parent=5 // pred_fallthru
        _
    $region6: #{transformer_embedder.13} parent=1 // loop_footer
      %s14 = sadd.s32 1, %s10
    $region7: #{transformer_embedder.13} parent=1 // loop_footer_branch
      %9 = sbr.rel target = $region3
    $region8: #{transformer_embedder.13} parent=1 // loop_exit
      _
    %482 = vsyncpa [#allocation3], 1
    %s483 = scalar_lea.sflag [#allocation3], 1
    %484 = vsyncpa %s483, 1

// kernel: transformer_embedder.15
$region0: #{transformer_embedder.15}
  #allocation0 [shape = 'u32[]', space=smem, size = 0x4, offset = 0x4, fixed_abs, tag = 'smem constant byte address 0x4 - core index']
  #allocation1 [shape = 'u32[72,128]{1,0:T(1,128)}', space=vmem, size = 0x9000, scoped, tag = 'internal scratch']
  %s0 = inlined_call_operand.vmem [shape: bf16[16,128], index: 0, kind: input, shape index: {}]
  %s1 = inlined_call_operand.hbm [shape: bf16[128,128], index: 1, kind: input, shape index: {}]
  %s2 = inlined_call_operand.vmem [shape: bf16[1,128], index: 2, kind: input, shape index: {}]
  %s3 = inlined_call_operand.vmem [shape: bf16[16,128], index: 3, kind: input, shape index: {}]
  %s4 = inlined_call_operand.vmem [shape: bf16[1,128], index: 4, kind: input, shape index: {}]
  %s5 = inlined_call_operand.vmem [shape: bf16[1,128], index: 5, kind: input, shape index: {}]
  %s6 = inlined_call_operand.vmem [shape: bf16[16,128], index: 6, kind: output, shape index: {}]
  %s7 = sld [smem:[#allocation0]]
  $region61: #{transformer_embedder.15} parent=0
    _
  %s9 = ssub.s32 1, %s7
  %s10 = scalar_select 0, %s9, %s7
  $region1: #{transformer_embedder.15} parent=0
    #allocation2 [shape = 'u8[32768]{0}', space=vmem, size = 0x8000, scoped, tag = 'input window, operand 1, single buffered']
    #allocation3 [shape = 's32[2]{0}', space=sflag, size = 0x8, scoped, tag = 'scoped memory for transformer_embedder.15']
    %11 = vsyncpa [#allocation3], 0
    loop: start=0, step=1, limit=4
    $region2: #{transformer_embedder.15} parent=1 // loop_pre_header
      _
    $region3: #{transformer_embedder.15} parent=1 // loop_header
      %s13 = sphi 0, %s17
      %p14 = scmp.ge.s32.totalorder %s13, 4
      %s23 = sphi 0, %s25
      %s26 = sphi 0, %s23
      %s27 = sphi 0, %s26
      %s43 = sphi 0, %s27
      %s47 = sphi 0, %s47
      %s49 = sphi 0, %s47
      %s50 = sphi 0, %s49
      %s64 = sphi 0, %s50
      %s68 = sphi 0, %s68
      %s70 = sphi 0, %s68
      %s71 = sphi 0, %s70
      %s85 = sphi 0, %s71
      %s91 = sphi 0, %s93
      %s94 = sphi 0, %s91
      %s95 = sphi 0, %s94
      %s111 = sphi 0, %s95
      %s115 = sphi 0, %s115
      %s117 = sphi 0, %s115
      %s118 = sphi 0, %s117
      %s132 = sphi 0, %s118
      %s136 = sphi 0, %s136
      %s138 = sphi 0, %s136
      %s139 = sphi 0, %s138
      %s153 = sphi 0, %s139
      %s159 = sphi 0, %s161
      %s162 = sphi 0, %s159
      %s163 = sphi 0, %s162
      %s179 = sphi 0, %s163
    $region4: #{transformer_embedder.15} parent=1 // loop_header_branch
      %16 = sbr.rel (%p14) target = $region8
    $region5: #{transformer_embedder.15} parent=1 // loop_body
      %s18 = ssub.s32 %s13, 1
      %s19 = ssub.s32 %s13, 2
      %s20 = sadd.s32 %s13, 1
      %s21 = ssub.s32 %s13, %s20
      %p22 = scmp.eq.s32.totalorder %s21, 0
      %s24 = sadd.s32 %s23, 1
      %s25 = scalar_select %p22, %s23, %s24
      %p28 = pneg %p22
      %p29 = scmp.eq.s32.totalorder %s13, 1
      %p30 = por %p28, %p29
      %p31 = scmp.ne.s32.totalorder %s23, %s26
      %p32 = scmp.eq.s32.totalorder %s13, 0
      %p33 = por %p31, %p32
      %p34 = scmp.ne.s32.totalorder %s23, %s26
      %p35 = scmp.eq.s32.totalorder %s18, 1
      %p36 = por %p34, %p35
      %p37 = scmp.ne.s32.totalorder %s26, %s27
      %p38 = scmp.eq.s32.totalorder %s18, 0
      %p39 = por %p37, %p38
      %p40 = scmp.ne.s32.totalorder %s26, %s27
      %p41 = scmp.eq.s32.totalorder %s19, 1
      %p42 = por %p40, %p41
      %p44 = scmp.ne.s32.totalorder %s27, %s43
      %p45 = scmp.eq.s32.totalorder %s19, 0
      %p46 = por %p44, %p45
      %s48 = sadd.s32 %s47, 1
      %p51 = scmp.eq.s32.totalorder %s13, 1
      %p52 = scmp.ne.s32.totalorder %s47, %s49
      %p53 = scmp.eq.s32.totalorder %s13, 0
      %p54 = por %p52, %p53
      %p55 = scmp.ne.s32.totalorder %s47, %s49
      %p56 = scmp.eq.s32.totalorder %s18, 1
      %p57 = por %p55, %p56
      %p58 = scmp.ne.s32.totalorder %s49, %s50
      %p59 = scmp.eq.s32.totalorder %s18, 0
      %p60 = por %p58, %p59
      %p61 = scmp.ne.s32.totalorder %s49, %s50
      %p62 = scmp.eq.s32.totalorder %s19, 1
      %p63 = por %p61, %p62
      %p65 = scmp.ne.s32.totalorder %s50, %s64
      %p66 = scmp.eq.s32.totalorder %s19, 0
      %p67 = por %p65, %p66
      %s69 = sadd.s32 %s68, 1
      %p72 = scmp.eq.s32.totalorder %s13, 1
      %p73 = scmp.ne.s32.totalorder %s68, %s70
      %p74 = scmp.eq.s32.totalorder %s13, 0
      %p75 = por %p73, %p74
      %p76 = scmp.ne.s32.totalorder %s68, %s70
      %p77 = scmp.eq.s32.totalorder %s18, 1
      %p78 = por %p76, %p77
      %p79 = scmp.ne.s32.totalorder %s70, %s71
      %p80 = scmp.eq.s32.totalorder %s18, 0
      %p81 = por %p79, %p80
      %p82 = scmp.ne.s32.totalorder %s70, %s71
      %p83 = scmp.eq.s32.totalorder %s19, 1
      %p84 = por %p82, %p83
      %p86 = scmp.ne.s32.totalorder %s71, %s85
      %p87 = scmp.eq.s32.totalorder %s19, 0
      %p88 = por %p86, %p87
      %s89 = ssub.s32 %s13, %s20
      %p90 = scmp.eq.s32.totalorder %s89, 0
      %s92 = sadd.s32 %s91, 1
      %s93 = scalar_select %p90, %s91, %s92
      %p96 = pneg %p90
      %p97 = scmp.eq.s32.totalorder %s13, 1
      %p98 = por %p96, %p97
      %p99 = scmp.ne.s32.totalorder %s91, %s94
      %p100 = scmp.eq.s32.totalorder %s13, 0
      %p101 = por %p99, %p100
      %p102 = scmp.ne.s32.totalorder %s91, %s94
      %p103 = scmp.eq.s32.totalorder %s18, 1
      %p104 = por %p102, %p103
      %p105 = scmp.ne.s32.totalorder %s94, %s95
      %p106 = scmp.eq.s32.totalorder %s18, 0
      %p107 = por %p105, %p106
      %p108 = scmp.ne.s32.totalorder %s94, %s95
      %p109 = scmp.eq.s32.totalorder %s19, 1
      %p110 = por %p108, %p109
      %p112 = scmp.ne.s32.totalorder %s95, %s111
      %p113 = scmp.eq.s32.totalorder %s19, 0
      %p114 = por %p112, %p113
      %s116 = sadd.s32 %s115, 1
      %p119 = scmp.eq.s32.totalorder %s13, 1
      %p120 = scmp.ne.s32.totalorder %s115, %s117
      %p121 = scmp.eq.s32.totalorder %s13, 0
      %p122 = por %p120, %p121
      %p123 = scmp.ne.s32.totalorder %s115, %s117
      %p124 = scmp.eq.s32.totalorder %s18, 1
      %p125 = por %p123, %p124
      %p126 = scmp.ne.s32.totalorder %s117, %s118
      %p127 = scmp.eq.s32.totalorder %s18, 0
      %p128 = por %p126, %p127
      %p129 = scmp.ne.s32.totalorder %s117, %s118
      %p130 = scmp.eq.s32.totalorder %s19, 1
      %p131 = por %p129, %p130
      %p133 = scmp.ne.s32.totalorder %s118, %s132
      %p134 = scmp.eq.s32.totalorder %s19, 0
      %p135 = por %p133, %p134
      %s137 = sadd.s32 %s136, 1
      %p140 = scmp.eq.s32.totalorder %s13, 1
      %p141 = scmp.ne.s32.totalorder %s136, %s138
      %p142 = scmp.eq.s32.totalorder %s13, 0
      %p143 = por %p141, %p142
      %p144 = scmp.ne.s32.totalorder %s136, %s138
      %p145 = scmp.eq.s32.totalorder %s18, 1
      %p146 = por %p144, %p145
      %p147 = scmp.ne.s32.totalorder %s138, %s139
      %p148 = scmp.eq.s32.totalorder %s18, 0
      %p149 = por %p147, %p148
      %p150 = scmp.ne.s32.totalorder %s138, %s139
      %p151 = scmp.eq.s32.totalorder %s19, 1
      %p152 = por %p150, %p151
      %p154 = scmp.ne.s32.totalorder %s139, %s153
      %p155 = scmp.eq.s32.totalorder %s19, 0
      %p156 = por %p154, %p155
      %s157 = ssub.s32 %s13, %s20
      %p158 = scmp.eq.s32.totalorder %s157, 0
      %s160 = sadd.s32 %s159, 1
      %s161 = scalar_select %p158, %s159, %s160
      %p164 = pneg %p158
      %p165 = scmp.eq.s32.totalorder %s13, 1
      %p166 = por %p164, %p165
      %p167 = scmp.ne.s32.totalorder %s159, %s162
      %p168 = scmp.eq.s32.totalorder %s13, 0
      %p169 = por %p167, %p168
      %p170 = scmp.ne.s32.totalorder %s159, %s162
      %p171 = scmp.eq.s32.totalorder %s18, 1
      %p172 = por %p170, %p171
      %p173 = scmp.ne.s32.totalorder %s162, %s163
      %p174 = scmp.eq.s32.totalorder %s18, 0
      %p175 = por %p173, %p174
      %p176 = scmp.ne.s32.totalorder %s162, %s163
      %p177 = scmp.eq.s32.totalorder %s19, 1
      %p178 = por %p176, %p177
      %p180 = scmp.ne.s32.totalorder %s163, %s179
      %p181 = scmp.eq.s32.totalorder %s19, 0
      %p182 = por %p180, %p181
      %p183 = scmp.le.s32.totalorder 1, %s13
      %p184 = scmp.lt.s32.totalorder %s13, 3
      %p185 = pnand %p183, %p184
      %p186 = pneg %p185
      // Predicated region
      $region9: #{transformer_embedder.15} parent=5 // pred_check
        _
      $region10: #{transformer_embedder.15} parent=5 // pred_check_branch
        %188 = sbr.rel (%p185) target = $region12
      $region11: #{transformer_embedder.15} parent=5 // pred_region
        %s189 = ssub.s32 %s13, 1
        // Predicated region
        $region13: #{transformer_embedder.15} parent=11 // pred_check
          %p190 = pneg %p60
        $region14: #{transformer_embedder.15} parent=11 // pred_check_branch
          %192 = sbr.rel (%p190) target = $region16
        $region15: #{transformer_embedder.15} parent=11 // pred_region
          %194 = vsyncadd [#allocation3], 0
          %s195 = sshll.u32 %s1, 4
          %s196 = int_to_ptr.hbm [resolvable:$true] %s195
          %s197 = sshll.u32 [#allocation2], 4
          %s198 = int_to_ptr.vmem [resolvable:$true] %s197
          %203 = dma.hbm_to_vmem [thread:$0]  %s196, 1024, %s198, [#allocation3], 64, 64, 4
        $region16: #{transformer_embedder.15} parent=11 // pred_fallthru
          _
        // Predicated region
        $region17: #{transformer_embedder.15} parent=11 // pred_check
          %p204 = pneg %p81
        $region18: #{transformer_embedder.15} parent=11 // pred_check_branch
          %206 = sbr.rel (%p204) target = $region20
        $region19: #{transformer_embedder.15} parent=11 // pred_region
          _
        $region20: #{transformer_embedder.15} parent=11 // pred_fallthru
          _
        // Predicated region
        $region21: #{transformer_embedder.15} parent=11 // pred_check
          %p207 = pneg %p128
        $region22: #{transformer_embedder.15} parent=11 // pred_check_branch
          %209 = sbr.rel (%p207) target = $region24
        $region23: #{transformer_embedder.15} parent=11 // pred_region
          _
        $region24: #{transformer_embedder.15} parent=11 // pred_fallthru
          _
        // Predicated region
        $region25: #{transformer_embedder.15} parent=11 // pred_check
          %p210 = pneg %p149
        $region26: #{transformer_embedder.15} parent=11 // pred_check_branch
          %212 = sbr.rel (%p210) target = $region28
        $region27: #{transformer_embedder.15} parent=11 // pred_region
          _
        $region28: #{transformer_embedder.15} parent=11 // pred_fallthru
          _
      $region12: #{transformer_embedder.15} parent=5 // pred_fallthru
        _
      %p213 = scmp.lt.s32.totalorder %s13, 2
      // Predicated region
      $region29: #{transformer_embedder.15} parent=5 // pred_check
        %p214 = pneg %p213
      $region30: #{transformer_embedder.15} parent=5 // pred_check_branch
        %216 = sbr.rel (%p214) target = $region32
      $region31: #{transformer_embedder.15} parent=5 // pred_region
        // Predicated region
        $region33: #{transformer_embedder.15} parent=31 // pred_check
          %p217 = pneg %p33
        $region34: #{transformer_embedder.15} parent=31 // pred_check_branch
          %219 = sbr.rel (%p217) target = $region36
        $region35: #{transformer_embedder.15} parent=31 // pred_region
          %p220 = scmp.lt.s32.totalorder %s13, 1
          %s221 = scalar_select %p220, %s13, 1
          %s222 = smul.addr %s221, 4
          %s223 = scalar_lea.vmem %s0, %s222
        $region36: #{transformer_embedder.15} parent=31 // pred_fallthru
          _
        // Predicated region
        $region37: #{transformer_embedder.15} parent=31 // pred_check
          %p224 = pneg %p101
        $region38: #{transformer_embedder.15} parent=31 // pred_check_branch
          %226 = sbr.rel (%p224) target = $region40
        $region39: #{transformer_embedder.15} parent=31 // pred_region
          %p227 = scmp.lt.s32.totalorder %s13, 1
          %s228 = scalar_select %p227, %s13, 1
          %s229 = smul.addr %s228, 4
          %s230 = scalar_lea.vmem %s3, %s229
        $region40: #{transformer_embedder.15} parent=31 // pred_fallthru
          _
      $region32: #{transformer_embedder.15} parent=5 // pred_fallthru
        _
      %p231 = scmp.le.s32.totalorder 1, %s13
      %p232 = scmp.lt.s32.totalorder %s13, 3
      %p233 = pnand %p231, %p232
      %p234 = pneg %p233
      // Predicated region
      $region41: #{transformer_embedder.15} parent=5 // pred_check
        _
      $region42: #{transformer_embedder.15} parent=5 // pred_check_branch
        %236 = sbr.rel (%p233) target = $region44
      $region43: #{transformer_embedder.15} parent=5 // pred_region
        %s237 = ssub.s32 %s13, 1
        // Predicated region
        $region45: #{transformer_embedder.15} parent=43 // pred_check
          %p238 = pneg %p60
        $region46: #{transformer_embedder.15} parent=43 // pred_check_branch
          %240 = sbr.rel (%p238) target = $region48
        $region47: #{transformer_embedder.15} parent=43 // pred_region
          %242 = dma.done [#allocation3], 1024
        $region48: #{transformer_embedder.15} parent=43 // pred_fallthru
          _
        %p243 = scmp.lt.s32.totalorder %s18, 1
        %s244 = scalar_select %p243, %s18, 1
        %s245 = smul.addr %s244, 4
        %s246 = scalar_lea.vmem %s0, %s245
        %p247 = pneg %p39
        %p248 = pneg %p36
        %p249 = pneg %p60
        %p250 = pneg %p57
        %p251 = pneg %p81
        %p252 = pneg %p78
        %p253 = scmp.lt.s32.totalorder %s18, 1
        %s254 = scalar_select %p253, %s18, 1
        %s255 = smul.addr %s254, 4
        %s256 = scalar_lea.vmem %s3, %s255
        %p257 = pneg %p107
        %p258 = pneg %p104
        %p259 = pneg %p128
        %p260 = pneg %p125
        %p261 = pneg %p149
        %p262 = pneg %p146
        %p263 = pneg %p175
        %p264 = pneg %p172
        %p265 = scmp.lt.s32.totalorder %s18, 1
        %s266 = scalar_select %p265, %s18, 1
        %s267 = smul.addr %s266, 4
        %s268 = scalar_lea.vmem %s6, %s267
        %p269 = scmp.lt.s32.totalorder %s18, 1
        %s270 = scalar_select %p269, %s18, 1
        %s271 = smul.addr %s270, 4
        %s272 = scalar_lea.vmem %s0, %s271
        %p273 = scmp.lt.s32.totalorder %s18, 1
        %s274 = scalar_select %p273, %s18, 1
        %s275 = smul.addr %s274, 4
        %s276 = scalar_lea.vmem %s3, %s275
        %p277 = scmp.lt.s32.totalorder %s18, 1
        %s278 = scalar_select %p277, %s18, 1
        %s279 = smul.addr %s278, 4
        %s280 = scalar_lea.vmem %s6, %s279
        %v281 = vld [vmem:[%s272] sm:$0xf]
        %v282 = vld [vmem:[#allocation2] sm:$0xf]
        %v283 = vld [vmem:[#allocation2 + $0x4] sm:$0xf]
        %v284 = vld [vmem:[#allocation2 + $0x8] sm:$0xf]
        %v285 = vld [vmem:[#allocation2 + $0xc] sm:$0xf]
        %v286 = vld [vmem:[#allocation2 + $0x10] sm:$0xf]
        %v287 = vld [vmem:[#allocation2 + $0x14] sm:$0xf]
        %v288 = vld [vmem:[#allocation2 + $0x18] sm:$0xf]
        %v289 = vld [vmem:[#allocation2 + $0x1c] sm:$0xf]
        %v290 = vld [vmem:[#allocation2 + $0x20] sm:$0xf]
        %v291 = vld [vmem:[#allocation2 + $0x24] sm:$0xf]
        %v292 = vld [vmem:[#allocation2 + $0x28] sm:$0xf]
        %v293 = vld [vmem:[#allocation2 + $0x2c] sm:$0xf]
        %v294 = vld [vmem:[#allocation2 + $0x30] sm:$0xf]
        %v295 = vld [vmem:[#allocation2 + $0x34] sm:$0xf]
        %v296 = vld [vmem:[#allocation2 + $0x38] sm:$0xf]
        %v297 = vld [vmem:[#allocation2 + $0x3c] sm:$0xf]
        %v298 = vld [vmem:[%s2] sm:$0x1]
        %v299 = vunpack.c.l.bf16 %v298
        %v300 = vperm.slane %v299, 0
        %v317 = vunpack.c.l.b16 %v282
        %v318 = vunpack.c.l.b16 %v283
        %v319 = vunpack.c.l.b16 %v284
        %v320 = vunpack.c.l.b16 %v285
        %v321 = vunpack.c.l.b16 %v286
        %v322 = vunpack.c.l.b16 %v287
        %v323 = vunpack.c.l.b16 %v288
        %v324 = vunpack.c.l.b16 %v289
        %v325 = vunpack.c.l.b16 %v290
        %v326 = vunpack.c.l.b16 %v291
        %v327 = vunpack.c.l.b16 %v292
        %v328 = vunpack.c.l.b16 %v293
        %v329 = vunpack.c.l.b16 %v294
        %v330 = vunpack.c.l.b16 %v295
        %v331 = vunpack.c.l.b16 %v296
        %v332 = vunpack.c.l.b16 %v297
        %v333 = vpack.c.b16 %v318, %v317
        %v334 = vpack.c.b16 %v320, %v319
        %v335 = vpack.c.b16 %v322, %v321
        %v336 = vpack.c.b16 %v324, %v323
        %v337 = vpack.c.b16 %v326, %v325
        %v338 = vpack.c.b16 %v328, %v327
        %v339 = vpack.c.b16 %v330, %v329
        %v340 = vpack.c.b16 %v332, %v331
        %349 = vmatpush.bf16.msra.mxu0 %v340
        %350 = vmatpush.bf16.msra.mxu0 %v339
        %351 = vmatpush.bf16.msra.mxu0 %v338
        %352 = vmatpush.bf16.msra.mxu0 %v337
        %353 = vmatpush.bf16.msra.mxu0 %v336
        %354 = vmatpush.bf16.msra.mxu0 %v335
        %355 = vmatpush.bf16.msra.mxu0 %v334
        %356 = vmatpush.bf16.msra.mxu0 %v333
        %357 = vmatmul.bf16.gmra.mxu0 %v281
        %v358 = vpop.f32.mrf.mxu0
        %v359 = vadd.f32 %v300, %v358
        %v360 = vpop.f32.mrf.mxu0
        %361 = vdwg.mxu0
        %v362 = vld [vmem:[%s276] sm:$0xf]
        %v363 = vunpack.c.l.bf16 %v362
        %v364 = vadd.f32 %v359, %v363
        %365 = vadd.xlane.f32.xlu0 %v364
        %v366 = vpop.xlane.xlu0 %365
        %v367 = vrcp.pop 128.0
        %v368 = vmul.f32 128.0, %v367
        %v369 = vsub.f32 1.0, %v368
        %v370 = vmul.f32 %v367, %v369
        %v371 = vadd.f32 %v367, %v370
        %vm372 = vweird.f32 %v367
        %v373 = vsel %vm372, %v367, %v371
        %v374 = vmul.f32 %v366, %v373
        %v375 = vsub.f32 %v364, %v374
        %v376 = vmul.f32 %v375, %v375
        %377 = vadd.xlane.f32.xlu0 %v376
        %v378 = vpop.xlane.xlu0 %377
        %v379 = vmul.f32 %v378, %v373
        %v380 = vadd.f32 %v379, 1e-05
        %v381 = vrsqrt.pop %v380
        %v382 = vmul.f32 %v381, %v380
        %v383 = vmul.f32 %v382, %v381
        %v384 = vmul.f32 0.5, %v383
        %v385 = vsub.f32 1.5, %v384
        %v386 = vmul.f32 %v381, %v385
        %vm387 = vweird.f32 %v380
        %vm388 = vweird.f32 %v381
        %vm389 = vmor %vm387, %vm388
        %v390 = vsel %vm389, %v381, %v386
        %v391 = vmul.f32 %v375, %v390
        %v392 = vld [vmem:[%s4] sm:$0x1]
        %v393 = vunpack.c.l.bf16 %v392
        %v394 = vperm.slane %v393, 0
        %v395 = vmul.f32 %v391, %v394
        %v396 = vld [vmem:[%s5] sm:$0x1]
        %v397 = vunpack.c.l.bf16 %v396
        %v398 = vperm.slane %v397, 0
        %v399 = vadd.f32 %v395, %v398
        %v400 = vpack.c.bf16 %v399, %v399
        %401 = vst [vmem:[%s280] sm:$0xf] %v400
        %p402 = scmp.lt.s32.totalorder %s18, 1
        %s403 = scalar_select %p402, %s18, 1
        %s404 = smul.addr %s403, 4
        %s405 = scalar_lea.vmem %s6, %s404
        // Predicated region
        $region49: #{transformer_embedder.15} parent=43 // pred_check
          %p406 = pneg %p172
        $region50: #{transformer_embedder.15} parent=43 // pred_check_branch
          %408 = sbr.rel (%p406) target = $region52
        $region51: #{transformer_embedder.15} parent=43 // pred_region
          _
        $region52: #{transformer_embedder.15} parent=43 // pred_fallthru
          _
      $region44: #{transformer_embedder.15} parent=5 // pred_fallthru
        _
      %p409 = scmp.le.s32.totalorder 2, %s13
      // Predicated region
      $region53: #{transformer_embedder.15} parent=5 // pred_check
        %p410 = pneg %p409
      $region54: #{transformer_embedder.15} parent=5 // pred_check_branch
        %412 = sbr.rel (%p410) target = $region56
      $region55: #{transformer_embedder.15} parent=5 // pred_region
        %s413 = ssub.s32 %s13, 2
        // Predicated region
        $region57: #{transformer_embedder.15} parent=55 // pred_check
          %p414 = pneg %p178
        $region58: #{transformer_embedder.15} parent=55 // pred_check_branch
          %416 = sbr.rel (%p414) target = $region60
        $region59: #{transformer_embedder.15} parent=55 // pred_region
          %p417 = scmp.lt.s32.totalorder %s19, 1
          %s418 = scalar_select %p417, %s19, 1
          %s419 = smul.addr %s418, 4
          %s420 = scalar_lea.vmem %s6, %s419
        $region60: #{transformer_embedder.15} parent=55 // pred_fallthru
          _
      $region56: #{transformer_embedder.15} parent=5 // pred_fallthru
        _
    $region6: #{transformer_embedder.15} parent=1 // loop_footer
      %s17 = sadd.s32 1, %s13
    $region7: #{transformer_embedder.15} parent=1 // loop_footer_branch
      %12 = sbr.rel target = $region3
    $region8: #{transformer_embedder.15} parent=1 // loop_exit
      _
    %421 = vsyncpa [#allocation3], 1
    %s422 = scalar_lea.sflag [#allocation3], 1
    %423 = vsyncpa %s422, 1

// kernel: transformer_embedder.16
$region0: #{transformer_embedder.16}
  #allocation0 [shape = 'u32[]', space=smem, size = 0x4, offset = 0x4, fixed_abs, tag = 'smem constant byte address 0x4 - core index']
  #allocation1 [shape = 'u32[72,128]{1,0:T(1,128)}', space=vmem, size = 0x9000, scoped, tag = 'internal scratch']
  %s0 = inlined_call_operand.vmem [shape: bf16[16,128], index: 0, kind: input, shape index: {}]
  %s1 = inlined_call_operand.hbm [shape: bf16[128,256], index: 1, kind: input, shape index: {}]
  %s2 = inlined_call_operand.vmem [shape: bf16[1,256], index: 2, kind: input, shape index: {}]
  %s3 = inlined_call_operand.vmem [shape: bf16[16,256], index: 3, kind: output, shape index: {}]
  %s4 = sld [smem:[#allocation0]]
  $region49: #{transformer_embedder.16} parent=0
    _
  %s6 = ssub.s32 1, %s4
  %s7 = scalar_select 0, %s6, %s4
  $region1: #{transformer_embedder.16} parent=0
    #allocation2 [shape = 'u8[65536]{0}', space=vmem, size = 0x10000, scoped, tag = 'input window, operand 1, single buffered']
    #allocation3 [shape = 's32[2]{0}', space=sflag, size = 0x8, scoped, tag = 'scoped memory for transformer_embedder.16']
    %8 = vsyncpa [#allocation3], 0
    loop: start=0, step=1, limit=4
    $region2: #{transformer_embedder.16} parent=1 // loop_pre_header
      _
    $region3: #{transformer_embedder.16} parent=1 // loop_header
      %s10 = sphi 0, %s14
      %p11 = scmp.ge.s32.totalorder %s10, 4
      %s17 = sphi 0, %s29
      %s18 = sphi 0, %s25
      %s19 = sphi 0, %s17
      %s20 = sphi 0, %s18
      %s21 = sphi 0, %s19
      %s22 = sphi 0, %s20
      %s32 = sphi 0, %s34
      %s35 = sphi 0, %s32
      %s36 = sphi 0, %s35
      %s52 = sphi 0, %s36
      %s58 = sphi 0, %s60
      %s61 = sphi 0, %s58
      %s62 = sphi 0, %s61
      %s78 = sphi 0, %s62
      %s84 = sphi 0, %s86
      %s87 = sphi 0, %s84
      %s88 = sphi 0, %s87
      %s104 = sphi 0, %s88
      %s112 = sphi 0, %s114
      %s115 = sphi 0, %s112
      %s116 = sphi 0, %s115
      %s132 = sphi 0, %s116
    $region4: #{transformer_embedder.16} parent=1 // loop_header_branch
      %13 = sbr.rel (%p11) target = $region8
    $region5: #{transformer_embedder.16} parent=1 // loop_body
      %s15 = ssub.s32 %s10, 1
      %s16 = ssub.s32 %s10, 2
      %s23 = sadd.s32 1, %s18
      %p24 = scmp.ge.s32.totalorder %s23, 1
      %s25 = scalar_select %p24, 0, %s23
      %s26 = sadd.s32 1, %s17
      %s27 = scalar_select %p24, %s26, %s17
      %p28 = scmp.ge.s32.totalorder %s27, 2
      %s29 = scalar_select %p28, 0, %s27
      %s30 = ssub.s32 %s17, %s29
      %p31 = scmp.eq.s32.totalorder %s30, 0
      %s33 = sadd.s32 %s32, 1
      %s34 = scalar_select %p31, %s32, %s33
      %p37 = pneg %p31
      %p38 = scmp.eq.s32.totalorder %s10, 1
      %p39 = por %p37, %p38
      %p40 = scmp.ne.s32.totalorder %s32, %s35
      %p41 = scmp.eq.s32.totalorder %s10, 0
      %p42 = por %p40, %p41
      %p43 = scmp.ne.s32.totalorder %s32, %s35
      %p44 = scmp.eq.s32.totalorder %s15, 1
      %p45 = por %p43, %p44
      %p46 = scmp.ne.s32.totalorder %s35, %s36
      %p47 = scmp.eq.s32.totalorder %s15, 0
      %p48 = por %p46, %p47
      %p49 = scmp.ne.s32.totalorder %s35, %s36
      %p50 = scmp.eq.s32.totalorder %s16, 1
      %p51 = por %p49, %p50
      %p53 = scmp.ne.s32.totalorder %s36, %s52
      %p54 = scmp.eq.s32.totalorder %s16, 0
      %p55 = por %p53, %p54
      %s56 = ssub.s32 %s18, %s25
      %p57 = scmp.eq.s32.totalorder %s56, 0
      %s59 = sadd.s32 %s58, 1
      %s60 = scalar_select %p57, %s58, %s59
      %p63 = pneg %p57
      %p64 = scmp.eq.s32.totalorder %s10, 1
      %p65 = por %p63, %p64
      %p66 = scmp.ne.s32.totalorder %s58, %s61
      %p67 = scmp.eq.s32.totalorder %s10, 0
      %p68 = por %p66, %p67
      %p69 = scmp.ne.s32.totalorder %s58, %s61
      %p70 = scmp.eq.s32.totalorder %s15, 1
      %p71 = por %p69, %p70
      %p72 = scmp.ne.s32.totalorder %s61, %s62
      %p73 = scmp.eq.s32.totalorder %s15, 0
      %p74 = por %p72, %p73
      %p75 = scmp.ne.s32.totalorder %s61, %s62
      %p76 = scmp.eq.s32.totalorder %s16, 1
      %p77 = por %p75, %p76
      %p79 = scmp.ne.s32.totalorder %s62, %s78
      %p80 = scmp.eq.s32.totalorder %s16, 0
      %p81 = por %p79, %p80
      %s82 = ssub.s32 %s18, %s25
      %p83 = scmp.eq.s32.totalorder %s82, 0
      %s85 = sadd.s32 %s84, 1
      %s86 = scalar_select %p83, %s84, %s85
      %p89 = pneg %p83
      %p90 = scmp.eq.s32.totalorder %s10, 1
      %p91 = por %p89, %p90
      %p92 = scmp.ne.s32.totalorder %s84, %s87
      %p93 = scmp.eq.s32.totalorder %s10, 0
      %p94 = por %p92, %p93
      %p95 = scmp.ne.s32.totalorder %s84, %s87
      %p96 = scmp.eq.s32.totalorder %s15, 1
      %p97 = por %p95, %p96
      %p98 = scmp.ne.s32.totalorder %s87, %s88
      %p99 = scmp.eq.s32.totalorder %s15, 0
      %p100 = por %p98, %p99
      %p101 = scmp.ne.s32.totalorder %s87, %s88
      %p102 = scmp.eq.s32.totalorder %s16, 1
      %p103 = por %p101, %p102
      %p105 = scmp.ne.s32.totalorder %s88, %s104
      %p106 = scmp.eq.s32.totalorder %s16, 0
      %p107 = por %p105, %p106
      %s108 = ssub.s32 %s17, %s29
      %s109 = ssub.s32 %s18, %s25
      %s110 = sor.u32 %s108, %s109
      %p111 = scmp.eq.s32.totalorder %s110, 0
      %s113 = sadd.s32 %s112, 1
      %s114 = scalar_select %p111, %s112, %s113
      %p117 = pneg %p111
      %p118 = scmp.eq.s32.totalorder %s10, 1
      %p119 = por %p117, %p118
      %p120 = scmp.ne.s32.totalorder %s112, %s115
      %p121 = scmp.eq.s32.totalorder %s10, 0
      %p122 = por %p120, %p121
      %p123 = scmp.ne.s32.totalorder %s112, %s115
      %p124 = scmp.eq.s32.totalorder %s15, 1
      %p125 = por %p123, %p124
      %p126 = scmp.ne.s32.totalorder %s115, %s116
      %p127 = scmp.eq.s32.totalorder %s15, 0
      %p128 = por %p126, %p127
      %p129 = scmp.ne.s32.totalorder %s115, %s116
      %p130 = scmp.eq.s32.totalorder %s16, 1
      %p131 = por %p129, %p130
      %p133 = scmp.ne.s32.totalorder %s116, %s132
      %p134 = scmp.eq.s32.totalorder %s16, 0
      %p135 = por %p133, %p134
      %p136 = scmp.le.s32.totalorder 1, %s10
      %p137 = scmp.lt.s32.totalorder %s10, 3
      %p138 = pnand %p136, %p137
      %p139 = pneg %p138
      // Predicated region
      $region9: #{transformer_embedder.16} parent=5 // pred_check
        _
      $region10: #{transformer_embedder.16} parent=5 // pred_check_branch
        %141 = sbr.rel (%p138) target = $region12
      $region11: #{transformer_embedder.16} parent=5 // pred_region
        %s142 = ssub.s32 %s10, 1
        // Predicated region
        $region13: #{transformer_embedder.16} parent=11 // pred_check
          %p143 = pneg %p74
        $region14: #{transformer_embedder.16} parent=11 // pred_check_branch
          %145 = sbr.rel (%p143) target = $region16
        $region15: #{transformer_embedder.16} parent=11 // pred_region
          %s146 = smul.u32 2, %s20
          %148 = vsyncadd [#allocation3], 0
          %s149 = smul.addr %s146, 4
          %s150 = scalar_lea.hbm %s1, %s149
          %s151 = sshll.u32 %s150, 4
          %s152 = int_to_ptr.hbm [resolvable:$true] %s151
          %s153 = sshll.u32 [#allocation2], 4
          %s154 = int_to_ptr.vmem [resolvable:$true] %s153
          %159 = dma.hbm_to_vmem [thread:$0]  %s152, 2048, %s154, [#allocation3], 128, 128, 8
        $region16: #{transformer_embedder.16} parent=11 // pred_fallthru
          _
        // Predicated region
        $region17: #{transformer_embedder.16} parent=11 // pred_check
          %p160 = pneg %p100
        $region18: #{transformer_embedder.16} parent=11 // pred_check_branch
          %162 = sbr.rel (%p160) target = $region20
        $region19: #{transformer_embedder.16} parent=11 // pred_region
          %s163 = smul.u32 2, %s20
          %p164 = scmp.lt.s32.totalorder %s163, 1
          %s165 = scalar_select %p164, %s163, 1
          %s166 = scalar_lea.vmem %s2, %s165
          %s167 = smul.u32 2, %s20
        $region20: #{transformer_embedder.16} parent=11 // pred_fallthru
          _
      $region12: #{transformer_embedder.16} parent=5 // pred_fallthru
        _
      %p168 = scmp.lt.s32.totalorder %s10, 2
      // Predicated region
      $region21: #{transformer_embedder.16} parent=5 // pred_check
        %p169 = pneg %p168
      $region22: #{transformer_embedder.16} parent=5 // pred_check_branch
        %171 = sbr.rel (%p169) target = $region24
      $region23: #{transformer_embedder.16} parent=5 // pred_region
        // Predicated region
        $region25: #{transformer_embedder.16} parent=23 // pred_check
          %p172 = pneg %p42
        $region26: #{transformer_embedder.16} parent=23 // pred_check_branch
          %174 = sbr.rel (%p172) target = $region28
        $region27: #{transformer_embedder.16} parent=23 // pred_region
          %p175 = scmp.lt.s32.totalorder %s17, 1
          %s176 = scalar_select %p175, %s17, 1
          %s177 = smul.addr %s176, 4
          %s178 = scalar_lea.vmem %s0, %s177
        $region28: #{transformer_embedder.16} parent=23 // pred_fallthru
          _
      $region24: #{transformer_embedder.16} parent=5 // pred_fallthru
        _
      %p179 = scmp.le.s32.totalorder 1, %s10
      %p180 = scmp.lt.s32.totalorder %s10, 3
      %p181 = pnand %p179, %p180
      %p182 = pneg %p181
      // Predicated region
      $region29: #{transformer_embedder.16} parent=5 // pred_check
        _
      $region30: #{transformer_embedder.16} parent=5 // pred_check_branch
        %184 = sbr.rel (%p181) target = $region32
      $region31: #{transformer_embedder.16} parent=5 // pred_region
        %s185 = ssub.s32 %s10, 1
        // Predicated region
        $region33: #{transformer_embedder.16} parent=31 // pred_check
          %p186 = pneg %p74
        $region34: #{transformer_embedder.16} parent=31 // pred_check_branch
          %188 = sbr.rel (%p186) target = $region36
        $region35: #{transformer_embedder.16} parent=31 // pred_region
          %190 = dma.done [#allocation3], 2048
        $region36: #{transformer_embedder.16} parent=31 // pred_fallthru
          _
        %p191 = scmp.lt.s32.totalorder %s19, 1
        %s192 = scalar_select %p191, %s19, 1
        %s193 = smul.addr %s192, 4
        %s194 = scalar_lea.vmem %s0, %s193
        %p195 = pneg %p48
        %p196 = pneg %p45
        %p197 = pneg %p74
        %p198 = pneg %p71
        %s199 = smul.u32 2, %s20
        %p200 = scmp.lt.s32.totalorder %s199, 1
        %s201 = scalar_select %p200, %s199, 1
        %s202 = scalar_lea.vmem %s2, %s201
        %p203 = pneg %p100
        %p204 = pneg %p97
        %p205 = pneg %p128
        %p206 = pneg %p125
        %s207 = smul.u32 2, %s20
        %p208 = scmp.lt.s32.totalorder %s19, 1
        %s209 = scalar_select %p208, %s19, 1
        %p210 = scmp.lt.s32.totalorder %s207, 1
        %s211 = scalar_select %p210, %s207, 1
        %s212 = smul.addr %s209, 2
        %s213 = sadd.s32 %s211, %s212
        %s214 = smul.addr %s213, 4
        %s215 = scalar_lea.vmem %s3, %s214
        %p216 = scmp.lt.s32.totalorder %s19, 1
        %s217 = scalar_select %p216, %s19, 1
        %s218 = smul.addr %s217, 4
        %s219 = scalar_lea.vmem %s0, %s218
        %s220 = smul.u32 2, %s20
        %s221 = smul.u32 2, %s20
        %p222 = scmp.lt.s32.totalorder %s221, 1
        %s223 = scalar_select %p222, %s221, 1
        %s224 = scalar_lea.vmem %s2, %s223
        %s225 = smul.u32 2, %s20
        %s226 = smul.u32 2, %s20
        %p227 = scmp.lt.s32.totalorder %s19, 1
        %s228 = scalar_select %p227, %s19, 1
        %p229 = scmp.lt.s32.totalorder %s226, 1
        %s230 = scalar_select %p229, %s226, 1
        %s231 = smul.addr %s228, 2
        %s232 = sadd.s32 %s230, %s231
        %s233 = smul.addr %s232, 4
        %s234 = scalar_lea.vmem %s3, %s233
        %s235 = smul.u32 2, %s20
        %v236 = vld [vmem:[%s219] sm:$0xf]
        %v237 = vld [vmem:[#allocation2] sm:$0xff]
        %v238 = vld [vmem:[#allocation2 + $0x8] sm:$0xff]
        %v239 = vld [vmem:[#allocation2 + $0x10] sm:$0xff]
        %v240 = vld [vmem:[#allocation2 + $0x18] sm:$0xff]
        %v241 = vld [vmem:[#allocation2 + $0x20] sm:$0xff]
        %v242 = vld [vmem:[#allocation2 + $0x28] sm:$0xff]
        %v243 = vld [vmem:[#allocation2 + $0x30] sm:$0xff]
        %v244 = vld [vmem:[#allocation2 + $0x38] sm:$0xff]
        %v245 = vld [vmem:[#allocation2 + $0x40] sm:$0xff]
        %v246 = vld [vmem:[#allocation2 + $0x48] sm:$0xff]
        %v247 = vld [vmem:[#allocation2 + $0x50] sm:$0xff]
        %v248 = vld [vmem:[#allocation2 + $0x58] sm:$0xff]
        %v249 = vld [vmem:[#allocation2 + $0x60] sm:$0xff]
        %v250 = vld [vmem:[#allocation2 + $0x68] sm:$0xff]
        %v251 = vld [vmem:[#allocation2 + $0x70] sm:$0xff]
        %v252 = vld [vmem:[#allocation2 + $0x78] sm:$0xff]
        %v253 = vld [vmem:[%s224] sm:$0x3]
        %v254 = vunpack.c.l.bf16 %v253
        %v256 = vperm.slane %v254, 0
        %v257 = vperm.slane %v254, 2
        %v260 = vperm.slane %v256, 0
        %v261 = vperm.slane %v257, 0
        %v278 = vunpack.c.l.b16 %v237
        %v279 = vunpack.c.h.b16 %v237
        %v280 = vunpack.c.l.b16 %v238
        %v281 = vunpack.c.h.b16 %v238
        %v282 = vunpack.c.l.b16 %v239
        %v283 = vunpack.c.h.b16 %v239
        %v284 = vunpack.c.l.b16 %v240
        %v285 = vunpack.c.h.b16 %v240
        %v286 = vunpack.c.l.b16 %v241
        %v287 = vunpack.c.h.b16 %v241
        %v288 = vunpack.c.l.b16 %v242
        %v289 = vunpack.c.h.b16 %v242
        %v290 = vunpack.c.l.b16 %v243
        %v291 = vunpack.c.h.b16 %v243
        %v292 = vunpack.c.l.b16 %v244
        %v293 = vunpack.c.h.b16 %v244
        %v294 = vunpack.c.l.b16 %v245
        %v295 = vunpack.c.h.b16 %v245
        %v296 = vunpack.c.l.b16 %v246
        %v297 = vunpack.c.h.b16 %v246
        %v298 = vunpack.c.l.b16 %v247
        %v299 = vunpack.c.h.b16 %v247
        %v300 = vunpack.c.l.b16 %v248
        %v301 = vunpack.c.h.b16 %v248
        %v302 = vunpack.c.l.b16 %v249
        %v303 = vunpack.c.h.b16 %v249
        %v304 = vunpack.c.l.b16 %v250
        %v305 = vunpack.c.h.b16 %v250
        %v306 = vunpack.c.l.b16 %v251
        %v307 = vunpack.c.h.b16 %v251
        %v308 = vunpack.c.l.b16 %v252
        %v309 = vunpack.c.h.b16 %v252
        %v310 = vpack.c.b16 %v280, %v278
        %v311 = vpack.c.b16 %v281, %v279
        %v312 = vpack.c.b16 %v284, %v282
        %v313 = vpack.c.b16 %v285, %v283
        %v314 = vpack.c.b16 %v288, %v286
        %v315 = vpack.c.b16 %v289, %v287
        %v316 = vpack.c.b16 %v292, %v290
        %v317 = vpack.c.b16 %v293, %v291
        %v318 = vpack.c.b16 %v296, %v294
        %v319 = vpack.c.b16 %v297, %v295
        %v320 = vpack.c.b16 %v300, %v298
        %v321 = vpack.c.b16 %v301, %v299
        %v322 = vpack.c.b16 %v304, %v302
        %v323 = vpack.c.b16 %v305, %v303
        %v324 = vpack.c.b16 %v308, %v306
        %v325 = vpack.c.b16 %v309, %v307
        %342 = vmatpush.bf16.msra.mxu0 %v324
        %343 = vmatpush.bf16.msra.mxu0 %v322
        %344 = vmatpush.bf16.msra.mxu0 %v320
        %345 = vmatpush.bf16.msra.mxu0 %v318
        %346 = vmatpush.bf16.msra.mxu0 %v316
        %347 = vmatpush.bf16.msra.mxu0 %v314
        %348 = vmatpush.bf16.msra.mxu0 %v312
        %349 = vmatpush.bf16.msra.mxu0 %v310
        %350 = vmatmul.bf16.gmra.mxu0 %v236
        %v351 = vpop.f32.mrf.mxu0
        %v352 = vadd.f32 %v260, %v351
        %v353 = vpop.f32.mrf.mxu0
        %354 = vdwg.mxu0
        %355 = vmatpush.bf16.msra.mxu0 %v325
        %356 = vmatpush.bf16.msra.mxu0 %v323
        %357 = vmatpush.bf16.msra.mxu0 %v321
        %358 = vmatpush.bf16.msra.mxu0 %v319
        %359 = vmatpush.bf16.msra.mxu0 %v317
        %360 = vmatpush.bf16.msra.mxu0 %v315
        %361 = vmatpush.bf16.msra.mxu0 %v313
        %362 = vmatpush.bf16.msra.mxu0 %v311
        %363 = vmatmul.bf16.gmra.mxu0 %v236
        %v364 = vpop.f32.mrf.mxu0
        %v365 = vadd.f32 %v261, %v364
        %v366 = vpop.f32.mrf.mxu0
        %367 = vdwg.mxu0
        %v368 = vmax.f32 %v352, 0.0
        %v369 = vmax.f32 %v365, 0.0
        %v370 = vpack.c.bf16 %v369, %v368
        %371 = vst [vmem:[%s234] sm:$0xff] %v370
        %s372 = smul.u32 2, %s20
        %p373 = scmp.lt.s32.totalorder %s19, 1
        %s374 = scalar_select %p373, %s19, 1
        %p375 = scmp.lt.s32.totalorder %s372, 1
        %s376 = scalar_select %p375, %s372, 1
        %s377 = smul.addr %s374, 2
        %s378 = sadd.s32 %s376, %s377
        %s379 = smul.addr %s378, 4
        %s380 = scalar_lea.vmem %s3, %s379
        // Predicated region
        $region37: #{transformer_embedder.16} parent=31 // pred_check
          %p381 = pneg %p125
        $region38: #{transformer_embedder.16} parent=31 // pred_check_branch
          %383 = sbr.rel (%p381) target = $region40
        $region39: #{transformer_embedder.16} parent=31 // pred_region
          %s384 = smul.u32 2, %s20
        $region40: #{transformer_embedder.16} parent=31 // pred_fallthru
          _
      $region32: #{transformer_embedder.16} parent=5 // pred_fallthru
        _
      %p385 = scmp.le.s32.totalorder 2, %s10
      // Predicated region
      $region41: #{transformer_embedder.16} parent=5 // pred_check
        %p386 = pneg %p385
      $region42: #{transformer_embedder.16} parent=5 // pred_check_branch
        %388 = sbr.rel (%p386) target = $region44
      $region43: #{transformer_embedder.16} parent=5 // pred_region
        %s389 = ssub.s32 %s10, 2
        // Predicated region
        $region45: #{transformer_embedder.16} parent=43 // pred_check
          %p390 = pneg %p131
        $region46: #{transformer_embedder.16} parent=43 // pred_check_branch
          %392 = sbr.rel (%p390) target = $region48
        $region47: #{transformer_embedder.16} parent=43 // pred_region
          %s393 = smul.u32 2, %s22
          %p394 = scmp.lt.s32.totalorder %s21, 1
          %s395 = scalar_select %p394, %s21, 1
          %p396 = scmp.lt.s32.totalorder %s393, 1
          %s397 = scalar_select %p396, %s393, 1
          %s398 = smul.addr %s395, 2
          %s399 = sadd.s32 %s397, %s398
          %s400 = smul.addr %s399, 4
          %s401 = scalar_lea.vmem %s3, %s400
        $region48: #{transformer_embedder.16} parent=43 // pred_fallthru
          _
      $region44: #{transformer_embedder.16} parent=5 // pred_fallthru
        _
    $region6: #{transformer_embedder.16} parent=1 // loop_footer
      %s14 = sadd.s32 1, %s10
    $region7: #{transformer_embedder.16} parent=1 // loop_footer_branch
      %9 = sbr.rel target = $region3
    $region8: #{transformer_embedder.16} parent=1 // loop_exit
      _
    %402 = vsyncpa [#allocation3], 1
    %s403 = scalar_lea.sflag [#allocation3], 1
    %404 = vsyncpa %s403, 1

// kernel: transformer_embedder.14
$region0: #{transformer_embedder.14}
  #allocation0 [shape = 'u32[]', space=smem, size = 0x4, offset = 0x4, fixed_abs, tag = 'smem constant byte address 0x4 - core index']
  #allocation1 [shape = 'u32[72,128]{1,0:T(1,128)}', space=vmem, size = 0x9000, scoped, tag = 'internal scratch']
  #allocation2 [shape = 'f32[4,8,1]{2,1,0:T(8,128)}', space=vmem, size = 0x4000, scoped, tag = 'scratch operand']
  #allocation3 [shape = 'f32[4,8,1]{2,1,0:T(8,128)}', space=vmem, size = 0x4000, scoped, tag = 'scratch operand']
  #allocation4 [shape = 'f32[4,8,32]{2,1,0:T(8,128)}', space=vmem, size = 0x4000, scoped, tag = 'scratch operand']
  %s0 = inlined_call_operand.vmem [shape: bf16[2,8,384], index: 0, kind: input, shape index: {}, may-alias: {0,1,2}]
  %s1 = inlined_call_operand.vmem [shape: bf16[2,8,384], index: 1, kind: input, shape index: {}, may-alias: {0,1,2}]
  %s2 = inlined_call_operand.vmem [shape: bf16[2,8,384], index: 2, kind: input, shape index: {}, may-alias: {0,1,2}]
  %s3 = inlined_call_operand.vmem [shape: bf16[2,8,128], index: 3, kind: output, shape index: {}]
  %s4 = sld [smem:[#allocation0]]
  $region53: #{transformer_embedder.14} parent=0
    _
  %s6 = ssub.s32 1, %s4
  %s7 = scalar_select 0, %s6, %s4
  loop: start=0, step=1, limit=4
  $region2: #{transformer_embedder.14} parent=0 // loop_pre_header
    _
  $region3: #{transformer_embedder.14} parent=0 // loop_header
    %s9 = sphi 0, %s13
    %p10 = scmp.ge.s32.totalorder %s9, 4
    %s16 = sphi 0, %s42
    %s17 = sphi 0, %s38
    %s18 = sphi 0, %s34
    %s19 = sphi 0, %s30
    %s20 = sphi 0, %s16
    %s21 = sphi 0, %s17
    %s22 = sphi 0, %s18
    %s23 = sphi 0, %s19
    %s24 = sphi 0, %s20
    %s25 = sphi 0, %s21
    %s26 = sphi 0, %s22
    %s27 = sphi 0, %s23
    %s49 = sphi 0, %s51
    %s52 = sphi 0, %s49
    %s53 = sphi 0, %s52
    %s69 = sphi 0, %s53
    %s81 = sphi 0, %s83
    %s84 = sphi 0, %s81
    %s85 = sphi 0, %s84
    %s101 = sphi 0, %s85
    %s113 = sphi 0, %s115
    %s116 = sphi 0, %s113
    %s117 = sphi 0, %s116
    %s133 = sphi 0, %s117
    %s143 = sphi 0, %s145
    %s146 = sphi 0, %s143
    %s147 = sphi 0, %s146
    %s163 = sphi 0, %s147
  $region4: #{transformer_embedder.14} parent=0 // loop_header_branch
    %12 = sbr.rel (%p10) target = $region8
  $region5: #{transformer_embedder.14} parent=0 // loop_body
    %s14 = ssub.s32 %s9, 1
    %s15 = ssub.s32 %s9, 2
    %s28 = sadd.s32 1, %s19
    %p29 = scmp.ge.s32.totalorder %s28, 1
    %s30 = scalar_select %p29, 0, %s28
    %s31 = sadd.s32 1, %s18
    %s32 = scalar_select %p29, %s31, %s18
    %p33 = scmp.ge.s32.totalorder %s32, 1
    %s34 = scalar_select %p33, 0, %s32
    %s35 = sadd.s32 1, %s17
    %s36 = scalar_select %p33, %s35, %s17
    %p37 = scmp.ge.s32.totalorder %s36, 1
    %s38 = scalar_select %p37, 0, %s36
    %s39 = sadd.s32 1, %s16
    %s40 = scalar_select %p37, %s39, %s16
    %p41 = scmp.ge.s32.totalorder %s40, 2
    %s42 = scalar_select %p41, 0, %s40
    %s43 = ssub.s32 %s16, %s42
    %s44 = ssub.s32 %s18, %s34
    %s45 = sor.u32 %s43, %s44
    %s46 = ssub.s32 %s17, %s38
    %s47 = sor.u32 %s45, %s46
    %p48 = scmp.eq.s32.totalorder %s47, 0
    %s50 = sadd.s32 %s49, 1
    %s51 = scalar_select %p48, %s49, %s50
    %p54 = pneg %p48
    %p55 = scmp.eq.s32.totalorder %s9, 1
    %p56 = por %p54, %p55
    %p57 = scmp.ne.s32.totalorder %s49, %s52
    %p58 = scmp.eq.s32.totalorder %s9, 0
    %p59 = por %p57, %p58
    %p60 = scmp.ne.s32.totalorder %s49, %s52
    %p61 = scmp.eq.s32.totalorder %s14, 1
    %p62 = por %p60, %p61
    %p63 = scmp.ne.s32.totalorder %s52, %s53
    %p64 = scmp.eq.s32.totalorder %s14, 0
    %p65 = por %p63, %p64
    %p66 = scmp.ne.s32.totalorder %s52, %s53
    %p67 = scmp.eq.s32.totalorder %s15, 1
    %p68 = por %p66, %p67
    %p70 = scmp.ne.s32.totalorder %s53, %s69
    %p71 = scmp.eq.s32.totalorder %s15, 0
    %p72 = por %p70, %p71
    %s73 = sadd.s32 %s17, 1
    %s74 = sadd.s32 %s38, 1
    %s75 = ssub.s32 %s16, %s42
    %s76 = ssub.s32 %s19, %s30
    %s77 = sor.u32 %s75, %s76
    %s78 = ssub.s32 %s73, %s74
    %s79 = sor.u32 %s77, %s78
    %p80 = scmp.eq.s32.totalorder %s79, 0
    %s82 = sadd.s32 %s81, 1
    %s83 = scalar_select %p80, %s81, %s82
    %p86 = pneg %p80
    %p87 = scmp.eq.s32.totalorder %s9, 1
    %p88 = por %p86, %p87
    %p89 = scmp.ne.s32.totalorder %s81, %s84
    %p90 = scmp.eq.s32.totalorder %s9, 0
    %p91 = por %p89, %p90
    %p92 = scmp.ne.s32.totalorder %s81, %s84
    %p93 = scmp.eq.s32.totalorder %s14, 1
    %p94 = por %p92, %p93
    %p95 = scmp.ne.s32.totalorder %s84, %s85
    %p96 = scmp.eq.s32.totalorder %s14, 0
    %p97 = por %p95, %p96
    %p98 = scmp.ne.s32.totalorder %s84, %s85
    %p99 = scmp.eq.s32.totalorder %s15, 1
    %p100 = por %p98, %p99
    %p102 = scmp.ne.s32.totalorder %s85, %s101
    %p103 = scmp.eq.s32.totalorder %s15, 0
    %p104 = por %p102, %p103
    %s105 = sadd.s32 %s17, 2
    %s106 = sadd.s32 %s38, 2
    %s107 = ssub.s32 %s16, %s42
    %s108 = ssub.s32 %s19, %s30
    %s109 = sor.u32 %s107, %s108
    %s110 = ssub.s32 %s105, %s106
    %s111 = sor.u32 %s109, %s110
    %p112 = scmp.eq.s32.totalorder %s111, 0
    %s114 = sadd.s32 %s113, 1
    %s115 = scalar_select %p112, %s113, %s114
    %p118 = pneg %p112
    %p119 = scmp.eq.s32.totalorder %s9, 1
    %p120 = por %p118, %p119
    %p121 = scmp.ne.s32.totalorder %s113, %s116
    %p122 = scmp.eq.s32.totalorder %s9, 0
    %p123 = por %p121, %p122
    %p124 = scmp.ne.s32.totalorder %s113, %s116
    %p125 = scmp.eq.s32.totalorder %s14, 1
    %p126 = por %p124, %p125
    %p127 = scmp.ne.s32.totalorder %s116, %s117
    %p128 = scmp.eq.s32.totalorder %s14, 0
    %p129 = por %p127, %p128
    %p130 = scmp.ne.s32.totalorder %s116, %s117
    %p131 = scmp.eq.s32.totalorder %s15, 1
    %p132 = por %p130, %p131
    %p134 = scmp.ne.s32.totalorder %s117, %s133
    %p135 = scmp.eq.s32.totalorder %s15, 0
    %p136 = por %p134, %p135
    %s137 = ssub.s32 %s16, %s42
    %s138 = ssub.s32 %s18, %s34
    %s139 = sor.u32 %s137, %s138
    %s140 = ssub.s32 %s17, %s38
    %s141 = sor.u32 %s139, %s140
    %p142 = scmp.eq.s32.totalorder %s141, 0
    %s144 = sadd.s32 %s143, 1
    %s145 = scalar_select %p142, %s143, %s144
    %p148 = pneg %p142
    %p149 = scmp.eq.s32.totalorder %s9, 1
    %p150 = por %p148, %p149
    %p151 = scmp.ne.s32.totalorder %s143, %s146
    %p152 = scmp.eq.s32.totalorder %s9, 0
    %p153 = por %p151, %p152
    %p154 = scmp.ne.s32.totalorder %s143, %s146
    %p155 = scmp.eq.s32.totalorder %s14, 1
    %p156 = por %p154, %p155
    %p157 = scmp.ne.s32.totalorder %s146, %s147
    %p158 = scmp.eq.s32.totalorder %s14, 0
    %p159 = por %p157, %p158
    %p160 = scmp.ne.s32.totalorder %s146, %s147
    %p161 = scmp.eq.s32.totalorder %s15, 1
    %p162 = por %p160, %p161
    %p164 = scmp.ne.s32.totalorder %s147, %s163
    %p165 = scmp.eq.s32.totalorder %s15, 0
    %p166 = por %p164, %p165
    %p167 = scmp.le.s32.totalorder 1, %s9
    %p168 = scmp.lt.s32.totalorder %s9, 3
    %p169 = pnand %p167, %p168
    %p170 = pneg %p169
    // Predicated region
    $region9: #{transformer_embedder.14} parent=5 // pred_check
      _
    $region10: #{transformer_embedder.14} parent=5 // pred_check_branch
      %172 = sbr.rel (%p169) target = $region12
    $region11: #{transformer_embedder.14} parent=5 // pred_region
      %s173 = ssub.s32 %s9, 1
    $region12: #{transformer_embedder.14} parent=5 // pred_fallthru
      _
    %p174 = scmp.lt.s32.totalorder %s9, 2
    // Predicated region
    $region13: #{transformer_embedder.14} parent=5 // pred_check
      %p175 = pneg %p174
    $region14: #{transformer_embedder.14} parent=5 // pred_check_branch
      %177 = sbr.rel (%p175) target = $region16
    $region15: #{transformer_embedder.14} parent=5 // pred_region
      // Predicated region
      $region17: #{transformer_embedder.14} parent=15 // pred_check
        %p178 = pneg %p59
      $region18: #{transformer_embedder.14} parent=15 // pred_check_branch
        %180 = sbr.rel (%p178) target = $region20
      $region19: #{transformer_embedder.14} parent=15 // pred_region
        %p181 = scmp.lt.s32.totalorder %s16, 1
        %s182 = scalar_select %p181, %s16, 1
        %p183 = scmp.lt.s32.totalorder %s18, 0
        %s184 = scalar_select %p183, %s18, 0
        %p185 = scmp.lt.s32.totalorder %s17, 2
        %s186 = scalar_select %p185, %s17, 2
        %s187 = smul.addr %s184, 3
        %s188 = sadd.s32 %s186, %s187
        %s189 = smul.addr %s182, 3
        %s190 = sadd.s32 %s188, %s189
        %s191 = smul.addr %s190, 4
        %s192 = scalar_lea.vmem %s0, %s191
      $region20: #{transformer_embedder.14} parent=15 // pred_fallthru
        _
      // Predicated region
      $region21: #{transformer_embedder.14} parent=15 // pred_check
        %p193 = pneg %p91
      $region22: #{transformer_embedder.14} parent=15 // pred_check_branch
        %195 = sbr.rel (%p193) target = $region24
      $region23: #{transformer_embedder.14} parent=15 // pred_region
        %s196 = sadd.s32 %s17, 1
        %p197 = scmp.lt.s32.totalorder %s16, 1
        %s198 = scalar_select %p197, %s16, 1
        %p199 = scmp.lt.s32.totalorder %s19, 0
        %s200 = scalar_select %p199, %s19, 0
        %p201 = scmp.lt.s32.totalorder %s196, 2
        %s202 = scalar_select %p201, %s196, 2
        %s203 = smul.addr %s200, 3
        %s204 = sadd.s32 %s202, %s203
        %s205 = smul.addr %s198, 3
        %s206 = sadd.s32 %s204, %s205
        %s207 = smul.addr %s206, 4
        %s208 = scalar_lea.vmem %s1, %s207
        %s209 = sadd.s32 %s17, 1
      $region24: #{transformer_embedder.14} parent=15 // pred_fallthru
        _
      // Predicated region
      $region25: #{transformer_embedder.14} parent=15 // pred_check
        %p210 = pneg %p123
      $region26: #{transformer_embedder.14} parent=15 // pred_check_branch
        %212 = sbr.rel (%p210) target = $region28
      $region27: #{transformer_embedder.14} parent=15 // pred_region
        %s213 = sadd.s32 %s17, 2
        %p214 = scmp.lt.s32.totalorder %s16, 1
        %s215 = scalar_select %p214, %s16, 1
        %p216 = scmp.lt.s32.totalorder %s19, 0
        %s217 = scalar_select %p216, %s19, 0
        %p218 = scmp.lt.s32.totalorder %s213, 2
        %s219 = scalar_select %p218, %s213, 2
        %s220 = smul.addr %s217, 3
        %s221 = sadd.s32 %s219, %s220
        %s222 = smul.addr %s215, 3
        %s223 = sadd.s32 %s221, %s222
        %s224 = smul.addr %s223, 4
        %s225 = scalar_lea.vmem %s2, %s224
        %s226 = sadd.s32 %s17, 2
      $region28: #{transformer_embedder.14} parent=15 // pred_fallthru
        _
    $region16: #{transformer_embedder.14} parent=5 // pred_fallthru
      _
    %p227 = scmp.le.s32.totalorder 1, %s9
    %p228 = scmp.lt.s32.totalorder %s9, 3
    %p229 = pnand %p227, %p228
    %p230 = pneg %p229
    // Predicated region
    $region29: #{transformer_embedder.14} parent=5 // pred_check
      _
    $region30: #{transformer_embedder.14} parent=5 // pred_check_branch
      %232 = sbr.rel (%p229) target = $region32
    $region31: #{transformer_embedder.14} parent=5 // pred_region
      %s233 = ssub.s32 %s9, 1
      %p234 = scmp.lt.s32.totalorder %s20, 1
      %s235 = scalar_select %p234, %s20, 1
      %p236 = scmp.lt.s32.totalorder %s22, 0
      %s237 = scalar_select %p236, %s22, 0
      %p238 = scmp.lt.s32.totalorder %s21, 2
      %s239 = scalar_select %p238, %s21, 2
      %s240 = smul.addr %s237, 3
      %s241 = sadd.s32 %s239, %s240
      %s242 = smul.addr %s235, 3
      %s243 = sadd.s32 %s241, %s242
      %s244 = smul.addr %s243, 4
      %s245 = scalar_lea.vmem %s0, %s244
      %p246 = pneg %p65
      %p247 = pneg %p62
      %s248 = sadd.s32 %s21, 1
      %p249 = scmp.lt.s32.totalorder %s20, 1
      %s250 = scalar_select %p249, %s20, 1
      %p251 = scmp.lt.s32.totalorder %s23, 0
      %s252 = scalar_select %p251, %s23, 0
      %p253 = scmp.lt.s32.totalorder %s248, 2
      %s254 = scalar_select %p253, %s248, 2
      %s255 = smul.addr %s252, 3
      %s256 = sadd.s32 %s254, %s255
      %s257 = smul.addr %s250, 3
      %s258 = sadd.s32 %s256, %s257
      %s259 = smul.addr %s258, 4
      %s260 = scalar_lea.vmem %s1, %s259
      %p261 = pneg %p97
      %p262 = pneg %p94
      %s263 = sadd.s32 %s21, 2
      %p264 = scmp.lt.s32.totalorder %s20, 1
      %s265 = scalar_select %p264, %s20, 1
      %p266 = scmp.lt.s32.totalorder %s23, 0
      %s267 = scalar_select %p266, %s23, 0
      %p268 = scmp.lt.s32.totalorder %s263, 2
      %s269 = scalar_select %p268, %s263, 2
      %s270 = smul.addr %s267, 3
      %s271 = sadd.s32 %s269, %s270
      %s272 = smul.addr %s265, 3
      %s273 = sadd.s32 %s271, %s272
      %s274 = smul.addr %s273, 4
      %s275 = scalar_lea.vmem %s2, %s274
      %p276 = pneg %p129
      %p277 = pneg %p126
      %p278 = pneg %p159
      %p279 = pneg %p156
      %p280 = scmp.lt.s32.totalorder %s20, 1
      %s281 = scalar_select %p280, %s20, 1
      %p282 = scmp.lt.s32.totalorder %s22, 0
      %s283 = scalar_select %p282, %s22, 0
      %p284 = scmp.lt.s32.totalorder %s21, 0
      %s285 = scalar_select %p284, %s21, 0
      %s286 = sadd.s32 %s285, %s283
      %s287 = sadd.s32 %s286, %s281
      %s288 = smul.addr %s287, 4
      %s289 = scalar_lea.vmem %s3, %s288
      %p290 = scmp.lt.s32.totalorder %s20, 1
      %s291 = scalar_select %p290, %s20, 1
      %p292 = scmp.lt.s32.totalorder %s22, 0
      %s293 = scalar_select %p292, %s22, 0
      %p294 = scmp.lt.s32.totalorder %s21, 2
      %s295 = scalar_select %p294, %s21, 2
      %s296 = smul.addr %s293, 3
      %s297 = sadd.s32 %s295, %s296
      %s298 = smul.addr %s291, 3
      %s299 = sadd.s32 %s297, %s298
      %s300 = smul.addr %s299, 4
      %s301 = scalar_lea.vmem %s0, %s300
      %s302 = sadd.s32 %s21, 1
      %p303 = scmp.lt.s32.totalorder %s20, 1
      %s304 = scalar_select %p303, %s20, 1
      %p305 = scmp.lt.s32.totalorder %s23, 0
      %s306 = scalar_select %p305, %s23, 0
      %p307 = scmp.lt.s32.totalorder %s302, 2
      %s308 = scalar_select %p307, %s302, 2
      %s309 = smul.addr %s306, 3
      %s310 = sadd.s32 %s308, %s309
      %s311 = smul.addr %s304, 3
      %s312 = sadd.s32 %s310, %s311
      %s313 = smul.addr %s312, 4
      %s314 = scalar_lea.vmem %s1, %s313
      %s315 = sadd.s32 %s21, 1
      %s316 = sadd.s32 %s21, 2
      %p317 = scmp.lt.s32.totalorder %s20, 1
      %s318 = scalar_select %p317, %s20, 1
      %p319 = scmp.lt.s32.totalorder %s23, 0
      %s320 = scalar_select %p319, %s23, 0
      %p321 = scmp.lt.s32.totalorder %s316, 2
      %s322 = scalar_select %p321, %s316, 2
      %s323 = smul.addr %s320, 3
      %s324 = sadd.s32 %s322, %s323
      %s325 = smul.addr %s318, 3
      %s326 = sadd.s32 %s324, %s325
      %s327 = smul.addr %s326, 4
      %s328 = scalar_lea.vmem %s2, %s327
      %s329 = sadd.s32 %s21, 2
      %p330 = scmp.lt.s32.totalorder %s20, 1
      %s331 = scalar_select %p330, %s20, 1
      %p332 = scmp.lt.s32.totalorder %s22, 0
      %s333 = scalar_select %p332, %s22, 0
      %p334 = scmp.lt.s32.totalorder %s21, 0
      %s335 = scalar_select %p334, %s21, 0
      %s336 = sadd.s32 %s335, %s333
      %s337 = sadd.s32 %s336, %s331
      %s338 = smul.addr %s337, 4
      %s339 = scalar_lea.vmem %s3, %s338
      %p341 = scmp.eq.s32.totalorder %s23, 0
      // Predicated region
      $region33: #{transformer_embedder.14} parent=31 // pred_check
        %p342 = pneg %p341
      $region34: #{transformer_embedder.14} parent=31 // pred_check_branch
        %344 = sbr.rel (%p342) target = $region36
      $region35: #{transformer_embedder.14} parent=31 // pred_region
        %vm345 = vcmask 7168
        %346 = vst.msk [vmem:[#allocation2] sm:$0xff] %vm345, -inf
        %347 = vst.msk [vmem:[#allocation2 + $0x8] sm:$0xff] %vm345, -inf
        %348 = vst.msk [vmem:[#allocation2 + $0x10] sm:$0xff] %vm345, -inf
        %349 = vst.msk [vmem:[#allocation2 + $0x18] sm:$0xff] %vm345, -inf
        %350 = vst.msk [vmem:[#allocation3] sm:$0xff] %vm345, 0.0
        %351 = vst.msk [vmem:[#allocation3 + $0x8] sm:$0xff] %vm345, 0.0
        %352 = vst.msk [vmem:[#allocation3 + $0x10] sm:$0xff] %vm345, 0.0
        %353 = vst.msk [vmem:[#allocation3 + $0x18] sm:$0xff] %vm345, 0.0
        %vm354 = vcmask 261120
        %355 = vst.msk [vmem:[#allocation4] sm:$0xff] %vm354, 0.0
        %356 = vst.msk [vmem:[#allocation4 + $0x8] sm:$0xff] %vm354, 0.0
        %357 = vst.msk [vmem:[#allocation4 + $0x10] sm:$0xff] %vm354, 0.0
        %358 = vst.msk [vmem:[#allocation4 + $0x18] sm:$0xff] %vm354, 0.0
      $region36: #{transformer_embedder.14} parent=31 // pred_fallthru
        _
      %v359 = vld [vmem:[%s301] sm:$0xf]
      %v360 = vld [vmem:[%s314] sm:$0xf]
      %v361 = vld [vmem:[%s328] sm:$0xf]
      %vm362 = vcmask 261120
      %v364 = vsel %vm362, %v359, 0
      %v367 = vsel %vm362, %v360, 0
      %369 = vmatpush.bf16.xpose.msra.mxu0 0
      %370 = vmatpush.bf16.xpose.msra.mxu0 0
      %371 = vmatpush.bf16.xpose.msra.mxu0 0
      %372 = vmatpush.bf16.xpose.msra.mxu0 0
      %373 = vmatpush.bf16.xpose.msra.mxu0 0
      %374 = vmatpush.bf16.xpose.msra.mxu0 0
      %375 = vmatpush.bf16.xpose.msra.mxu0 0
      %376 = vmatpush.bf16.xpose.msra.mxu0 %v367
      %377 = vmatmul.bf16.gmra.mxu0 %v364
      %v378 = vpop.f32.mrf.mxu0
      %v379 = vadd.f32 0.0, %v378
      %v380 = vpop.f32.mrf.mxu0
      %381 = vdwg.mxu0
      %v382 = vmul.f32 %v379, 0.17677669
      %v383 = vld [vmem:[#allocation2] sm:$0xff]
      %vm384 = vcmask 64512
      %v385 = vsel %vm384, %v382, -inf
      %386 = vmax.xlane.f32.xlu0 %v385
      %v387 = vpop.xlane.xlu0 %386
      %v388 = vmax.f32 %v383, %v387
      %v389 = vsub.f32 %v383, %v388
      %v390 = vmul.f32 %v389, 1.442695
      %v391 = vpow.pop %v390
      %393 = vset.pattern.permute.xlu0 0
      %394 = vperm.xlu0 %393, %v388
      %v395 = vpop.permute.xlu0 %394
      %v397 = vsub.f32 %v382, %v395
      %v398 = vmul.f32 %v397, 1.442695
      %v399 = vpow.pop %v398
      %v400 = vld [vmem:[#allocation3] sm:$0xff]
      %v401 = vmul.f32 %v391, %v400
      %v402 = vsel %vm384, %v399, 0.0
      %403 = vadd.xlane.f32.xlu0 %v402
      %v404 = vpop.xlane.xlu0 %403
      %v405 = vadd.f32 %v401, %v404
      %vm406 = vcmask 7168
      %407 = vst.msk [vmem:[#allocation3] sm:$0xff] %vm406, %v405
      %v408 = vld [vmem:[#allocation4] sm:$0xff]
      %410 = vset.pattern.permute.xlu0 0
      %411 = vperm.xlu0 %410, %v391
      %v412 = vpop.permute.xlu0 %411
      %v414 = vmul.f32 %v412, %v408
      %v415 = vpack.c.bf16 %v399, %v399
      %v417 = vsel %vm384, %v415, 0
      %vm419 = vcmask 1043456
      %v421 = vsel %vm419, %v361, 0
      %423 = vmatpush.bf16.msra.mxu0 0
      %424 = vmatpush.bf16.msra.mxu0 0
      %425 = vmatpush.bf16.msra.mxu0 0
      %426 = vmatpush.bf16.msra.mxu0 0
      %427 = vmatpush.bf16.msra.mxu0 0
      %428 = vmatpush.bf16.msra.mxu0 0
      %429 = vmatpush.bf16.msra.mxu0 0
      %430 = vmatpush.bf16.msra.mxu0 %v421
      %431 = vmatmul.bf16.gmra.mxu0 %v417
      %v432 = vpop.f32.mrf.mxu0
      %v433 = vadd.f32 0.0, %v432
      %v434 = vpop.f32.mrf.mxu0
      %435 = vdwg.mxu0
      %v436 = vadd.f32 %v414, %v433
      %437 = vst.msk [vmem:[#allocation4] sm:$0xff] %vm362, %v436
      %438 = vst.msk [vmem:[#allocation2] sm:$0xff] %vm406, %v388
      %v440 = vunpack.c.l.b16 %v359
      %v441 = vpack.c.b16 %v440, %v440
      %442 = vrot.lane.b32.xlu0 %v441, 96
      %v443 = vpop.permute.xlu0 %442
      %v445 = vunpack.c.l.b16 %v360
      %v446 = vpack.c.b16 %v445, %v445
      %447 = vrot.lane.b32.xlu0 %v446, 96
      %v448 = vpop.permute.xlu0 %447
      %v450 = vsel %vm362, %v443, 0
      %v453 = vsel %vm362, %v448, 0
      %455 = vmatpush.bf16.xpose.msra.mxu0 0
      %456 = vmatpush.bf16.xpose.msra.mxu0 0
      %457 = vmatpush.bf16.xpose.msra.mxu0 0
      %458 = vmatpush.bf16.xpose.msra.mxu0 0
      %459 = vmatpush.bf16.xpose.msra.mxu0 0
      %460 = vmatpush.bf16.xpose.msra.mxu0 0
      %461 = vmatpush.bf16.xpose.msra.mxu0 0
      %462 = vmatpush.bf16.xpose.msra.mxu0 %v453
      %463 = vmatmul.bf16.gmra.mxu0 %v450
      %v464 = vpop.f32.mrf.mxu0
      %v465 = vadd.f32 0.0, %v464
      %v466 = vpop.f32.mrf.mxu0
      %467 = vdwg.mxu0
      %v468 = vmul.f32 %v465, 0.17677669
      %s469 = scalar_lea.vmem [#allocation2], 8
      %v470 = vld [vmem:[%s469] sm:$0xff]
      %v471 = vsel %vm384, %v468, -inf
      %472 = vmax.xlane.f32.xlu0 %v471
      %v473 = vpop.xlane.xlu0 %472
      %v474 = vmax.f32 %v470, %v473
      %v475 = vsub.f32 %v470, %v474
      %v476 = vmul.f32 %v475, 1.442695
      %v477 = vpow.pop %v476
      %479 = vset.pattern.permute.xlu0 0
      %480 = vperm.xlu0 %479, %v474
      %v481 = vpop.permute.xlu0 %480
      %v483 = vsub.f32 %v468, %v481
      %v484 = vmul.f32 %v483, 1.442695
      %v485 = vpow.pop %v484
      %s486 = scalar_lea.vmem [#allocation3], 8
      %v487 = vld [vmem:[%s486] sm:$0xff]
      %v488 = vmul.f32 %v477, %v487
      %v489 = vsel %vm384, %v485, 0.0
      %490 = vadd.xlane.f32.xlu0 %v489
      %v491 = vpop.xlane.xlu0 %490
      %v492 = vadd.f32 %v488, %v491
      %493 = vst.msk [vmem:[%s486] sm:$0xff] %vm406, %v492
      %s494 = scalar_lea.vmem [#allocation4], 8
      %v495 = vld [vmem:[%s494] sm:$0xff]
      %497 = vset.pattern.permute.xlu0 0
      %498 = vperm.xlu0 %497, %v477
      %v499 = vpop.permute.xlu0 %498
      %v501 = vmul.f32 %v499, %v495
      %v502 = vpack.c.bf16 %v485, %v485
      %v504 = vunpack.c.l.b16 %v361
      %v505 = vpack.c.b16 %v504, %v504
      %506 = vrot.lane.b32.xlu0 %v505, 96
      %v507 = vpop.permute.xlu0 %506
      %v509 = vsel %vm384, %v502, 0
      %v512 = vsel %vm419, %v507, 0
      %514 = vmatpush.bf16.msra.mxu0 0
      %515 = vmatpush.bf16.msra.mxu0 0
      %516 = vmatpush.bf16.msra.mxu0 0
      %517 = vmatpush.bf16.msra.mxu0 0
      %518 = vmatpush.bf16.msra.mxu0 0
      %519 = vmatpush.bf16.msra.mxu0 0
      %520 = vmatpush.bf16.msra.mxu0 0
      %521 = vmatpush.bf16.msra.mxu0 %v512
      %522 = vmatmul.bf16.gmra.mxu0 %v509
      %v523 = vpop.f32.mrf.mxu0
      %v524 = vadd.f32 0.0, %v523
      %v525 = vpop.f32.mrf.mxu0
      %526 = vdwg.mxu0
      %v527 = vadd.f32 %v501, %v524
      %528 = vst.msk [vmem:[%s494] sm:$0xff] %vm362, %v527
      %529 = vst.msk [vmem:[%s469] sm:$0xff] %vm406, %v474
      %530 = vrot.lane.b32.xlu0 %v441, 64
      %v531 = vpop.permute.xlu0 %530
      %532 = vrot.lane.b32.xlu0 %v446, 64
      %v533 = vpop.permute.xlu0 %532
      %v535 = vsel %vm362, %v531, 0
      %v538 = vsel %vm362, %v533, 0
      %540 = vmatpush.bf16.xpose.msra.mxu0 0
      %541 = vmatpush.bf16.xpose.msra.mxu0 0
      %542 = vmatpush.bf16.xpose.msra.mxu0 0
      %543 = vmatpush.bf16.xpose.msra.mxu0 0
      %544 = vmatpush.bf16.xpose.msra.mxu0 0
      %545 = vmatpush.bf16.xpose.msra.mxu0 0
      %546 = vmatpush.bf16.xpose.msra.mxu0 0
      %547 = vmatpush.bf16.xpose.msra.mxu0 %v538
      %548 = vmatmul.bf16.gmra.mxu0 %v535
      %v549 = vpop.f32.mrf.mxu0
      %v550 = vadd.f32 0.0, %v549
      %v551 = vpop.f32.mrf.mxu0
      %552 = vdwg.mxu0
      %v553 = vmul.f32 %v550, 0.17677669
      %s554 = scalar_lea.vmem [#allocation2], 16
      %v555 = vld [vmem:[%s554] sm:$0xff]
      %v556 = vsel %vm384, %v553, -inf
      %557 = vmax.xlane.f32.xlu0 %v556
      %v558 = vpop.xlane.xlu0 %557
      %v559 = vmax.f32 %v555, %v558
      %v560 = vsub.f32 %v555, %v559
      %v561 = vmul.f32 %v560, 1.442695
      %v562 = vpow.pop %v561
      %564 = vset.pattern.permute.xlu0 0
      %565 = vperm.xlu0 %564, %v559
      %v566 = vpop.permute.xlu0 %565
      %v568 = vsub.f32 %v553, %v566
      %v569 = vmul.f32 %v568, 1.442695
      %v570 = vpow.pop %v569
      %s571 = scalar_lea.vmem [#allocation3], 16
      %v572 = vld [vmem:[%s571] sm:$0xff]
      %v573 = vmul.f32 %v562, %v572
      %v574 = vsel %vm384, %v570, 0.0
      %575 = vadd.xlane.f32.xlu0 %v574
      %v576 = vpop.xlane.xlu0 %575
      %v577 = vadd.f32 %v573, %v576
      %578 = vst.msk [vmem:[%s571] sm:$0xff] %vm406, %v577
      %s579 = scalar_lea.vmem [#allocation4], 16
      %v580 = vld [vmem:[%s579] sm:$0xff]
      %582 = vset.pattern.permute.xlu0 0
      %583 = vperm.xlu0 %582, %v562
      %v584 = vpop.permute.xlu0 %583
      %v586 = vmul.f32 %v584, %v580
      %v587 = vpack.c.bf16 %v570, %v570
      %588 = vrot.lane.b32.xlu0 %v505, 64
      %v589 = vpop.permute.xlu0 %588
      %v591 = vsel %vm384, %v587, 0
      %v594 = vsel %vm419, %v589, 0
      %596 = vmatpush.bf16.msra.mxu0 0
      %597 = vmatpush.bf16.msra.mxu0 0
      %598 = vmatpush.bf16.msra.mxu0 0
      %599 = vmatpush.bf16.msra.mxu0 0
      %600 = vmatpush.bf16.msra.mxu0 0
      %601 = vmatpush.bf16.msra.mxu0 0
      %602 = vmatpush.bf16.msra.mxu0 0
      %603 = vmatpush.bf16.msra.mxu0 %v594
      %604 = vmatmul.bf16.gmra.mxu0 %v591
      %v605 = vpop.f32.mrf.mxu0
      %v606 = vadd.f32 0.0, %v605
      %v607 = vpop.f32.mrf.mxu0
      %608 = vdwg.mxu0
      %v609 = vadd.f32 %v586, %v606
      %610 = vst.msk [vmem:[%s579] sm:$0xff] %vm362, %v609
      %611 = vst.msk [vmem:[%s554] sm:$0xff] %vm406, %v559
      %612 = vrot.lane.b32.xlu0 %v441, 32
      %v613 = vpop.permute.xlu0 %612
      %614 = vrot.lane.b32.xlu0 %v446, 32
      %v615 = vpop.permute.xlu0 %614
      %v617 = vsel %vm362, %v613, 0
      %v620 = vsel %vm362, %v615, 0
      %622 = vmatpush.bf16.xpose.msra.mxu0 0
      %623 = vmatpush.bf16.xpose.msra.mxu0 0
      %624 = vmatpush.bf16.xpose.msra.mxu0 0
      %625 = vmatpush.bf16.xpose.msra.mxu0 0
      %626 = vmatpush.bf16.xpose.msra.mxu0 0
      %627 = vmatpush.bf16.xpose.msra.mxu0 0
      %628 = vmatpush.bf16.xpose.msra.mxu0 0
      %629 = vmatpush.bf16.xpose.msra.mxu0 %v620
      %630 = vmatmul.bf16.gmra.mxu0 %v617
      %v631 = vpop.f32.mrf.mxu0
      %v632 = vadd.f32 0.0, %v631
      %v633 = vpop.f32.mrf.mxu0
      %634 = vdwg.mxu0
      %v635 = vmul.f32 %v632, 0.17677669
      %s636 = scalar_lea.vmem [#allocation2], 24
      %v637 = vld [vmem:[%s636] sm:$0xff]
      %v638 = vsel %vm384, %v635, -inf
      %639 = vmax.xlane.f32.xlu0 %v638
      %v640 = vpop.xlane.xlu0 %639
      %v641 = vmax.f32 %v637, %v640
      %v642 = vsub.f32 %v637, %v641
      %v643 = vmul.f32 %v642, 1.442695
      %v644 = vpow.pop %v643
      %646 = vset.pattern.permute.xlu0 0
      %647 = vperm.xlu0 %646, %v641
      %v648 = vpop.permute.xlu0 %647
      %v650 = vsub.f32 %v635, %v648
      %v651 = vmul.f32 %v650, 1.442695
      %v652 = vpow.pop %v651
      %s653 = scalar_lea.vmem [#allocation3], 24
      %v654 = vld [vmem:[%s653] sm:$0xff]
      %v655 = vmul.f32 %v644, %v654
      %v656 = vsel %vm384, %v652, 0.0
      %657 = vadd.xlane.f32.xlu0 %v656
      %v658 = vpop.xlane.xlu0 %657
      %v659 = vadd.f32 %v655, %v658
      %660 = vst.msk [vmem:[%s653] sm:$0xff] %vm406, %v659
      %s661 = scalar_lea.vmem [#allocation4], 24
      %v662 = vld [vmem:[%s661] sm:$0xff]
      %664 = vset.pattern.permute.xlu0 0
      %665 = vperm.xlu0 %664, %v644
      %v666 = vpop.permute.xlu0 %665
      %v668 = vmul.f32 %v666, %v662
      %v669 = vpack.c.bf16 %v652, %v652
      %670 = vrot.lane.b32.xlu0 %v505, 32
      %v671 = vpop.permute.xlu0 %670
      %v673 = vsel %vm384, %v669, 0
      %v676 = vsel %vm419, %v671, 0
      %678 = vmatpush.bf16.msra.mxu0 0
      %679 = vmatpush.bf16.msra.mxu0 0
      %680 = vmatpush.bf16.msra.mxu0 0
      %681 = vmatpush.bf16.msra.mxu0 0
      %682 = vmatpush.bf16.msra.mxu0 0
      %683 = vmatpush.bf16.msra.mxu0 0
      %684 = vmatpush.bf16.msra.mxu0 0
      %685 = vmatpush.bf16.msra.mxu0 %v676
      %686 = vmatmul.bf16.gmra.mxu0 %v673
      %v687 = vpop.f32.mrf.mxu0
      %v688 = vadd.f32 0.0, %v687
      %v689 = vpop.f32.mrf.mxu0
      %690 = vdwg.mxu0
      %v691 = vadd.f32 %v668, %v688
      %692 = vst.msk [vmem:[%s661] sm:$0xff] %vm362, %v691
      %693 = vst.msk [vmem:[%s636] sm:$0xff] %vm406, %v641
      // Predicated region
      $region37: #{transformer_embedder.14} parent=31 // pred_check
        %p694 = pneg %p341
      $region38: #{transformer_embedder.14} parent=31 // pred_check_branch
        %696 = sbr.rel (%p694) target = $region40
      $region39: #{transformer_embedder.14} parent=31 // pred_region
        %v697 = vld [vmem:[#allocation4] sm:$0xff]
        %v698 = vld [vmem:[#allocation3] sm:$0xff]
        %700 = vset.pattern.permute.xlu0 0
        %701 = vperm.xlu0 %700, %v698
        %v702 = vpop.permute.xlu0 %701
        %v704 = vrcp.pop %v702
        %v705 = vmul.f32 %v702, %v704
        %v706 = vsub.f32 1.0, %v705
        %v707 = vmul.f32 %v704, %v706
        %v708 = vadd.f32 %v704, %v707
        %vm709 = vweird.f32 %v702
        %vm710 = vweird.f32 %v704
        %vm711 = vmor %vm709, %vm710
        %v712 = vsel %vm711, %v704, %v708
        %v713 = vand.u32 2147483647, %v702
        %vm714 = vcmp.eq.f32.partialorder %v713, 8.507059e+37
        %v715 = vand.u32 %v702, 2147483648
        %v716 = vor.u32 1.1754944e-38, %v715
        %v717 = vsel %vm714, %v716, %v712
        %v718 = vmul.f32 %v697, %v717
        %v719 = vld [vmem:[%s494] sm:$0xff]
        %v720 = vld [vmem:[%s486] sm:$0xff]
        %722 = vset.pattern.permute.xlu0 0
        %723 = vperm.xlu0 %722, %v720
        %v724 = vpop.permute.xlu0 %723
        %v726 = vrcp.pop %v724
        %v727 = vmul.f32 %v724, %v726
        %v728 = vsub.f32 1.0, %v727
        %v729 = vmul.f32 %v726, %v728
        %v730 = vadd.f32 %v726, %v729
        %vm731 = vweird.f32 %v724
        %vm732 = vweird.f32 %v726
        %vm733 = vmor %vm731, %vm732
        %v734 = vsel %vm733, %v726, %v730
        %v735 = vand.u32 2147483647, %v724
        %vm736 = vcmp.eq.f32.partialorder %v735, 8.507059e+37
        %v737 = vand.u32 %v724, 2147483648
        %v738 = vor.u32 1.1754944e-38, %v737
        %v739 = vsel %vm736, %v738, %v734
        %v740 = vmul.f32 %v719, %v739
        %v741 = vld [vmem:[%s579] sm:$0xff]
        %v742 = vld [vmem:[%s571] sm:$0xff]
        %744 = vset.pattern.permute.xlu0 0
        %745 = vperm.xlu0 %744, %v742
        %v746 = vpop.permute.xlu0 %745
        %v748 = vrcp.pop %v746
        %v749 = vmul.f32 %v746, %v748
        %v750 = vsub.f32 1.0, %v749
        %v751 = vmul.f32 %v748, %v750
        %v752 = vadd.f32 %v748, %v751
        %vm753 = vweird.f32 %v746
        %vm754 = vweird.f32 %v748
        %vm755 = vmor %vm753, %vm754
        %v756 = vsel %vm755, %v748, %v752
        %v757 = vand.u32 2147483647, %v746
        %vm758 = vcmp.eq.f32.partialorder %v757, 8.507059e+37
        %v759 = vand.u32 %v746, 2147483648
        %v760 = vor.u32 1.1754944e-38, %v759
        %v761 = vsel %vm758, %v760, %v756
        %v762 = vmul.f32 %v741, %v761
        %v763 = vld [vmem:[%s661] sm:$0xff]
        %v764 = vld [vmem:[%s653] sm:$0xff]
        %766 = vset.pattern.permute.xlu0 0
        %767 = vperm.xlu0 %766, %v764
        %v768 = vpop.permute.xlu0 %767
        %v770 = vrcp.pop %v768
        %v771 = vmul.f32 %v768, %v770
        %v772 = vsub.f32 1.0, %v771
        %v773 = vmul.f32 %v770, %v772
        %v774 = vadd.f32 %v770, %v773
        %vm775 = vweird.f32 %v768
        %vm776 = vweird.f32 %v770
        %vm777 = vmor %vm775, %vm776
        %v778 = vsel %vm777, %v770, %v774
        %v779 = vand.u32 2147483647, %v768
        %vm780 = vcmp.eq.f32.partialorder %v779, 8.507059e+37
        %v781 = vand.u32 %v768, 2147483648
        %v782 = vor.u32 1.1754944e-38, %v781
        %v783 = vsel %vm780, %v782, %v778
        %v784 = vmul.f32 %v763, %v783
        %786 = vrot.lane.b32.xlu0 %v740, 32
        %v787 = vpop.permute.xlu0 %786
        %790 = vrot.lane.b32.xlu0 %v762, 64
        %v791 = vpop.permute.xlu0 %790
        %794 = vrot.lane.b32.xlu0 %v784, 96
        %v795 = vpop.permute.xlu0 %794
        %v797 = vsel %vm362, %v718, %v787
        %vm798 = vcmask 523264
        %v799 = vsel %vm798, %v797, %v791
        %vm800 = vcmask 785408
        %v801 = vsel %vm800, %v799, %v795
        %v802 = vpack.c.bf16 %v801, %v801
        %803 = vst [vmem:[%s339] sm:$0xf] %v802
      $region40: #{transformer_embedder.14} parent=31 // pred_fallthru
        _
      %p804 = scmp.lt.s32.totalorder %s20, 1
      %s805 = scalar_select %p804, %s20, 1
      %p806 = scmp.lt.s32.totalorder %s22, 0
      %s807 = scalar_select %p806, %s22, 0
      %p808 = scmp.lt.s32.totalorder %s21, 0
      %s809 = scalar_select %p808, %s21, 0
      %s810 = sadd.s32 %s809, %s807
      %s811 = sadd.s32 %s810, %s805
      %s812 = smul.addr %s811, 4
      %s813 = scalar_lea.vmem %s3, %s812
      // Predicated region
      $region41: #{transformer_embedder.14} parent=31 // pred_check
        %p814 = pneg %p156
      $region42: #{transformer_embedder.14} parent=31 // pred_check_branch
        %816 = sbr.rel (%p814) target = $region44
      $region43: #{transformer_embedder.14} parent=31 // pred_region
        _
      $region44: #{transformer_embedder.14} parent=31 // pred_fallthru
        _
    $region32: #{transformer_embedder.14} parent=5 // pred_fallthru
      _
    %p817 = scmp.le.s32.totalorder 2, %s9
    // Predicated region
    $region45: #{transformer_embedder.14} parent=5 // pred_check
      %p818 = pneg %p817
    $region46: #{transformer_embedder.14} parent=5 // pred_check_branch
      %820 = sbr.rel (%p818) target = $region48
    $region47: #{transformer_embedder.14} parent=5 // pred_region
      %s821 = ssub.s32 %s9, 2
      // Predicated region
      $region49: #{transformer_embedder.14} parent=47 // pred_check
        %p822 = pneg %p162
      $region50: #{transformer_embedder.14} parent=47 // pred_check_branch
        %824 = sbr.rel (%p822) target = $region52
      $region51: #{transformer_embedder.14} parent=47 // pred_region
        %p825 = scmp.lt.s32.totalorder %s24, 1
        %s826 = scalar_select %p825, %s24, 1
        %p827 = scmp.lt.s32.totalorder %s26, 0
        %s828 = scalar_select %p827, %s26, 0
        %p829 = scmp.lt.s32.totalorder %s25, 0
        %s830 = scalar_select %p829, %s25, 0
        %s831 = sadd.s32 %s830, %s828
        %s832 = sadd.s32 %s831, %s826
        %s833 = smul.addr %s832, 4
        %s834 = scalar_lea.vmem %s3, %s833
      $region52: #{transformer_embedder.14} parent=47 // pred_fallthru
        _
    $region48: #{transformer_embedder.14} parent=5 // pred_fallthru
      _
  $region6: #{transformer_embedder.14} parent=0 // loop_footer
    %s13 = sadd.s32 1, %s9
  $region7: #{transformer_embedder.14} parent=0 // loop_footer_branch
    %8 = sbr.rel target = $region3
  $region8: #{transformer_embedder.14} parent=0 // loop_exit
    _

// kernel: transformer_embedder.17
$region0: #{transformer_embedder.17}
  #allocation0 [shape = 'u32[]', space=smem, size = 0x4, offset = 0x4, fixed_abs, tag = 'smem constant byte address 0x4 - core index']
  #allocation1 [shape = 'u32[72,128]{1,0:T(1,128)}', space=vmem, size = 0x9000, scoped, tag = 'internal scratch']
  %s0 = inlined_call_operand.vmem [shape: bf16[16,256], index: 0, kind: input, shape index: {}]
  %s1 = inlined_call_operand.hbm [shape: bf16[256,128], index: 1, kind: input, shape index: {}]
  %s2 = inlined_call_operand.vmem [shape: bf16[1,128], index: 2, kind: input, shape index: {}]
  %s3 = inlined_call_operand.vmem [shape: bf16[16,128], index: 3, kind: input, shape index: {}]
  %s4 = inlined_call_operand.vmem [shape: bf16[1,128], index: 4, kind: input, shape index: {}]
  %s5 = inlined_call_operand.vmem [shape: bf16[1,128], index: 5, kind: input, shape index: {}]
  %s6 = inlined_call_operand.vmem [shape: bf16[16,128], index: 6, kind: output, shape index: {}]
  %s7 = sld [smem:[#allocation0]]
  $region61: #{transformer_embedder.17} parent=0
    _
  %s9 = ssub.s32 1, %s7
  %s10 = scalar_select 0, %s9, %s7
  $region1: #{transformer_embedder.17} parent=0
    #allocation2 [shape = 'u8[65536]{0}', space=vmem, size = 0x10000, scoped, tag = 'input window, operand 1, single buffered']
    #allocation3 [shape = 's32[2]{0}', space=sflag, size = 0x8, scoped, tag = 'scoped memory for transformer_embedder.17']
    %11 = vsyncpa [#allocation3], 0
    loop: start=0, step=1, limit=4
    $region2: #{transformer_embedder.17} parent=1 // loop_pre_header
      _
    $region3: #{transformer_embedder.17} parent=1 // loop_header
      %s13 = sphi 0, %s17
      %p14 = scmp.ge.s32.totalorder %s13, 4
      %s23 = sphi 0, %s25
      %s26 = sphi 0, %s23
      %s27 = sphi 0, %s26
      %s43 = sphi 0, %s27
      %s47 = sphi 0, %s47
      %s49 = sphi 0, %s47
      %s50 = sphi 0, %s49
      %s64 = sphi 0, %s50
      %s68 = sphi 0, %s68
      %s70 = sphi 0, %s68
      %s71 = sphi 0, %s70
      %s85 = sphi 0, %s71
      %s91 = sphi 0, %s93
      %s94 = sphi 0, %s91
      %s95 = sphi 0, %s94
      %s111 = sphi 0, %s95
      %s115 = sphi 0, %s115
      %s117 = sphi 0, %s115
      %s118 = sphi 0, %s117
      %s132 = sphi 0, %s118
      %s136 = sphi 0, %s136
      %s138 = sphi 0, %s136
      %s139 = sphi 0, %s138
      %s153 = sphi 0, %s139
      %s159 = sphi 0, %s161
      %s162 = sphi 0, %s159
      %s163 = sphi 0, %s162
      %s179 = sphi 0, %s163
    $region4: #{transformer_embedder.17} parent=1 // loop_header_branch
      %16 = sbr.rel (%p14) target = $region8
    $region5: #{transformer_embedder.17} parent=1 // loop_body
      %s18 = ssub.s32 %s13, 1
      %s19 = ssub.s32 %s13, 2
      %s20 = sadd.s32 %s13, 1
      %s21 = ssub.s32 %s13, %s20
      %p22 = scmp.eq.s32.totalorder %s21, 0
      %s24 = sadd.s32 %s23, 1
      %s25 = scalar_select %p22, %s23, %s24
      %p28 = pneg %p22
      %p29 = scmp.eq.s32.totalorder %s13, 1
      %p30 = por %p28, %p29
      %p31 = scmp.ne.s32.totalorder %s23, %s26
      %p32 = scmp.eq.s32.totalorder %s13, 0
      %p33 = por %p31, %p32
      %p34 = scmp.ne.s32.totalorder %s23, %s26
      %p35 = scmp.eq.s32.totalorder %s18, 1
      %p36 = por %p34, %p35
      %p37 = scmp.ne.s32.totalorder %s26, %s27
      %p38 = scmp.eq.s32.totalorder %s18, 0
      %p39 = por %p37, %p38
      %p40 = scmp.ne.s32.totalorder %s26, %s27
      %p41 = scmp.eq.s32.totalorder %s19, 1
      %p42 = por %p40, %p41
      %p44 = scmp.ne.s32.totalorder %s27, %s43
      %p45 = scmp.eq.s32.totalorder %s19, 0
      %p46 = por %p44, %p45
      %s48 = sadd.s32 %s47, 1
      %p51 = scmp.eq.s32.totalorder %s13, 1
      %p52 = scmp.ne.s32.totalorder %s47, %s49
      %p53 = scmp.eq.s32.totalorder %s13, 0
      %p54 = por %p52, %p53
      %p55 = scmp.ne.s32.totalorder %s47, %s49
      %p56 = scmp.eq.s32.totalorder %s18, 1
      %p57 = por %p55, %p56
      %p58 = scmp.ne.s32.totalorder %s49, %s50
      %p59 = scmp.eq.s32.totalorder %s18, 0
      %p60 = por %p58, %p59
      %p61 = scmp.ne.s32.totalorder %s49, %s50
      %p62 = scmp.eq.s32.totalorder %s19, 1
      %p63 = por %p61, %p62
      %p65 = scmp.ne.s32.totalorder %s50, %s64
      %p66 = scmp.eq.s32.totalorder %s19, 0
      %p67 = por %p65, %p66
      %s69 = sadd.s32 %s68, 1
      %p72 = scmp.eq.s32.totalorder %s13, 1
      %p73 = scmp.ne.s32.totalorder %s68, %s70
      %p74 = scmp.eq.s32.totalorder %s13, 0
      %p75 = por %p73, %p74
      %p76 = scmp.ne.s32.totalorder %s68, %s70
      %p77 = scmp.eq.s32.totalorder %s18, 1
      %p78 = por %p76, %p77
      %p79 = scmp.ne.s32.totalorder %s70, %s71
      %p80 = scmp.eq.s32.totalorder %s18, 0
      %p81 = por %p79, %p80
      %p82 = scmp.ne.s32.totalorder %s70, %s71
      %p83 = scmp.eq.s32.totalorder %s19, 1
      %p84 = por %p82, %p83
      %p86 = scmp.ne.s32.totalorder %s71, %s85
      %p87 = scmp.eq.s32.totalorder %s19, 0
      %p88 = por %p86, %p87
      %s89 = ssub.s32 %s13, %s20
      %p90 = scmp.eq.s32.totalorder %s89, 0
      %s92 = sadd.s32 %s91, 1
      %s93 = scalar_select %p90, %s91, %s92
      %p96 = pneg %p90
      %p97 = scmp.eq.s32.totalorder %s13, 1
      %p98 = por %p96, %p97
      %p99 = scmp.ne.s32.totalorder %s91, %s94
      %p100 = scmp.eq.s32.totalorder %s13, 0
      %p101 = por %p99, %p100
      %p102 = scmp.ne.s32.totalorder %s91, %s94
      %p103 = scmp.eq.s32.totalorder %s18, 1
      %p104 = por %p102, %p103
      %p105 = scmp.ne.s32.totalorder %s94, %s95
      %p106 = scmp.eq.s32.totalorder %s18, 0
      %p107 = por %p105, %p106
      %p108 = scmp.ne.s32.totalorder %s94, %s95
      %p109 = scmp.eq.s32.totalorder %s19, 1
      %p110 = por %p108, %p109
      %p112 = scmp.ne.s32.totalorder %s95, %s111
      %p113 = scmp.eq.s32.totalorder %s19, 0
      %p114 = por %p112, %p113
      %s116 = sadd.s32 %s115, 1
      %p119 = scmp.eq.s32.totalorder %s13, 1
      %p120 = scmp.ne.s32.totalorder %s115, %s117
      %p121 = scmp.eq.s32.totalorder %s13, 0
      %p122 = por %p120, %p121
      %p123 = scmp.ne.s32.totalorder %s115, %s117
      %p124 = scmp.eq.s32.totalorder %s18, 1
      %p125 = por %p123, %p124
      %p126 = scmp.ne.s32.totalorder %s117, %s118
      %p127 = scmp.eq.s32.totalorder %s18, 0
      %p128 = por %p126, %p127
      %p129 = scmp.ne.s32.totalorder %s117, %s118
      %p130 = scmp.eq.s32.totalorder %s19, 1
      %p131 = por %p129, %p130
      %p133 = scmp.ne.s32.totalorder %s118, %s132
      %p134 = scmp.eq.s32.totalorder %s19, 0
      %p135 = por %p133, %p134
      %s137 = sadd.s32 %s136, 1
      %p140 = scmp.eq.s32.totalorder %s13, 1
      %p141 = scmp.ne.s32.totalorder %s136, %s138
      %p142 = scmp.eq.s32.totalorder %s13, 0
      %p143 = por %p141, %p142
      %p144 = scmp.ne.s32.totalorder %s136, %s138
      %p145 = scmp.eq.s32.totalorder %s18, 1
      %p146 = por %p144, %p145
      %p147 = scmp.ne.s32.totalorder %s138, %s139
      %p148 = scmp.eq.s32.totalorder %s18, 0
      %p149 = por %p147, %p148
      %p150 = scmp.ne.s32.totalorder %s138, %s139
      %p151 = scmp.eq.s32.totalorder %s19, 1
      %p152 = por %p150, %p151
      %p154 = scmp.ne.s32.totalorder %s139, %s153
      %p155 = scmp.eq.s32.totalorder %s19, 0
      %p156 = por %p154, %p155
      %s157 = ssub.s32 %s13, %s20
      %p158 = scmp.eq.s32.totalorder %s157, 0
      %s160 = sadd.s32 %s159, 1
      %s161 = scalar_select %p158, %s159, %s160
      %p164 = pneg %p158
      %p165 = scmp.eq.s32.totalorder %s13, 1
      %p166 = por %p164, %p165
      %p167 = scmp.ne.s32.totalorder %s159, %s162
      %p168 = scmp.eq.s32.totalorder %s13, 0
      %p169 = por %p167, %p168
      %p170 = scmp.ne.s32.totalorder %s159, %s162
      %p171 = scmp.eq.s32.totalorder %s18, 1
      %p172 = por %p170, %p171
      %p173 = scmp.ne.s32.totalorder %s162, %s163
      %p174 = scmp.eq.s32.totalorder %s18, 0
      %p175 = por %p173, %p174
      %p176 = scmp.ne.s32.totalorder %s162, %s163
      %p177 = scmp.eq.s32.totalorder %s19, 1
      %p178 = por %p176, %p177
      %p180 = scmp.ne.s32.totalorder %s163, %s179
      %p181 = scmp.eq.s32.totalorder %s19, 0
      %p182 = por %p180, %p181
      %p183 = scmp.le.s32.totalorder 1, %s13
      %p184 = scmp.lt.s32.totalorder %s13, 3
      %p185 = pnand %p183, %p184
      %p186 = pneg %p185
      // Predicated region
      $region9: #{transformer_embedder.17} parent=5 // pred_check
        _
      $region10: #{transformer_embedder.17} parent=5 // pred_check_branch
        %188 = sbr.rel (%p185) target = $region12
      $region11: #{transformer_embedder.17} parent=5 // pred_region
        %s189 = ssub.s32 %s13, 1
        // Predicated region
        $region13: #{transformer_embedder.17} parent=11 // pred_check
          %p190 = pneg %p60
        $region14: #{transformer_embedder.17} parent=11 // pred_check_branch
          %192 = sbr.rel (%p190) target = $region16
        $region15: #{transformer_embedder.17} parent=11 // pred_region
          %194 = vsyncadd [#allocation3], 0
          %s195 = sshll.u32 %s1, 4
          %s196 = int_to_ptr.hbm [resolvable:$true] %s195
          %s197 = sshll.u32 [#allocation2], 4
          %s198 = int_to_ptr.vmem [resolvable:$true] %s197
          %203 = dma.hbm_to_vmem [thread:$0]  %s196, 2048, %s198, [#allocation3], 64, 64, 4
        $region16: #{transformer_embedder.17} parent=11 // pred_fallthru
          _
        // Predicated region
        $region17: #{transformer_embedder.17} parent=11 // pred_check
          %p204 = pneg %p81
        $region18: #{transformer_embedder.17} parent=11 // pred_check_branch
          %206 = sbr.rel (%p204) target = $region20
        $region19: #{transformer_embedder.17} parent=11 // pred_region
          _
        $region20: #{transformer_embedder.17} parent=11 // pred_fallthru
          _
        // Predicated region
        $region21: #{transformer_embedder.17} parent=11 // pred_check
          %p207 = pneg %p128
        $region22: #{transformer_embedder.17} parent=11 // pred_check_branch
          %209 = sbr.rel (%p207) target = $region24
        $region23: #{transformer_embedder.17} parent=11 // pred_region
          _
        $region24: #{transformer_embedder.17} parent=11 // pred_fallthru
          _
        // Predicated region
        $region25: #{transformer_embedder.17} parent=11 // pred_check
          %p210 = pneg %p149
        $region26: #{transformer_embedder.17} parent=11 // pred_check_branch
          %212 = sbr.rel (%p210) target = $region28
        $region27: #{transformer_embedder.17} parent=11 // pred_region
          _
        $region28: #{transformer_embedder.17} parent=11 // pred_fallthru
          _
      $region12: #{transformer_embedder.17} parent=5 // pred_fallthru
        _
      %p213 = scmp.lt.s32.totalorder %s13, 2
      // Predicated region
      $region29: #{transformer_embedder.17} parent=5 // pred_check
        %p214 = pneg %p213
      $region30: #{transformer_embedder.17} parent=5 // pred_check_branch
        %216 = sbr.rel (%p214) target = $region32
      $region31: #{transformer_embedder.17} parent=5 // pred_region
        // Predicated region
        $region33: #{transformer_embedder.17} parent=31 // pred_check
          %p217 = pneg %p33
        $region34: #{transformer_embedder.17} parent=31 // pred_check_branch
          %219 = sbr.rel (%p217) target = $region36
        $region35: #{transformer_embedder.17} parent=31 // pred_region
          %p220 = scmp.lt.s32.totalorder %s13, 1
          %s221 = scalar_select %p220, %s13, 1
          %s222 = smul.addr %s221, 2
          %s223 = smul.addr %s222, 4
          %s224 = scalar_lea.vmem %s0, %s223
        $region36: #{transformer_embedder.17} parent=31 // pred_fallthru
          _
        // Predicated region
        $region37: #{transformer_embedder.17} parent=31 // pred_check
          %p225 = pneg %p101
        $region38: #{transformer_embedder.17} parent=31 // pred_check_branch
          %227 = sbr.rel (%p225) target = $region40
        $region39: #{transformer_embedder.17} parent=31 // pred_region
          %p228 = scmp.lt.s32.totalorder %s13, 1
          %s229 = scalar_select %p228, %s13, 1
          %s230 = smul.addr %s229, 4
          %s231 = scalar_lea.vmem %s3, %s230
        $region40: #{transformer_embedder.17} parent=31 // pred_fallthru
          _
      $region32: #{transformer_embedder.17} parent=5 // pred_fallthru
        _
      %p232 = scmp.le.s32.totalorder 1, %s13
      %p233 = scmp.lt.s32.totalorder %s13, 3
      %p234 = pnand %p232, %p233
      %p235 = pneg %p234
      // Predicated region
      $region41: #{transformer_embedder.17} parent=5 // pred_check
        _
      $region42: #{transformer_embedder.17} parent=5 // pred_check_branch
        %237 = sbr.rel (%p234) target = $region44
      $region43: #{transformer_embedder.17} parent=5 // pred_region
        %s238 = ssub.s32 %s13, 1
        // Predicated region
        $region45: #{transformer_embedder.17} parent=43 // pred_check
          %p239 = pneg %p60
        $region46: #{transformer_embedder.17} parent=43 // pred_check_branch
          %241 = sbr.rel (%p239) target = $region48
        $region47: #{transformer_embedder.17} parent=43 // pred_region
          %243 = dma.done [#allocation3], 2048
        $region48: #{transformer_embedder.17} parent=43 // pred_fallthru
          _
        %p244 = scmp.lt.s32.totalorder %s18, 1
        %s245 = scalar_select %p244, %s18, 1
        %s246 = smul.addr %s245, 2
        %s247 = smul.addr %s246, 4
        %s248 = scalar_lea.vmem %s0, %s247
        %p249 = pneg %p39
        %p250 = pneg %p36
        %p251 = pneg %p60
        %p252 = pneg %p57
        %p253 = pneg %p81
        %p254 = pneg %p78
        %p255 = scmp.lt.s32.totalorder %s18, 1
        %s256 = scalar_select %p255, %s18, 1
        %s257 = smul.addr %s256, 4
        %s258 = scalar_lea.vmem %s3, %s257
        %p259 = pneg %p107
        %p260 = pneg %p104
        %p261 = pneg %p128
        %p262 = pneg %p125
        %p263 = pneg %p149
        %p264 = pneg %p146
        %p265 = pneg %p175
        %p266 = pneg %p172
        %p267 = scmp.lt.s32.totalorder %s18, 1
        %s268 = scalar_select %p267, %s18, 1
        %s269 = smul.addr %s268, 4
        %s270 = scalar_lea.vmem %s6, %s269
        %p271 = scmp.lt.s32.totalorder %s18, 1
        %s272 = scalar_select %p271, %s18, 1
        %s273 = smul.addr %s272, 2
        %s274 = smul.addr %s273, 4
        %s275 = scalar_lea.vmem %s0, %s274
        %p276 = scmp.lt.s32.totalorder %s18, 1
        %s277 = scalar_select %p276, %s18, 1
        %s278 = smul.addr %s277, 4
        %s279 = scalar_lea.vmem %s3, %s278
        %p280 = scmp.lt.s32.totalorder %s18, 1
        %s281 = scalar_select %p280, %s18, 1
        %s282 = smul.addr %s281, 4
        %s283 = scalar_lea.vmem %s6, %s282
        %v284 = vld [vmem:[%s275] sm:$0xff]
        %v285 = vld [vmem:[#allocation2] sm:$0xf]
        %v286 = vld [vmem:[#allocation2 + $0x4] sm:$0xf]
        %v287 = vld [vmem:[#allocation2 + $0x8] sm:$0xf]
        %v288 = vld [vmem:[#allocation2 + $0xc] sm:$0xf]
        %v289 = vld [vmem:[#allocation2 + $0x10] sm:$0xf]
        %v290 = vld [vmem:[#allocation2 + $0x14] sm:$0xf]
        %v291 = vld [vmem:[#allocation2 + $0x18] sm:$0xf]
        %v292 = vld [vmem:[#allocation2 + $0x1c] sm:$0xf]
        %v293 = vld [vmem:[#allocation2 + $0x20] sm:$0xf]
        %v294 = vld [vmem:[#allocation2 + $0x24] sm:$0xf]
        %v295 = vld [vmem:[#allocation2 + $0x28] sm:$0xf]
        %v296 = vld [vmem:[#allocation2 + $0x2c] sm:$0xf]
        %v297 = vld [vmem:[#allocation2 + $0x30] sm:$0xf]
        %v298 = vld [vmem:[#allocation2 + $0x34] sm:$0xf]
        %v299 = vld [vmem:[#allocation2 + $0x38] sm:$0xf]
        %v300 = vld [vmem:[#allocation2 + $0x3c] sm:$0xf]
        %v301 = vld [vmem:[#allocation2 + $0x40] sm:$0xf]
        %v302 = vld [vmem:[#allocation2 + $0x44] sm:$0xf]
        %v303 = vld [vmem:[#allocation2 + $0x48] sm:$0xf]
        %v304 = vld [vmem:[#allocation2 + $0x4c] sm:$0xf]
        %v305 = vld [vmem:[#allocation2 + $0x50] sm:$0xf]
        %v306 = vld [vmem:[#allocation2 + $0x54] sm:$0xf]
        %v307 = vld [vmem:[#allocation2 + $0x58] sm:$0xf]
        %v308 = vld [vmem:[#allocation2 + $0x5c] sm:$0xf]
        %v309 = vld [vmem:[#allocation2 + $0x60] sm:$0xf]
        %v310 = vld [vmem:[#allocation2 + $0x64] sm:$0xf]
        %v311 = vld [vmem:[#allocation2 + $0x68] sm:$0xf]
        %v312 = vld [vmem:[#allocation2 + $0x6c] sm:$0xf]
        %v313 = vld [vmem:[#allocation2 + $0x70] sm:$0xf]
        %v314 = vld [vmem:[#allocation2 + $0x74] sm:$0xf]
        %v315 = vld [vmem:[#allocation2 + $0x78] sm:$0xf]
        %v316 = vld [vmem:[#allocation2 + $0x7c] sm:$0xf]
        %v317 = vld [vmem:[%s2] sm:$0x1]
        %v318 = vunpack.c.l.bf16 %v317
        %v319 = vperm.slane %v318, 0
        %v321 = vunpack.c.l.b16 %v284
        %v322 = vunpack.c.h.b16 %v284
        %v323 = vpack.c.b16 %v321, %v321
        %v324 = vpack.c.b16 %v322, %v322
        %v359 = vunpack.c.l.b16 %v285
        %v360 = vunpack.c.l.b16 %v286
        %v361 = vunpack.c.l.b16 %v287
        %v362 = vunpack.c.l.b16 %v288
        %v363 = vunpack.c.l.b16 %v289
        %v364 = vunpack.c.l.b16 %v290
        %v365 = vunpack.c.l.b16 %v291
        %v366 = vunpack.c.l.b16 %v292
        %v367 = vunpack.c.l.b16 %v293
        %v368 = vunpack.c.l.b16 %v294
        %v369 = vunpack.c.l.b16 %v295
        %v370 = vunpack.c.l.b16 %v296
        %v371 = vunpack.c.l.b16 %v297
        %v372 = vunpack.c.l.b16 %v298
        %v373 = vunpack.c.l.b16 %v299
        %v374 = vunpack.c.l.b16 %v300
        %v375 = vunpack.c.l.b16 %v301
        %v376 = vunpack.c.l.b16 %v302
        %v377 = vunpack.c.l.b16 %v303
        %v378 = vunpack.c.l.b16 %v304
        %v379 = vunpack.c.l.b16 %v305
        %v380 = vunpack.c.l.b16 %v306
        %v381 = vunpack.c.l.b16 %v307
        %v382 = vunpack.c.l.b16 %v308
        %v383 = vunpack.c.l.b16 %v309
        %v384 = vunpack.c.l.b16 %v310
        %v385 = vunpack.c.l.b16 %v311
        %v386 = vunpack.c.l.b16 %v312
        %v387 = vunpack.c.l.b16 %v313
        %v388 = vunpack.c.l.b16 %v314
        %v389 = vunpack.c.l.b16 %v315
        %v390 = vunpack.c.l.b16 %v316
        %v391 = vpack.c.b16 %v360, %v359
        %v392 = vpack.c.b16 %v362, %v361
        %v393 = vpack.c.b16 %v364, %v363
        %v394 = vpack.c.b16 %v366, %v365
        %v395 = vpack.c.b16 %v368, %v367
        %v396 = vpack.c.b16 %v370, %v369
        %v397 = vpack.c.b16 %v372, %v371
        %v398 = vpack.c.b16 %v374, %v373
        %v399 = vpack.c.b16 %v376, %v375
        %v400 = vpack.c.b16 %v378, %v377
        %v401 = vpack.c.b16 %v380, %v379
        %v402 = vpack.c.b16 %v382, %v381
        %v403 = vpack.c.b16 %v384, %v383
        %v404 = vpack.c.b16 %v386, %v385
        %v405 = vpack.c.b16 %v388, %v387
        %v406 = vpack.c.b16 %v390, %v389
        %423 = vmatpush.bf16.msra.mxu0 %v398
        %424 = vmatpush.bf16.msra.mxu0 %v397
        %425 = vmatpush.bf16.msra.mxu0 %v396
        %426 = vmatpush.bf16.msra.mxu0 %v395
        %427 = vmatpush.bf16.msra.mxu0 %v394
        %428 = vmatpush.bf16.msra.mxu0 %v393
        %429 = vmatpush.bf16.msra.mxu0 %v392
        %430 = vmatpush.bf16.msra.mxu0 %v391
        %431 = vmatmul.bf16.gmra.mxu0 %v323
        %v432 = vpop.f32.mrf.mxu0
        %v433 = vadd.f32 %v319, %v432
        %v434 = vpop.f32.mrf.mxu0
        %435 = vdwg.mxu0
        %436 = vmatpush.bf16.msra.mxu0 %v406
        %437 = vmatpush.bf16.msra.mxu0 %v405
        %438 = vmatpush.bf16.msra.mxu0 %v404
        %439 = vmatpush.bf16.msra.mxu0 %v403
        %440 = vmatpush.bf16.msra.mxu0 %v402
        %441 = vmatpush.bf16.msra.mxu0 %v401
        %442 = vmatpush.bf16.msra.mxu0 %v400
        %443 = vmatpush.bf16.msra.mxu0 %v399
        %444 = vmatmul.bf16.gmra.mxu0 %v324
        %v445 = vpop.f32.mrf.mxu0
        %v446 = vadd.f32 %v433, %v445
        %v447 = vpop.f32.mrf.mxu0
        %448 = vdwg.mxu0
        %v449 = vld [vmem:[%s279] sm:$0xf]
        %v450 = vunpack.c.l.bf16 %v449
        %v451 = vadd.f32 %v446, %v450
        %452 = vadd.xlane.f32.xlu0 %v451
        %v453 = vpop.xlane.xlu0 %452
        %v454 = vrcp.pop 128.0
        %v455 = vmul.f32 128.0, %v454
        %v456 = vsub.f32 1.0, %v455
        %v457 = vmul.f32 %v454, %v456
        %v458 = vadd.f32 %v454, %v457
        %vm459 = vweird.f32 %v454
        %v460 = vsel %vm459, %v454, %v458
        %v461 = vmul.f32 %v453, %v460
        %v462 = vsub.f32 %v451, %v461
        %v463 = vmul.f32 %v462, %v462
        %464 = vadd.xlane.f32.xlu0 %v463
        %v465 = vpop.xlane.xlu0 %464
        %v466 = vmul.f32 %v465, %v460
        %v467 = vadd.f32 %v466, 1e-05
        %v468 = vrsqrt.pop %v467
        %v469 = vmul.f32 %v468, %v467
        %v470 = vmul.f32 %v469, %v468
        %v471 = vmul.f32 0.5, %v470
        %v472 = vsub.f32 1.5, %v471
        %v473 = vmul.f32 %v468, %v472
        %vm474 = vweird.f32 %v467
        %vm475 = vweird.f32 %v468
        %vm476 = vmor %vm474, %vm475
        %v477 = vsel %vm476, %v468, %v473
        %v478 = vmul.f32 %v462, %v477
        %v479 = vld [vmem:[%s4] sm:$0x1]
        %v480 = vunpack.c.l.bf16 %v479
        %v481 = vperm.slane %v480, 0
        %v482 = vmul.f32 %v478, %v481
        %v483 = vld [vmem:[%s5] sm:$0x1]
        %v484 = vunpack.c.l.bf16 %v483
        %v485 = vperm.slane %v484, 0
        %v486 = vadd.f32 %v482, %v485
        %v487 = vpack.c.bf16 %v486, %v486
        %488 = vst [vmem:[%s283] sm:$0xf] %v487
        %p489 = scmp.lt.s32.totalorder %s18, 1
        %s490 = scalar_select %p489, %s18, 1
        %s491 = smul.addr %s490, 4
        %s492 = scalar_lea.vmem %s6, %s491
        // Predicated region
        $region49: #{transformer_embedder.17} parent=43 // pred_check
          %p493 = pneg %p172
        $region50: #{transformer_embedder.17} parent=43 // pred_check_branch
          %495 = sbr.rel (%p493) target = $region52
        $region51: #{transformer_embedder.17} parent=43 // pred_region
          _
        $region52: #{transformer_embedder.17} parent=43 // pred_fallthru
          _
      $region44: #{transformer_embedder.17} parent=5 // pred_fallthru
        _
      %p496 = scmp.le.s32.totalorder 2, %s13
      // Predicated region
      $region53: #{transformer_embedder.17} parent=5 // pred_check
        %p497 = pneg %p496
      $region54: #{transformer_embedder.17} parent=5 // pred_check_branch
        %499 = sbr.rel (%p497) target = $region56
      $region55: #{transformer_embedder.17} parent=5 // pred_region
        %s500 = ssub.s32 %s13, 2
        // Predicated region
        $region57: #{transformer_embedder.17} parent=55 // pred_check
          %p501 = pneg %p178
        $region58: #{transformer_embedder.17} parent=55 // pred_check_branch
          %503 = sbr.rel (%p501) target = $region60
        $region59: #{transformer_embedder.17} parent=55 // pred_region
          %p504 = scmp.lt.s32.totalorder %s19, 1
          %s505 = scalar_select %p504, %s19, 1
          %s506 = smul.addr %s505, 4
          %s507 = scalar_lea.vmem %s6, %s506
        $region60: #{transformer_embedder.17} parent=55 // pred_fallthru
          _
      $region56: #{transformer_embedder.17} parent=5 // pred_fallthru
        _
    $region6: #{transformer_embedder.17} parent=1 // loop_footer
      %s17 = sadd.s32 1, %s13
    $region7: #{transformer_embedder.17} parent=1 // loop_footer_branch
      %12 = sbr.rel target = $region3
    $region8: #{transformer_embedder.17} parent=1 // loop_exit
      _
    %508 = vsyncpa [#allocation3], 1
    %s509 = scalar_lea.sflag [#allocation3], 1
    %510 = vsyncpa %s509, 1

// kernel: transformer_embedder.23
$region0: #{transformer_embedder.23}
  #allocation0 [shape = 'u32[]', space=smem, size = 0x4, offset = 0x4, fixed_abs, tag = 'smem constant byte address 0x4 - core index']
  #allocation1 [shape = 'u32[72,128]{1,0:T(1,128)}', space=vmem, size = 0x9000, scoped, tag = 'internal scratch']
  #allocation2 [shape = 'f32[2,128]{1,0:T(2,128)}', space=vmem, size = 0x400, scoped, tag = 'scratch operand']
  %s0 = inlined_call_operand.vmem [shape: bf16[2,8,128], index: 0, kind: input, shape index: {}]
  %s1 = inlined_call_operand.hbm [shape: bf16[128,128], index: 1, kind: input, shape index: {}]
  %s2 = inlined_call_operand.vmem [shape: bf16[1,128], index: 2, kind: input, shape index: {}]
  %s3 = inlined_call_operand.hbm [shape: f32[2,128], index: 3, kind: output, shape index: {}]
  %s4 = sld [smem:[#allocation0]]
  $region34: #{transformer_embedder.23} parent=0
    _
  %s6 = ssub.s32 1, %s4
  %s7 = scalar_select 0, %s6, %s4
  $region1: #{transformer_embedder.23} parent=0
    #allocation3 [shape = 'u8[32768]{0}', space=vmem, size = 0x8000, scoped, tag = 'input window, operand 1, single buffered']
    #allocation4 [shape = 's32[1]{0}', space=sflag, size = 0x4, scoped, tag = 'scoped memory for transformer_embedder.23']
    #allocation5 [shape = 's32[1]{0}', space=sflag, size = 0x4, scoped, tag = 'scoped memory for transformer_embedder.23']
    #allocation6 [shape = 'u8[1024]{0}', space=vmem, size = 0x400, scoped, tag = 'output window, operand 0, single buffered']
    %8 = vsyncpa [#allocation4], 0
    %9 = vsyncpa [#allocation5], 0
    // Predicated region
    $region2: #{transformer_embedder.23} parent=1 // pred_check
      _
    $region3: #{transformer_embedder.23} parent=1 // pred_check_branch
      %11 = sbr.rel (0) target = $region5
    $region4: #{transformer_embedder.23} parent=1 // pred_region
      _
    $region5: #{transformer_embedder.23} parent=1 // pred_fallthru
      _
    // Predicated region
    $region6: #{transformer_embedder.23} parent=1 // pred_check
      _
    $region7: #{transformer_embedder.23} parent=1 // pred_check_branch
      %13 = sbr.rel (0) target = $region9
    $region8: #{transformer_embedder.23} parent=1 // pred_region
      %15 = vsyncadd [#allocation4], 0
      %s16 = sshll.u32 %s1, 4
      %s17 = int_to_ptr.hbm [resolvable:$true] %s16
      %s18 = sshll.u32 [#allocation3], 4
      %s19 = int_to_ptr.vmem [resolvable:$true] %s18
      %24 = dma.hbm_to_vmem [thread:$0]  %s17, 1024, %s19, [#allocation4], 64, 64, 4
    $region9: #{transformer_embedder.23} parent=1 // pred_fallthru
      _
    // Predicated region
    $region10: #{transformer_embedder.23} parent=1 // pred_check
      _
    $region11: #{transformer_embedder.23} parent=1 // pred_check_branch
      %26 = sbr.rel (0) target = $region13
    $region12: #{transformer_embedder.23} parent=1 // pred_region
      _
    $region13: #{transformer_embedder.23} parent=1 // pred_fallthru
      _
    // Predicated region
    $region14: #{transformer_embedder.23} parent=1 // pred_check
      _
    $region15: #{transformer_embedder.23} parent=1 // pred_check_branch
      %28 = sbr.rel (0) target = $region17
    $region16: #{transformer_embedder.23} parent=1 // pred_region
      %30 = dma.done [#allocation4], 1024
    $region17: #{transformer_embedder.23} parent=1 // pred_fallthru
      _
    %p31 = scmp.eq.s32.totalorder 0, 0
    // Predicated region
    $region18: #{transformer_embedder.23} parent=1 // pred_check
      %p32 = pneg %p31
    $region19: #{transformer_embedder.23} parent=1 // pred_check_branch
      %34 = sbr.rel (%p32) target = $region21
    $region20: #{transformer_embedder.23} parent=1 // pred_region
      %35 = vst [vmem:[#allocation2] sm:$0x3] 0.0
    $region21: #{transformer_embedder.23} parent=1 // pred_fallthru
      _
    %v36 = vld [vmem:[%s0] sm:$0xf]
    %v37 = vld [vmem:[%s0 + $0x4] sm:$0xf]
    %v38 = vunpack.c.l.bf16 %v36
    %v39 = vunpack.c.l.bf16 %v37
    %v40 = vld [vmem:[#allocation2] sm:$0x3]
    %v41 = vrot.slane %v38, 4
    %v42 = vadd.f32 %v38, %v41
    %v43 = vrot.slane %v42, 2
    %v44 = vadd.f32 %v42, %v43
    %v45 = vrot.slane %v44, 1
    %v46 = vadd.f32 %v44, %v45
    %v47 = vrot.slane %v39, 4
    %v48 = vadd.f32 %v39, %v47
    %v49 = vrot.slane %v48, 2
    %v50 = vadd.f32 %v48, %v49
    %v51 = vrot.slane %v50, 1
    %v52 = vadd.f32 %v50, %v51
    %vm55 = vcmask 1041409
    %v56 = vsel %vm55, %v52, %v46
    %v58 = vadd.f32 %v40, %v56
    %59 = vst [vmem:[#allocation2] sm:$0x3] %v58
    // Predicated region
    $region22: #{transformer_embedder.23} parent=1 // pred_check
      %p60 = pneg %p31
    $region23: #{transformer_embedder.23} parent=1 // pred_check_branch
      %62 = sbr.rel (%p60) target = $region25
    $region24: #{transformer_embedder.23} parent=1 // pred_region
      %v63 = vld [vmem:[#allocation2] sm:$0x3]
      %v64 = vmul.f32 %v63, 0.125
      %v65 = vpack.c.bf16 %v64, %v64
      %v66 = vld [vmem:[#allocation3] sm:$0xf]
      %v67 = vld [vmem:[#allocation3 + $0x4] sm:$0xf]
      %v68 = vld [vmem:[#allocation3 + $0x8] sm:$0xf]
      %v69 = vld [vmem:[#allocation3 + $0xc] sm:$0xf]
      %v70 = vld [vmem:[#allocation3 + $0x10] sm:$0xf]
      %v71 = vld [vmem:[#allocation3 + $0x14] sm:$0xf]
      %v72 = vld [vmem:[#allocation3 + $0x18] sm:$0xf]
      %v73 = vld [vmem:[#allocation3 + $0x1c] sm:$0xf]
      %v74 = vld [vmem:[#allocation3 + $0x20] sm:$0xf]
      %v75 = vld [vmem:[#allocation3 + $0x24] sm:$0xf]
      %v76 = vld [vmem:[#allocation3 + $0x28] sm:$0xf]
      %v77 = vld [vmem:[#allocation3 + $0x2c] sm:$0xf]
      %v78 = vld [vmem:[#allocation3 + $0x30] sm:$0xf]
      %v79 = vld [vmem:[#allocation3 + $0x34] sm:$0xf]
      %v80 = vld [vmem:[#allocation3 + $0x38] sm:$0xf]
      %v81 = vld [vmem:[#allocation3 + $0x3c] sm:$0xf]
      %v82 = vld [vmem:[%s2] sm:$0x1]
      %v83 = vunpack.c.l.bf16 %v82
      %v84 = vperm.slane %v83, 0
      %v101 = vunpack.c.l.b16 %v66
      %v102 = vunpack.c.l.b16 %v67
      %v103 = vunpack.c.l.b16 %v68
      %v104 = vunpack.c.l.b16 %v69
      %v105 = vunpack.c.l.b16 %v70
      %v106 = vunpack.c.l.b16 %v71
      %v107 = vunpack.c.l.b16 %v72
      %v108 = vunpack.c.l.b16 %v73
      %v109 = vunpack.c.l.b16 %v74
      %v110 = vunpack.c.l.b16 %v75
      %v111 = vunpack.c.l.b16 %v76
      %v112 = vunpack.c.l.b16 %v77
      %v113 = vunpack.c.l.b16 %v78
      %v114 = vunpack.c.l.b16 %v79
      %v115 = vunpack.c.l.b16 %v80
      %v116 = vunpack.c.l.b16 %v81
      %v117 = vpack.c.b16 %v102, %v101
      %v118 = vpack.c.b16 %v104, %v103
      %v119 = vpack.c.b16 %v106, %v105
      %v120 = vpack.c.b16 %v108, %v107
      %v121 = vpack.c.b16 %v110, %v109
      %v122 = vpack.c.b16 %v112, %v111
      %v123 = vpack.c.b16 %v114, %v113
      %v124 = vpack.c.b16 %v116, %v115
      %133 = vmatpush.bf16.msra.mxu0 %v124
      %134 = vmatpush.bf16.msra.mxu0 %v123
      %135 = vmatpush.bf16.msra.mxu0 %v122
      %136 = vmatpush.bf16.msra.mxu0 %v121
      %137 = vmatpush.bf16.msra.mxu0 %v120
      %138 = vmatpush.bf16.msra.mxu0 %v119
      %139 = vmatpush.bf16.msra.mxu0 %v118
      %140 = vmatpush.bf16.msra.mxu0 %v117
      %141 = vmatmul.bf16.gmra.mxu0 %v65
      %v142 = vpop.f32.mrf.mxu0
      %v143 = vadd.f32 %v84, %v142
      %v144 = vpop.f32.mrf.mxu0
      %145 = vdwg.mxu0
      %146 = vst [vmem:[#allocation6] sm:$0x3] %v143
    $region25: #{transformer_embedder.23} parent=1 // pred_fallthru
      _
    // Predicated region
    $region26: #{transformer_embedder.23} parent=1 // pred_check
      _
    $region27: #{transformer_embedder.23} parent=1 // pred_check_branch
      %148 = sbr.rel (0) target = $region29
    $region28: #{transformer_embedder.23} parent=1 // pred_region
      %150 = vsyncadd [#allocation5], 0
      %s152 = sshll.u32 [#allocation6], 4
      %s153 = int_to_ptr.vmem [resolvable:$true] %s152
      %s154 = sshll.u32 %s3, 4
      %s155 = int_to_ptr.hbm [resolvable:$true] %s154
      %157 = dma.vmem_to_hbm [thread:$0]  %s153, 32, %s155, [#allocation5]
    $region29: #{transformer_embedder.23} parent=1 // pred_fallthru
      _
    // Predicated region
    $region30: #{transformer_embedder.23} parent=1 // pred_check
      _
    $region31: #{transformer_embedder.23} parent=1 // pred_check_branch
      %159 = sbr.rel (0) target = $region33
    $region32: #{transformer_embedder.23} parent=1 // pred_region
      %161 = dma.done [#allocation5], 32
    $region33: #{transformer_embedder.23} parent=1 // pred_fallthru
      _
    %162 = vsyncpa [#allocation4], 1
    %163 = vsyncpa [#allocation5], 1

</llo_original>
